<compile_context>
chip_gen: v7x
topology: tpu7x:2x2x1
jax: 0.10.0
libtpu: 0.0.40
codegen_flags: <defaults>
</compile_context>

<pallas_src>
import functools

import jax
import jax.numpy as jnp
import numpy as np
from jax.experimental import pallas as pl
from jax.experimental.pallas import tpu as pltpu

_NEG_BIG = -1.0e30  # finite "-inf" floor so online-max rescaling never sees exp(nan)


def _reverse_kl_kernel(student_ref, teacher_ref, labels_ref, num_ref, den_ref,
                       acc_num, acc_den, m_s, m_t, l_s, l_t, a_sum, b_sum, *,
                       ignore_index, n_rows, vocab, tm, tv,
                       blocks_per_core, total_blocks, mask_lanes):
    p = pl.program_id(0)
    j = pl.program_id(1)
    vb = pl.program_id(2)
    last_j = pl.num_programs(1) - 1
    last_vb = pl.num_programs(2) - 1

    @pl.when((j == 0) & (vb == 0))
    def _():
        acc_num[...] = jnp.zeros_like(acc_num)
        acc_den[...] = jnp.zeros_like(acc_den)

    # Logical token-block handled by this grid step; out-of-range logical blocks
    # are clamped duplicates of the last real block and contribute nothing.
    logical_blk = p * blocks_per_core + j
    blk = jnp.minimum(logical_blk, total_blocks - 1)

    row_ids = blk * tm + jax.lax.broadcasted_iota(jnp.int32, (tm, 1), 0)
    valid_rows = ((labels_ref[...] != ignore_index)
                  & (row_ids < n_rows)
                  & (logical_blk < total_blocks))              # (tm, 1) bool
    has_valid = jnp.any(valid_rows)

    # Reset the per-token-block online-LSE state at the first vocab chunk.
    @pl.when(vb == 0)
    def _():
        m_s[...] = jnp.full_like(m_s, _NEG_BIG)
        m_t[...] = jnp.full_like(m_t, _NEG_BIG)
        l_s[...] = jnp.zeros_like(l_s)
        l_t[...] = jnp.zeros_like(l_t)
        a_sum[...] = jnp.zeros_like(a_sum)
        b_sum[...] = jnp.zeros_like(b_sum)

    @pl.when(has_valid)
    def _():
        s = student_ref[...].astype(jnp.float32)               # (tm, tv)
        t = teacher_ref[...].astype(jnp.float32)
        if mask_lanes:  # ragged vocab tail: padded lanes hold undefined data
            lane_ok = (vb * tv + jax.lax.broadcasted_iota(jnp.int32, (1, tv), 1)) < vocab
            s = jnp.where(lane_ok, s, _NEG_BIG)
            t = jnp.where(lane_ok, t, _NEG_BIG)

        # Fused algebra:  t_logprob - s_logprob = diff + c
        #   diff = t - s (full tile), c = (s_max - t_max) + (log s_sum - log t_sum)
        # so s_prob / s_logprob / t_logprob are never materialized.
        diff = t - s
        ok = jnp.abs(diff) < jnp.inf   # == isfinite(diff); same inf-masking as the
                                       # torch reference (NaN logits also masked)

        m_s_new = jnp.maximum(m_s[...], jnp.max(s, axis=-1, keepdims=True))
        m_t_new = jnp.maximum(m_t[...], jnp.max(t, axis=-1, keepdims=True))
        alpha_s = jnp.exp(m_s[...] - m_s_new)                  # (tm, 1) rescales
        alpha_t = jnp.exp(m_t[...] - m_t_new)

        s_exp = jnp.exp(s - m_s_new)                           # (tm, tv)
        l_s[...] = alpha_s * l_s[...] + jnp.sum(s_exp, axis=-1, keepdims=True)
        l_t[...] = alpha_t * l_t[...] + jnp.sum(jnp.exp(t - m_t_new),
                                                axis=-1, keepdims=True)
        a_sum[...] = alpha_s * a_sum[...] + jnp.sum(
            jnp.where(ok, s_exp * diff, 0.0), axis=-1, keepdims=True)
        b_sum[...] = alpha_s * b_sum[...] + jnp.sum(
            jnp.where(ok, s_exp, 0.0), axis=-1, keepdims=True)
        m_s[...] = m_s_new
        m_t[...] = m_t_new

    @pl.when(has_valid & (vb == last_vb))
    def _():
        c = (m_s[...] - m_t[...]) + (jnp.log(l_s[...]) - jnp.log(l_t[...]))
        x = (a_sum[...] + c * b_sum[...]) / l_s[...]           # (tm, 1)
        x = jnp.where(valid_rows, x, 0.0)
        # TODO(synk): Kahan / per-block partial accumulation if fp32 precision
        # ever matters at extreme token counts.
        acc_num[...] += -jnp.sum(x)
        acc_den[...] += jnp.sum(valid_rows.astype(jnp.float32))

    @pl.when((j == last_j) & (vb == last_vb))
    def _():
        num_ref[0] = acc_num[...]
        den_ref[0] = acc_den[...]


def _vmem_plan():
    """Generation-aware, self-consistent VMEM budget.

    Returns (tile_model_budget_bytes, vmem_limit_bytes), both derived from the
    same physical-capacity query so the tile sizing and the compiler limit agree
    (128 MiB on v5e/v6e -> ~96 MiB limit; 64 MiB on v7x -> ~48 MiB limit).
    """
    phys = 64 * 1024 * 1024                      # conservative fallback
    try:
        phys = int(pltpu.get_tpu_info().vmem_capacity_bytes)
    except Exception:
        pass
    limit = int(phys * 3 // 4)                   # headroom for compiler scratch
    budget = int(limit * 17 // 20)               # keep the tile model inside it
    return budget, limit


def _default_num_parallel():
    """1 on single-TensorCore chips (v5e/v6e); TC count (2) on v7x when known."""
    try:
        dev = jax.devices()[0]
        for attr in ("num_cores", "core_count", "num_cores_per_chip"):
            n = getattr(dev, attr, None)
            if isinstance(n, int) and n > 0:
                return n
        kind = (getattr(dev, "device_kind", "") or "").lower()
        if "7" in kind:
            return 2
    except Exception:
        pass
    return 1


def _choose_tiles(vocab, itemsize, n_rows, budget_bytes, *, tm_target=256, tm_cap=2048):
    """Token tile tm and vocab chunk tv from an explicit VMEM model.

    Per (row, vocab-elem): 2 logits inputs x double-buffered in the input dtype
    plus ~6 live fp32 full-tile temporaries in the fused body.
    """
    per_elem = 2 * 2 * itemsize + 6 * 4

    def tm_for(tv_):
        tm_ = int(budget_bytes // (tv_ * per_elem + 64))
        return max(8, min(tm_cap, (tm_ // 8) * 8))

    tv = vocab
    if vocab > 2048 and tm_for(vocab) < tm_target:
        # Large vocab: switch to the vocab-tiled online-LSE path so tm stays big.
        tv = int(budget_bytes // (tm_target * per_elem))
        tv = (tv // 128) * 128
        tv = max(512, min(tv, (vocab // 128) * 128))
    tm = min(tm_for(tv), max(8, ((n_rows + 7) // 8) * 8))
    return tm, tv


def reverse_kl_loss(student_logits, teacher_logits, labels, *,
                    normalize=True, ignore_index=-100, tm=None, tv=None,
                    num_parallel=None):
    """JAX/Pallas equivalent of ReverseKLLoss.forward.

    student_logits / teacher_logits: arrays flattening to (N, vocab), fp32/bf16.
    labels: int array flattening to (N,).  Returns a scalar float32 loss.
    """
    vocab = student_logits.shape[-1]
    student = student_logits.reshape(-1, vocab)          # views, no HBM copies
    teacher = teacher_logits.reshape(-1, vocab)
    n_rows = student.shape[0]
    labels2d = labels.reshape(-1, 1).astype(jnp.int32)
    assert labels2d.shape[0] == n_rows, "labels must flatten to one entry per logit row"

    budget, vmem_limit = _vmem_plan()
    auto_tm, auto_tv = _choose_tiles(vocab, student.dtype.itemsize, n_rows, budget)
    tm = int(tm) if tm is not None else auto_tm
    tv = min(int(tv), vocab) if tv is not None else auto_tv
    assert tm % 8 == 0 and tm > 0
    assert tv == vocab or tv % 128 == 0, "vocab chunk must be lane-aligned (x128)"

    num_vb = -(-vocab // tv)
    mask_lanes = (num_vb * tv) > vocab

    total_blocks = -(-n_rows // tm)
    if num_parallel is None:
        num_parallel = _default_num_parallel()
    p_dim = max(1, min(int(num_parallel), total_blocks))
    blocks_per_core = -(-total_blocks // p_dim)

    def logits_map(p, j, v):
        return (jnp.minimum(p * blocks_per_core + j, total_blocks - 1), v)

    def labels_map(p, j, v):
        return (jnp.minimum(p * blocks_per_core + j, total_blocks - 1), 0)

    kernel = functools.partial(
        _reverse_kl_kernel,
        ignore_index=int(ignore_index),
        n_rows=int(n_rows),
        vocab=int(vocab),
        tm=tm,
        tv=tv,
        blocks_per_core=int(blocks_per_core),
        total_blocks=int(total_blocks),
        mask_lanes=bool(mask_lanes),
    )

    num, den = pl.pallas_call(
        kernel,
        out_shape=(jax.ShapeDtypeStruct((p_dim, 1, 1), jnp.float32),
                   jax.ShapeDtypeStruct((p_dim, 1, 1), jnp.float32)),
        grid_spec=pltpu.PrefetchScalarGridSpec(
            num_scalar_prefetch=0,
            grid=(p_dim, blocks_per_core, num_vb),
            in_specs=[
                pl.BlockSpec((tm, tv), logits_map),
                pl.BlockSpec((tm, tv), logits_map),
                pl.BlockSpec((tm, 1), labels_map),
            ],
            out_specs=[
                pl.BlockSpec((1, 1, 1), lambda p, j, v: (p, 0, 0)),
                pl.BlockSpec((1, 1, 1), lambda p, j, v: (p, 0, 0)),
            ],
            scratch_shapes=[pltpu.VMEM((1, 1), jnp.float32),   # acc_num
                            pltpu.VMEM((1, 1), jnp.float32)]   # acc_den
                           + [pltpu.VMEM((tm, 1), jnp.float32)] * 6,  # m_s,m_t,l_s,l_t,a,b
        ),
        compiler_params=pltpu.CompilerParams(
            dimension_semantics=("parallel", "arbitrary", "arbitrary"),
            vmem_limit_bytes=int(vmem_limit)),
    )(student, teacher, labels2d)

    total_num = jnp.sum(num)
    total_den = jnp.sum(den)
    if not normalize:
        return total_num.astype(jnp.float32)
    return jnp.where(total_den > 0,
                     total_num / jnp.maximum(total_den, 1.0),
                     0.0).astype(jnp.float32)


def _reference_reverse_kl(student, teacher, labels, *, normalize=True,
                          ignore_index=-100):
    """Plain-JAX reference reproducing the PyTorch semantics."""
    s = student.reshape(-1, student.shape[-1]).astype(jnp.float32)
    t = teacher.reshape(-1, teacher.shape[-1]).astype(jnp.float32)
    s_prob = jax.nn.softmax(s, axis=-1)
    s_logprob = jax.nn.log_softmax(s, axis=-1)
    t_logprob = jax.nn.log_softmax(t, axis=-1)
    inf_mask = jnp.isinf(s) | jnp.isinf(t)
    prod = (jnp.where(inf_mask, 0.0, s_prob * t_logprob)
            - jnp.where(inf_mask, 0.0, s_prob * s_logprob))
    x = jnp.sum(prod, axis=-1)
    mask = (labels.reshape(-1) != ignore_index).astype(jnp.float32)
    total = -jnp.sum(x * mask)
    if not normalize:
        return total
    den = jnp.sum(mask)
    return jnp.where(den == 0, 0.0, total / jnp.maximum(den, 1.0))


if __name__ == "__main__":
    key = jax.random.PRNGKey(0)
    ignore_index = -100

    # Problem A: bsz=2, num_tokens=53, vocab=512  (ragged token tail: N=106)
    bsz, num_tokens, vocab = 2, 53, 512
    n = bsz * num_tokens
    k1, k2, k3, k4 = jax.random.split(key, 4)
    student = jax.random.normal(k1, (n, vocab), dtype=jnp.float32)
    teacher = jax.random.normal(k2, (n, vocab), dtype=jnp.float32)
    labels = jax.random.randint(k3, (n,), 0, vocab, dtype=jnp.int32)
    labels = jnp.where(jax.random.bernoulli(k4, 0.25, (n,)), ignore_index, labels)

    ref = _reference_reverse_kl(student, teacher, labels,
                                normalize=True, ignore_index=ignore_index)

    # 1) auto-sized tiles (single vocab chunk, device-default parallelism)
    loss = jax.block_until_ready(
        reverse_kl_loss(student, teacher, labels, ignore_index=ignore_index))
    np.testing.assert_allclose(np.asarray(loss), np.asarray(ref), rtol=1e-4, atol=1e-5)

    # 2) small tm + forced 2-way parallel axis (exercises the clamped duplicate block)
    loss2 = jax.block_until_ready(
        reverse_kl_loss(student, teacher, labels, ignore_index=ignore_index,
                        tm=48, num_parallel=2))
    np.testing.assert_allclose(np.asarray(loss2), np.asarray(ref), rtol=1e-4, atol=1e-5)

    # 3) vocab-tiled online-LSE path (tv=128 -> 4 vocab chunks)
    loss3 = jax.block_until_ready(
        reverse_kl_loss(student, teacher, labels, ignore_index=ignore_index,
                        tm=64, tv=128))
    np.testing.assert_allclose(np.asarray(loss3), np.asarray(ref), rtol=1e-4, atol=1e-5)

    # 4) normalize=False path
    ref_unnorm = _reference_reverse_kl(student, teacher, labels,
                                       normalize=False, ignore_index=ignore_index)
    loss4 = jax.block_until_ready(
        reverse_kl_loss(student, teacher, labels, normalize=False,
                        ignore_index=ignore_index, tm=32))
    np.testing.assert_allclose(np.asarray(loss4), np.asarray(ref_unnorm),
                               rtol=1e-4, atol=1e-4)

    # 5) bf16 logits (half HBM traffic); compare vs reference on the same bf16 inputs
    s_bf, t_bf = student.astype(jnp.bfloat16), teacher.astype(jnp.bfloat16)
    ref_bf = _reference_reverse_kl(s_bf, t_bf, labels,
                                   normalize=True, ignore_index=ignore_index)
    loss5 = jax.block_until_ready(
        reverse_kl_loss(s_bf, t_bf, labels, ignore_index=ignore_index))
    np.testing.assert_allclose(np.asarray(loss5), np.asarray(ref_bf), rtol=1e-4, atol=1e-5)

    # 6) ragged vocab (500, not a multiple of 128) + forced vocab tiling + -inf logits
    n2, vocab2 = 40, 500
    k5, k6, k7, k8 = jax.random.split(k4, 4)
    s2 = jax.random.normal(k5, (n2, vocab2), dtype=jnp.float32)
    t2 = jax.random.normal(k6, (n2, vocab2), dtype=jnp.float32)
    s2 = s2.at[:, 3].set(-jnp.inf)       # masked student vocab entry
    t2 = t2.at[:, 7].set(-jnp.inf)       # masked teacher vocab entry
    lab2 = jax.random.randint(k7, (n2,), 0, vocab2, dtype=jnp.int32)
    lab2 = jnp.where(jax.random.bernoulli(k8, 0.2, (n2,)), ignore_index, lab2)
    ref2 = _reference_reverse_kl(s2, t2, lab2, normalize=True, ignore_index=ignore_index)
    loss6 = jax.block_until_ready(
        reverse_kl_loss(s2, t2, lab2, ignore_index=ignore_index, tv=128))
    np.testing.assert_allclose(np.asarray(loss6), np.asarray(ref2), rtol=1e-4, atol=1e-5)

    # 7) all tokens ignored -> exact 0.0 (and skips all heavy compute)
    all_ign = jnp.full((n,), ignore_index, dtype=jnp.int32)
    loss7 = jax.block_until_ready(
        reverse_kl_loss(student, teacher, all_ign, ignore_index=ignore_index))
    np.testing.assert_allclose(np.asarray(loss7), 0.0, atol=1e-6)

    print("KERNEL_OK")
</pallas_src>

<mosaic_0001>
module attributes {stable_mosaic.version = 11 : i64} {
  func.func @_reverse_kl_kernel(%arg0: i32, %arg1: i32, %arg2: i32, %arg3: memref<112x512xf32, #tpu.memory_space<vmem>>, %arg4: memref<112x512xf32, #tpu.memory_space<vmem>>, %arg5: memref<112x1xi32, #tpu.memory_space<vmem>>, %arg6: memref<1x1x1xf32, #tpu.memory_space<vmem>>, %arg7: memref<1x1x1xf32, #tpu.memory_space<vmem>>, %arg8: memref<1x1xf32, #tpu.memory_space<vmem>>, %arg9: memref<1x1xf32, #tpu.memory_space<vmem>>, %arg10: memref<112x1xf32, #tpu.memory_space<vmem>>, %arg11: memref<112x1xf32, #tpu.memory_space<vmem>>, %arg12: memref<112x1xf32, #tpu.memory_space<vmem>>, %arg13: memref<112x1xf32, #tpu.memory_space<vmem>>, %arg14: memref<112x1xf32, #tpu.memory_space<vmem>>, %arg15: memref<112x1xf32, #tpu.memory_space<vmem>>) attributes {dimension_semantics = [#tpu.dimension_semantics<parallel>, #tpu.dimension_semantics<arbitrary>, #tpu.dimension_semantics<arbitrary>], iteration_bounds = array<i64: 1, 1, 1>, scalar_prefetch = 0 : i64, scratch_operands = 8 : i64, tpu.core_type = #tpu.core_type<tc>, window_params = [{transform_indices = @transform_0, window_bounds = array<i64: 112, 512>}, {transform_indices = @transform_1, window_bounds = array<i64: 112, 512>}, {transform_indices = @transform_2, window_bounds = array<i64: 112, 1>}, {transform_indices = @transform_3, window_bounds = array<i64: 1, 1, 1>}, {transform_indices = @transform_4, window_bounds = array<i64: 1, 1, 1>}]} {
    %c0_i32 = arith.constant 0 : i32
    %0 = arith.cmpi eq, %arg1, %c0_i32 : i32
    %c0_i32_0 = arith.constant 0 : i32
    %1 = arith.cmpi eq, %arg2, %c0_i32_0 : i32
    %2 = arith.andi %0, %1 : i1
    %3 = arith.extui %2 : i1 to i32
    %c0_i32_1 = arith.constant 0 : i32
    %4 = arith.cmpi ne, %3, %c0_i32_1 : i32
    scf.if %4 {
      %cst_16 = arith.constant 0.000000e+00 : f32
      %43 = vector.broadcast %cst_16 : f32 to vector<1x1xf32>
      %c0_17 = arith.constant 0 : index
      %c0_18 = arith.constant 0 : index
      %44 = vector.load %arg8[%c0_17, %c0_18] : memref<1x1xf32, #tpu.memory_space<vmem>>, vector<1x1xf32>
      tpu.vector_store %arg8[%c0_17, %c0_18], %43 {strides = array<i32>} : memref<1x1xf32, #tpu.memory_space<vmem>>, vector<1x1xf32>,
      %cst_19 = arith.constant 0.000000e+00 : f32
      %45 = vector.broadcast %cst_19 : f32 to vector<1x1xf32>
      %c0_20 = arith.constant 0 : index
      %c0_21 = arith.constant 0 : index
      %46 = vector.load %arg9[%c0_20, %c0_21] : memref<1x1xf32, #tpu.memory_space<vmem>>, vector<1x1xf32>
      tpu.vector_store %arg9[%c0_20, %c0_21], %45 {strides = array<i32>} : memref<1x1xf32, #tpu.memory_space<vmem>>, vector<1x1xf32>,
    } else {
    }
    %c1_i32 = arith.constant 1 : i32
    %5 = arith.muli %arg0, %c1_i32 : i32
    %6 = arith.addi %5, %arg1 : i32
    %c0_i32_2 = arith.constant 0 : i32
    %7 = arith.minsi %6, %c0_i32_2 : i32
    %c112_i32 = arith.constant 112 : i32
    %8 = arith.muli %7, %c112_i32 : i32
    %9 = tpu.iota {dimensions = array<i32: 0>} : vector<112x1xi32>
    %10 = vector.broadcast %8 : i32 to vector<112x1xi32>
    %11 = arith.addi %10, %9 : vector<112x1xi32>
    %c0 = arith.constant 0 : index
    %c0_3 = arith.constant 0 : index
    %12 = vector.load %arg5[%c0, %c0_3] : memref<112x1xi32, #tpu.memory_space<vmem>>, vector<112x1xi32>
    %c-100_i32 = arith.constant -100 : i32
    %13 = vector.broadcast %c-100_i32 : i32 to vector<112x1xi32>
    %14 = arith.cmpi ne, %12, %13 : vector<112x1xi32>
    %c106_i32 = arith.constant 106 : i32
    %15 = vector.broadcast %c106_i32 : i32 to vector<112x1xi32>
    %16 = arith.cmpi slt, %11, %15 : vector<112x1xi32>
    %17 = arith.andi %14, %16 : vector<112x1xi1>
    %c1_i32_4 = arith.constant 1 : i32
    %18 = arith.cmpi slt, %6, %c1_i32_4 : i32
    %19 = vector.broadcast %18 : i1 to vector<112x1xi1>
    %20 = arith.andi %17, %19 : vector<112x1xi1>
    %cst = arith.constant 1.000000e+00 : f32
    %cst_5 = arith.constant 0.000000e+00 : f32
    %21 = vector.broadcast %cst : f32 to vector<112x1xf32>
    %22 = vector.broadcast %cst_5 : f32 to vector<112x1xf32>
    %23 = arith.select %20, %21, %22 : vector<112x1xi1>, vector<112x1xf32>
    %24 = vector.shape_cast %23 : vector<112x1xf32> to vector<1x112x1xf32>
    %cst_6 = arith.constant dense<0xFF800000> : vector<1xf32>
    %25 = vector.multi_reduction <maximumf>, %24, %cst_6 [1, 2] : vector<1x112x1xf32> to vector<1xf32>
    %26 = vector.shape_cast %25 : vector<1xf32> to vector<1x1x1xf32>
    %27 = vector.extract %26[0, 0, 0] : f32 from vector<1x1x1xf32>
    %cst_7 = arith.constant 0.000000e+00 : f32
    %28 = arith.cmpf ogt, %27, %cst_7 : f32
    %c0_i32_8 = arith.constant 0 : i32
    %29 = arith.cmpi eq, %arg2, %c0_i32_8 : i32
    %30 = arith.extui %29 : i1 to i32
    %c0_i32_9 = arith.constant 0 : i32
    %31 = arith.cmpi ne, %30, %c0_i32_9 : i32
    scf.if %31 {
      %cst_16 = arith.constant -1.000000e+30 : f32
      %43 = vector.broadcast %cst_16 : f32 to vector<112x1xf32>
      %c0_17 = arith.constant 0 : index
      %c0_18 = arith.constant 0 : index
      %44 = vector.load %arg10[%c0_17, %c0_18] : memref<112x1xf32, #tpu.memory_space<vmem>>, vector<112x1xf32>
      tpu.vector_store %arg10[%c0_17, %c0_18], %43 {strides = array<i32>} : memref<112x1xf32, #tpu.memory_space<vmem>>, vector<112x1xf32>,
      %cst_19 = arith.constant -1.000000e+30 : f32
      %45 = vector.broadcast %cst_19 : f32 to vector<112x1xf32>
      %c0_20 = arith.constant 0 : index
      %c0_21 = arith.constant 0 : index
      %46 = vector.load %arg11[%c0_20, %c0_21] : memref<112x1xf32, #tpu.memory_space<vmem>>, vector<112x1xf32>
      tpu.vector_store %arg11[%c0_20, %c0_21], %45 {strides = array<i32>} : memref<112x1xf32, #tpu.memory_space<vmem>>, vector<112x1xf32>,
      %cst_22 = arith.constant 0.000000e+00 : f32
      %47 = vector.broadcast %cst_22 : f32 to vector<112x1xf32>
      %c0_23 = arith.constant 0 : index
      %c0_24 = arith.constant 0 : index
      %48 = vector.load %arg12[%c0_23, %c0_24] : memref<112x1xf32, #tpu.memory_space<vmem>>, vector<112x1xf32>
      tpu.vector_store %arg12[%c0_23, %c0_24], %47 {strides = array<i32>} : memref<112x1xf32, #tpu.memory_space<vmem>>, vector<112x1xf32>,
      %cst_25 = arith.constant 0.000000e+00 : f32
      %49 = vector.broadcast %cst_25 : f32 to vector<112x1xf32>
      %c0_26 = arith.constant 0 : index
      %c0_27 = arith.constant 0 : index
      %50 = vector.load %arg13[%c0_26, %c0_27] : memref<112x1xf32, #tpu.memory_space<vmem>>, vector<112x1xf32>
      tpu.vector_store %arg13[%c0_26, %c0_27], %49 {strides = array<i32>} : memref<112x1xf32, #tpu.memory_space<vmem>>, vector<112x1xf32>,
      %cst_28 = arith.constant 0.000000e+00 : f32
      %51 = vector.broadcast %cst_28 : f32 to vector<112x1xf32>
      %c0_29 = arith.constant 0 : index
      %c0_30 = arith.constant 0 : index
      %52 = vector.load %arg14[%c0_29, %c0_30] : memref<112x1xf32, #tpu.memory_space<vmem>>, vector<112x1xf32>
      tpu.vector_store %arg14[%c0_29, %c0_30], %51 {strides = array<i32>} : memref<112x1xf32, #tpu.memory_space<vmem>>, vector<112x1xf32>,
      %cst_31 = arith.constant 0.000000e+00 : f32
      %53 = vector.broadcast %cst_31 : f32 to vector<112x1xf32>
      %c0_32 = arith.constant 0 : index
      %c0_33 = arith.constant 0 : index
      %54 = vector.load %arg15[%c0_32, %c0_33] : memref<112x1xf32, #tpu.memory_space<vmem>>, vector<112x1xf32>
      tpu.vector_store %arg15[%c0_32, %c0_33], %53 {strides = array<i32>} : memref<112x1xf32, #tpu.memory_space<vmem>>, vector<112x1xf32>,
    } else {
    }
    %32 = arith.extui %28 : i1 to i32
    %c0_i32_10 = arith.constant 0 : i32
    %33 = arith.cmpi ne, %32, %c0_i32_10 : i32
    scf.if %33 {
      %c0_16 = arith.constant 0 : index
      %c0_17 = arith.constant 0 : index
      %43 = vector.load %arg3[%c0_16, %c0_17] : memref<112x512xf32, #tpu.memory_space<vmem>>, vector<112x512xf32>
      %c0_18 = arith.constant 0 : index
      %c0_19 = arith.constant 0 : index
      %44 = vector.load %arg4[%c0_18, %c0_19] : memref<112x512xf32, #tpu.memory_space<vmem>>, vector<112x512xf32>
      %45 = arith.subf %44, %43 : vector<112x512xf32>
      %46 = math.absf %45 : vector<112x512xf32>
      %cst_20 = arith.constant 0x7F800000 : f32
      %47 = vector.broadcast %cst_20 : f32 to vector<112x512xf32>
      %48 = arith.cmpf olt, %46, %47 : vector<112x512xf32>
      %c0_21 = arith.constant 0 : index
      %c0_22 = arith.constant 0 : index
      %49 = vector.load %arg10[%c0_21, %c0_22] : memref<112x1xf32, #tpu.memory_space<vmem>>, vector<112x1xf32>
      %cst_23 = arith.constant dense<0xFF800000> : vector<112xf32>
      %50 = vector.multi_reduction <maximumf>, %43, %cst_23 [1] : vector<112x512xf32> to vector<112xf32>
      %51 = vector.shape_cast %50 : vector<112xf32> to vector<112x1xf32>
      %52 = arith.maximumf %49, %51 : vector<112x1xf32>
      %c0_24 = arith.constant 0 : index
      %c0_25 = arith.constant 0 : index
      %53 = vector.load %arg11[%c0_24, %c0_25] : memref<112x1xf32, #tpu.memory_space<vmem>>, vector<112x1xf32>
      %cst_26 = arith.constant dense<0xFF800000> : vector<112xf32>
      %54 = vector.multi_reduction <maximumf>, %44, %cst_26 [1] : vector<112x512xf32> to vector<112xf32>
      %55 = vector.shape_cast %54 : vector<112xf32> to vector<112x1xf32>
      %56 = arith.maximumf %53, %55 : vector<112x1xf32>
      %c0_27 = arith.constant 0 : index
      %c0_28 = arith.constant 0 : index
      %57 = vector.load %arg10[%c0_27, %c0_28] : memref<112x1xf32, #tpu.memory_space<vmem>>, vector<112x1xf32>
      %58 = arith.subf %57, %52 : vector<112x1xf32>
      %59 = math.exp %58 : vector<112x1xf32>
      %c0_29 = arith.constant 0 : index
      %c0_30 = arith.constant 0 : index
      %60 = vector.load %arg11[%c0_29, %c0_30] : memref<112x1xf32, #tpu.memory_space<vmem>>, vector<112x1xf32>
      %61 = arith.subf %60, %56 : vector<112x1xf32>
      %62 = math.exp %61 : vector<112x1xf32>
      %63 = vector.broadcast %52 : vector<112x1xf32> to vector<112x512xf32>
      %64 = arith.subf %43, %63 : vector<112x512xf32>
      %65 = math.exp %64 : vector<112x512xf32>
      %c0_31 = arith.constant 0 : index
      %c0_32 = arith.constant 0 : index
      %66 = vector.load %arg12[%c0_31, %c0_32] : memref<112x1xf32, #tpu.memory_space<vmem>>, vector<112x1xf32>
      %67 = arith.mulf %59, %66 : vector<112x1xf32>
      %cst_33 = arith.constant dense<0.000000e+00> : vector<112xf32>
      %68 = vector.multi_reduction <add>, %65, %cst_33 [1] : vector<112x512xf32> to vector<112xf32>
      %69 = vector.shape_cast %68 : vector<112xf32> to vector<112x1xf32>
      %70 = arith.addf %67, %69 : vector<112x1xf32>
      %c0_34 = arith.constant 0 : index
      %c0_35 = arith.constant 0 : index
      %71 = vector.load %arg12[%c0_34, %c0_35] : memref<112x1xf32, #tpu.memory_space<vmem>>, vector<112x1xf32>
      tpu.vector_store %arg12[%c0_34, %c0_35], %70 {strides = array<i32>} : memref<112x1xf32, #tpu.memory_space<vmem>>, vector<112x1xf32>,
      %c0_36 = arith.constant 0 : index
      %c0_37 = arith.constant 0 : index
      %72 = vector.load %arg13[%c0_36, %c0_37] : memref<112x1xf32, #tpu.memory_space<vmem>>, vector<112x1xf32>
      %73 = arith.mulf %62, %72 : vector<112x1xf32>
      %74 = vector.broadcast %56 : vector<112x1xf32> to vector<112x512xf32>
      %75 = arith.subf %44, %74 : vector<112x512xf32>
      %76 = math.exp %75 : vector<112x512xf32>
      %cst_38 = arith.constant dense<0.000000e+00> : vector<112xf32>
      %77 = vector.multi_reduction <add>, %76, %cst_38 [1] : vector<112x512xf32> to vector<112xf32>
      %78 = vector.shape_cast %77 : vector<112xf32> to vector<112x1xf32>
      %79 = arith.addf %73, %78 : vector<112x1xf32>
      %c0_39 = arith.constant 0 : index
      %c0_40 = arith.constant 0 : index
      %80 = vector.load %arg13[%c0_39, %c0_40] : memref<112x1xf32, #tpu.memory_space<vmem>>, vector<112x1xf32>
      tpu.vector_store %arg13[%c0_39, %c0_40], %79 {strides = array<i32>} : memref<112x1xf32, #tpu.memory_space<vmem>>, vector<112x1xf32>,
      %c0_41 = arith.constant 0 : index
      %c0_42 = arith.constant 0 : index
      %81 = vector.load %arg14[%c0_41, %c0_42] : memref<112x1xf32, #tpu.memory_space<vmem>>, vector<112x1xf32>
      %82 = arith.mulf %59, %81 : vector<112x1xf32>
      %83 = arith.mulf %65, %45 : vector<112x512xf32>
      %cst_43 = arith.constant 0.000000e+00 : f32
      %84 = vector.broadcast %cst_43 : f32 to vector<112x512xf32>
      %85 = arith.select %48, %83, %84 : vector<112x512xi1>, vector<112x512xf32>
      %cst_44 = arith.constant dense<0.000000e+00> : vector<112xf32>
      %86 = vector.multi_reduction <add>, %85, %cst_44 [1] : vector<112x512xf32> to vector<112xf32>
      %87 = vector.shape_cast %86 : vector<112xf32> to vector<112x1xf32>
      %88 = arith.addf %82, %87 : vector<112x1xf32>
      %c0_45 = arith.constant 0 : index
      %c0_46 = arith.constant 0 : index
      %89 = vector.load %arg14[%c0_45, %c0_46] : memref<112x1xf32, #tpu.memory_space<vmem>>, vector<112x1xf32>
      tpu.vector_store %arg14[%c0_45, %c0_46], %88 {strides = array<i32>} : memref<112x1xf32, #tpu.memory_space<vmem>>, vector<112x1xf32>,
      %c0_47 = arith.constant 0 : index
      %c0_48 = arith.constant 0 : index
      %90 = vector.load %arg15[%c0_47, %c0_48] : memref<112x1xf32, #tpu.memory_space<vmem>>, vector<112x1xf32>
      %91 = arith.mulf %59, %90 : vector<112x1xf32>
      %cst_49 = arith.constant 0.000000e+00 : f32
      %92 = vector.broadcast %cst_49 : f32 to vector<112x512xf32>
      %93 = arith.select %48, %65, %92 : vector<112x512xi1>, vector<112x512xf32>
      %cst_50 = arith.constant dense<0.000000e+00> : vector<112xf32>
      %94 = vector.multi_reduction <add>, %93, %cst_50 [1] : vector<112x512xf32> to vector<112xf32>
      %95 = vector.shape_cast %94 : vector<112xf32> to vector<112x1xf32>
      %96 = arith.addf %91, %95 : vector<112x1xf32>
      %c0_51 = arith.constant 0 : index
      %c0_52 = arith.constant 0 : index
      %97 = vector.load %arg15[%c0_51, %c0_52] : memref<112x1xf32, #tpu.memory_space<vmem>>, vector<112x1xf32>
      tpu.vector_store %arg15[%c0_51, %c0_52], %96 {strides = array<i32>} : memref<112x1xf32, #tpu.memory_space<vmem>>, vector<112x1xf32>,
      %c0_53 = arith.constant 0 : index
      %c0_54 = arith.constant 0 : index
      %98 = vector.load %arg10[%c0_53, %c0_54] : memref<112x1xf32, #tpu.memory_space<vmem>>, vector<112x1xf32>
      tpu.vector_store %arg10[%c0_53, %c0_54], %52 {strides = array<i32>} : memref<112x1xf32, #tpu.memory_space<vmem>>, vector<112x1xf32>,
      %c0_55 = arith.constant 0 : index
      %c0_56 = arith.constant 0 : index
      %99 = vector.load %arg11[%c0_55, %c0_56] : memref<112x1xf32, #tpu.memory_space<vmem>>, vector<112x1xf32>
      tpu.vector_store %arg11[%c0_55, %c0_56], %56 {strides = array<i32>} : memref<112x1xf32, #tpu.memory_space<vmem>>, vector<112x1xf32>,
    } else {
    }
    %c0_i32_11 = arith.constant 0 : i32
    %34 = arith.cmpi eq, %arg2, %c0_i32_11 : i32
    %35 = arith.andi %28, %34 : i1
    %36 = arith.extui %35 : i1 to i32
    %c0_i32_12 = arith.constant 0 : i32
    %37 = arith.cmpi ne, %36, %c0_i32_12 : i32
    scf.if %37 {
      %c0_16 = arith.constant 0 : index
      %c0_17 = arith.constant 0 : index
      %43 = vector.load %arg10[%c0_16, %c0_17] : memref<112x1xf32, #tpu.memory_space<vmem>>, vector<112x1xf32>
      %c0_18 = arith.constant 0 : index
      %c0_19 = arith.constant 0 : index
      %44 = vector.load %arg11[%c0_18, %c0_19] : memref<112x1xf32, #tpu.memory_space<vmem>>, vector<112x1xf32>
      %45 = arith.subf %43, %44 : vector<112x1xf32>
      %c0_20 = arith.constant 0 : index
      %c0_21 = arith.constant 0 : index
      %46 = vector.load %arg12[%c0_20, %c0_21] : memref<112x1xf32, #tpu.memory_space<vmem>>, vector<112x1xf32>
      %47 = math.log %46 : vector<112x1xf32>
      %c0_22 = arith.constant 0 : index
      %c0_23 = arith.constant 0 : index
      %48 = vector.load %arg13[%c0_22, %c0_23] : memref<112x1xf32, #tpu.memory_space<vmem>>, vector<112x1xf32>
      %49 = math.log %48 : vector<112x1xf32>
      %50 = arith.subf %47, %49 : vector<112x1xf32>
      %51 = arith.addf %45, %50 : vector<112x1xf32>
      %c0_24 = arith.constant 0 : index
      %c0_25 = arith.constant 0 : index
      %52 = vector.load %arg14[%c0_24, %c0_25] : memref<112x1xf32, #tpu.memory_space<vmem>>, vector<112x1xf32>
      %c0_26 = arith.constant 0 : index
      %c0_27 = arith.constant 0 : index
      %53 = vector.load %arg15[%c0_26, %c0_27] : memref<112x1xf32, #tpu.memory_space<vmem>>, vector<112x1xf32>
      %54 = arith.mulf %51, %53 : vector<112x1xf32>
      %55 = arith.addf %52, %54 : vector<112x1xf32>
      %c0_28 = arith.constant 0 : index
      %c0_29 = arith.constant 0 : index
      %56 = vector.load %arg12[%c0_28, %c0_29] : memref<112x1xf32, #tpu.memory_space<vmem>>, vector<112x1xf32>
      %57 = arith.divf %55, %56 : vector<112x1xf32>
      %cst_30 = arith.constant 0.000000e+00 : f32
      %58 = vector.broadcast %cst_30 : f32 to vector<112x1xf32>
      %59 = arith.select %20, %57, %58 : vector<112x1xi1>, vector<112x1xf32>
      %c0_31 = arith.constant 0 : index
      %c0_32 = arith.constant 0 : index
      %60 = vector.load %arg8[%c0_31, %c0_32] : memref<1x1xf32, #tpu.memory_space<vmem>>, vector<1x1xf32>
      %61 = vector.shape_cast %59 : vector<112x1xf32> to vector<1x112x1xf32>
      %cst_33 = arith.constant dense<0.000000e+00> : vector<1xf32>
      %62 = vector.multi_reduction <add>, %61, %cst_33 [1, 2] : vector<1x112x1xf32> to vector<1xf32>
      %63 = vector.shape_cast %62 : vector<1xf32> to vector<1x1x1xf32>
      %64 = vector.extract %63[0, 0, 0] : f32 from vector<1x1x1xf32>
      %cst_34 = arith.constant 0.000000e+00 : f32
      %65 = arith.subf %cst_34, %64 : f32
      %66 = vector.broadcast %65 : f32 to vector<1x1xf32>
      %67 = arith.addf %60, %66 : vector<1x1xf32>
      %c0_35 = arith.constant 0 : index
      %c0_36 = arith.constant 0 : index
      %68 = vector.load %arg8[%c0_35, %c0_36] : memref<1x1xf32, #tpu.memory_space<vmem>>, vector<1x1xf32>
      tpu.vector_store %arg8[%c0_35, %c0_36], %67 {strides = array<i32>} : memref<1x1xf32, #tpu.memory_space<vmem>>, vector<1x1xf32>,
      %c0_37 = arith.constant 0 : index
      %c0_38 = arith.constant 0 : index
      %69 = vector.load %arg9[%c0_37, %c0_38] : memref<1x1xf32, #tpu.memory_space<vmem>>, vector<1x1xf32>
      %70 = arith.extui %20 : vector<112x1xi1> to vector<112x1xi32>
      %71 = arith.sitofp %70 : vector<112x1xi32> to vector<112x1xf32>
      %72 = vector.shape_cast %71 : vector<112x1xf32> to vector<1x112x1xf32>
      %cst_39 = arith.constant dense<0.000000e+00> : vector<1xf32>
      %73 = vector.multi_reduction <add>, %72, %cst_39 [1, 2] : vector<1x112x1xf32> to vector<1xf32>
      %74 = vector.shape_cast %73 : vector<1xf32> to vector<1x1x1xf32>
      %75 = vector.extract %74[0, 0, 0] : f32 from vector<1x1x1xf32>
      %76 = vector.broadcast %75 : f32 to vector<1x1xf32>
      %77 = arith.addf %69, %76 : vector<1x1xf32>
      %c0_40 = arith.constant 0 : index
      %c0_41 = arith.constant 0 : index
      %78 = vector.load %arg9[%c0_40, %c0_41] : memref<1x1xf32, #tpu.memory_space<vmem>>, vector<1x1xf32>
      tpu.vector_store %arg9[%c0_40, %c0_41], %77 {strides = array<i32>} : memref<1x1xf32, #tpu.memory_space<vmem>>, vector<1x1xf32>,
    } else {
    }
    %c0_i32_13 = arith.constant 0 : i32
    %38 = arith.cmpi eq, %arg1, %c0_i32_13 : i32
    %c0_i32_14 = arith.constant 0 : i32
    %39 = arith.cmpi eq, %arg2, %c0_i32_14 : i32
    %40 = arith.andi %38, %39 : i1
    %41 = arith.extui %40 : i1 to i32
    %c0_i32_15 = arith.constant 0 : i32
    %42 = arith.cmpi ne, %41, %c0_i32_15 : i32
    scf.if %42 {
      %c0_16 = arith.constant 0 : index
      %c0_17 = arith.constant 0 : index
      %43 = vector.load %arg8[%c0_16, %c0_17] : memref<1x1xf32, #tpu.memory_space<vmem>>, vector<1x1xf32>
      %c0_18 = arith.constant 0 : index
      %c0_19 = arith.constant 0 : index
      %c0_20 = arith.constant 0 : index
      %44 = vector.load %arg6[%c0_18, %c0_19, %c0_20] : memref<1x1x1xf32, #tpu.memory_space<vmem>>, vector<1x1x1xf32>
      %45 = vector.shape_cast %44 : vector<1x1x1xf32> to vector<1x1xf32>
      %46 = vector.shape_cast %43 : vector<1x1xf32> to vector<1x1x1xf32>
      tpu.vector_store %arg6[%c0_18, %c0_19, %c0_20], %46 {strides = array<i32>} : memref<1x1x1xf32, #tpu.memory_space<vmem>>, vector<1x1x1xf32>,
      %c0_21 = arith.constant 0 : index
      %c0_22 = arith.constant 0 : index
      %47 = vector.load %arg9[%c0_21, %c0_22] : memref<1x1xf32, #tpu.memory_space<vmem>>, vector<1x1xf32>
      %c0_23 = arith.constant 0 : index
      %c0_24 = arith.constant 0 : index
      %c0_25 = arith.constant 0 : index
      %48 = vector.load %arg7[%c0_23, %c0_24, %c0_25] : memref<1x1x1xf32, #tpu.memory_space<vmem>>, vector<1x1x1xf32>
      %49 = vector.shape_cast %48 : vector<1x1x1xf32> to vector<1x1xf32>
      %50 = vector.shape_cast %47 : vector<1x1xf32> to vector<1x1x1xf32>
      tpu.vector_store %arg7[%c0_23, %c0_24, %c0_25], %50 {strides = array<i32>} : memref<1x1x1xf32, #tpu.memory_space<vmem>>, vector<1x1x1xf32>,
    } else {
    }
    return
  }
  func.func @transform_0(%arg0: i32, %arg1: i32, %arg2: i32) -> (i32, i32) {
    %c1_i32 = arith.constant 1 : i32
    %0 = arith.muli %arg0, %c1_i32 : i32
    %1 = arith.addi %0, %arg1 : i32
    %c0_i32 = arith.constant 0 : i32
    %2 = arith.minsi %1, %c0_i32 : i32
    %c0_i32_0 = arith.constant 0 : i32
    return %2, %arg2 : i32, i32
  }
  func.func @transform_1(%arg0: i32, %arg1: i32, %arg2: i32) -> (i32, i32) {
    %c1_i32 = arith.constant 1 : i32
    %0 = arith.muli %arg0, %c1_i32 : i32
    %1 = arith.addi %0, %arg1 : i32
    %c0_i32 = arith.constant 0 : i32
    %2 = arith.minsi %1, %c0_i32 : i32
    %c0_i32_0 = arith.constant 0 : i32
    return %2, %arg2 : i32, i32
  }
  func.func @transform_2(%arg0: i32, %arg1: i32, %arg2: i32) -> (i32, i32) {
    %c1_i32 = arith.constant 1 : i32
    %0 = arith.muli %arg0, %c1_i32 : i32
    %1 = arith.addi %0, %arg1 : i32
    %c0_i32 = arith.constant 0 : i32
    %2 = arith.minsi %1, %c0_i32 : i32
    %c0_i32_0 = arith.constant 0 : i32
    %c0_i32_1 = arith.constant 0 : i32
    return %2, %c0_i32_0 : i32, i32
  }
  func.func @transform_3(%arg0: i32, %arg1: i32, %arg2: i32) -> (i32, i32, i32) {
    %c0_i32 = arith.constant 0 : i32
    %c0_i32_0 = arith.constant 0 : i32
    %c0_i32_1 = arith.constant 0 : i32
    return %arg0, %c0_i32, %c0_i32_0 : i32, i32, i32
  }
  func.func @transform_4(%arg0: i32, %arg1: i32, %arg2: i32) -> (i32, i32, i32) {
    %c0_i32 = arith.constant 0 : i32
    %c0_i32_0 = arith.constant 0 : i32
    %c0_i32_1 = arith.constant 0 : i32
    return %arg0, %c0_i32, %c0_i32_0 : i32, i32, i32
  }
}

</mosaic_0001>

<llo_original>
// kernel: tpu_custom_call.1
$region0: #{tpu_custom_call.1}
  #allocation0 [shape = 'u32[]', space=smem, size = 0x4, offset = 0x4, fixed_abs, tag = 'smem constant byte address 0x4 - core index']
  #allocation1 [shape = 'u32[144,128]{1,0:T(1,128)}', space=vmem, size = 0x12000, scoped, tag = 'internal scratch']
  #allocation2 [shape = 'f32[1,1]{1,0:T(1,128)}', space=vmem, size = 0x200, scoped, tag = 'scratch operand']
  #allocation3 [shape = 'f32[1,1]{1,0:T(1,128)}', space=vmem, size = 0x200, scoped, tag = 'scratch operand']
  #allocation4 [shape = 'f32[112,1]{1,0:T(8,128)}', space=vmem, size = 0xe000, scoped, tag = 'scratch operand']
  #allocation5 [shape = 'f32[112,1]{1,0:T(8,128)}', space=vmem, size = 0xe000, scoped, tag = 'scratch operand']
  #allocation6 [shape = 'f32[112,1]{1,0:T(8,128)}', space=vmem, size = 0xe000, scoped, tag = 'scratch operand']
  #allocation7 [shape = 'f32[112,1]{1,0:T(8,128)}', space=vmem, size = 0xe000, scoped, tag = 'scratch operand']
  #allocation8 [shape = 'f32[112,1]{1,0:T(8,128)}', space=vmem, size = 0xe000, scoped, tag = 'scratch operand']
  #allocation9 [shape = 'f32[112,1]{1,0:T(8,128)}', space=vmem, size = 0xe000, scoped, tag = 'scratch operand']
  %s0 = inlined_call_operand.hbm [shape: f32[106,512], index: 0, kind: input, shape index: {}]
  %s1 = inlined_call_operand.hbm [shape: f32[106,512], index: 1, kind: input, shape index: {}]
  %s2 = inlined_call_operand.vmem [shape: s32[106,1], index: 2, kind: input, shape index: {}]
  %s3 = inlined_call_operand.hbm [shape: f32[1,1,1], index: 3, kind: output, shape index: {0}]
  %s4 = inlined_call_operand.hbm [shape: f32[1,1,1], index: 4, kind: output, shape index: {1}]
  %5 = xla_tuple %s3, %s4
  %s6 = sld [smem:[#allocation0]]
  $region58: #{tpu_custom_call.1} parent=0
    _
  %s8 = ssub.s32 1, %s6
  %s9 = scalar_select 0, %s8, %s6
  $region1: #{tpu_custom_call.1} parent=0
    #allocation10 [shape = 'u8[229376]{0}', space=vmem, size = 0x38000, scoped, tag = 'input window, operand 0, single buffered']
    #allocation11 [shape = 's32[1]{0}', space=sflag, size = 0x4, scoped, tag = 'scoped memory for tpu_custom_call.1']
    #allocation12 [shape = 's32[1]{0}', space=sflag, size = 0x4, scoped, tag = 'scoped memory for tpu_custom_call.1']
    #allocation13 [shape = 'u8[229376]{0}', space=vmem, size = 0x38000, scoped, tag = 'input window, operand 1, single buffered']
    #allocation14 [shape = 's32[1]{0}', space=sflag, size = 0x4, scoped, tag = 'scoped memory for tpu_custom_call.1']
    #allocation15 [shape = 'u8[512]{0}', space=vmem, size = 0x400, scoped, tag = 'output window, operand 0, single buffered']
    #allocation16 [shape = 'u8[512]{0}', space=vmem, size = 0x400, scoped, tag = 'output window, operand 1, single buffered']
    #allocation17 [shape = 's32[1]{0}', space=sflag, size = 0x4, scoped, tag = 'scoped memory for tpu_custom_call.1']
    %10 = vsyncpa [#allocation11], 0
    %11 = vsyncpa [#allocation14], 0
    %12 = vsyncpa [#allocation12], 0
    %13 = vsyncpa [#allocation17], 0
    // Predicated region
    $region2: #{tpu_custom_call.1} parent=1 // pred_check
      _
    $region3: #{tpu_custom_call.1} parent=1 // pred_check_branch
      %15 = sbr.rel (0) target = $region5
    $region4: #{tpu_custom_call.1} parent=1 // pred_region
      %s16 = sadd.s32 0, 0
      %p17 = scmp.lt.s32.totalorder %s16, 0
      %s18 = scalar_select %p17, %s16, 0
      %s19 = smul.u32 14, %s18
      %s21 = ssub.s32 7168, 7168
      %22 = vsyncadd [#allocation11], %s21
      %s23 = smul.addr %s19, 4
      %s24 = smul.addr %s23, 128
      %s25 = scalar_lea.hbm %s0, %s24
      %s26 = sshll.u32 [#allocation10], 4
      %s27 = int_to_ptr.vmem [resolvable:$true] %s26
      %32 = dma.hbm_to_vmem [thread:$0]  %s25, 7168, %s27, [#allocation11], 512, 512, 32
    $region5: #{tpu_custom_call.1} parent=1 // pred_fallthru
      _
    // Predicated region
    $region6: #{tpu_custom_call.1} parent=1 // pred_check
      _
    $region7: #{tpu_custom_call.1} parent=1 // pred_check_branch
      %34 = sbr.rel (0) target = $region9
    $region8: #{tpu_custom_call.1} parent=1 // pred_region
      %s35 = sadd.s32 0, 0
      %p36 = scmp.lt.s32.totalorder %s35, 0
      %s37 = scalar_select %p36, %s35, 0
      %s38 = smul.u32 14, %s37
      %s40 = ssub.s32 7168, 7168
      %41 = vsyncadd [#allocation14], %s40
      %s42 = smul.addr %s38, 4
      %s43 = smul.addr %s42, 128
      %s44 = scalar_lea.hbm %s1, %s43
      %s45 = sshll.u32 [#allocation13], 4
      %s46 = int_to_ptr.vmem [resolvable:$true] %s45
      %51 = dma.hbm_to_vmem [thread:$0]  %s44, 7168, %s46, [#allocation14], 512, 512, 32
    $region9: #{tpu_custom_call.1} parent=1 // pred_fallthru
      _
    // Predicated region
    $region10: #{tpu_custom_call.1} parent=1 // pred_check
      _
    $region11: #{tpu_custom_call.1} parent=1 // pred_check_branch
      %53 = sbr.rel (0) target = $region13
    $region12: #{tpu_custom_call.1} parent=1 // pred_region
      %s54 = sadd.s32 0, 0
      %p55 = scmp.lt.s32.totalorder %s54, 0
      %s56 = scalar_select %p55, %s54, 0
      %s57 = smul.u32 14, %s56
      %p58 = scmp.lt.s32.totalorder %s57, 13
      %s59 = scalar_select %p58, %s57, 13
      %s60 = smul.addr %s59, 8
      %s61 = scalar_lea.vmem %s2, %s60
      %s62 = sadd.s32 0, 0
      %p63 = scmp.lt.s32.totalorder %s62, 0
      %s64 = scalar_select %p63, %s62, 0
      %s65 = smul.u32 14, %s64
    $region13: #{tpu_custom_call.1} parent=1 // pred_fallthru
      _
    // Predicated region
    $region14: #{tpu_custom_call.1} parent=1 // pred_check
      _
    $region15: #{tpu_custom_call.1} parent=1 // pred_check_branch
      %67 = sbr.rel (0) target = $region17
    $region16: #{tpu_custom_call.1} parent=1 // pred_region
      %68 = dma.done [#allocation11], 7168
    $region17: #{tpu_custom_call.1} parent=1 // pred_fallthru
      _
    // Predicated region
    $region18: #{tpu_custom_call.1} parent=1 // pred_check
      _
    $region19: #{tpu_custom_call.1} parent=1 // pred_check_branch
      %70 = sbr.rel (0) target = $region21
    $region20: #{tpu_custom_call.1} parent=1 // pred_region
      %71 = dma.done [#allocation14], 7168
    $region21: #{tpu_custom_call.1} parent=1 // pred_fallthru
      _
    %s72 = sadd.s32 0, 0
    %p73 = scmp.lt.s32.totalorder %s72, 0
    %s74 = scalar_select %p73, %s72, 0
    %s75 = smul.u32 14, %s74
    %p76 = scmp.lt.s32.totalorder %s75, 13
    %s77 = scalar_select %p76, %s75, 13
    %s78 = smul.addr %s77, 8
    %s79 = scalar_lea.vmem %s2, %s78
    %s80 = sadd.s32 0, 0
    %p81 = scmp.lt.s32.totalorder %s80, 0
    %s82 = scalar_select %p81, %s80, 0
    %s83 = smul.u32 14, %s82
    %s84 = sadd.s32 0, 0
    %p85 = scmp.lt.s32.totalorder %s84, 0
    %s86 = scalar_select %p85, %s84, 0
    %s87 = smul.u32 14, %s86
    %s88 = sadd.s32 0, 0
    %p89 = scmp.lt.s32.totalorder %s88, 0
    %s90 = scalar_select %p89, %s88, 0
    %s91 = smul.u32 14, %s90
    %p92 = scmp.lt.s32.totalorder %s91, 13
    %s93 = scalar_select %p92, %s91, 13
    %s94 = smul.addr %s93, 8
    %s95 = scalar_lea.vmem %s2, %s94
    %s96 = sadd.s32 0, 0
    %p97 = scmp.lt.s32.totalorder %s96, 0
    %s98 = scalar_select %p97, %s96, 0
    %s99 = smul.u32 14, %s98
    %p100 = scmp.eq.s32.totalorder 0, 0
    %p101 = scmp.eq.s32.totalorder 0, 0
    %p102 = pnand %p100, %p101
    %p103 = pneg %p102
    // Predicated region
    $region22: #{tpu_custom_call.1} parent=1 // pred_check
      _
    $region23: #{tpu_custom_call.1} parent=1 // pred_check_branch
      %105 = sbr.rel (%p102) target = $region25
    $region24: #{tpu_custom_call.1} parent=1 // pred_region
      %vm106 = vcmask 0
      %107 = vst.msk [vmem:[#allocation2] sm:$0x1] %vm106, 0.0
      %108 = vst.msk [vmem:[#allocation3] sm:$0x1] %vm106, 0.0
    $region25: #{tpu_custom_call.1} parent=1 // pred_fallthru
      _
    %s109 = sadd.s32 0, 0
    %p110 = scmp.lt.s32.totalorder %s109, 0
    %s111 = scalar_select %p110, %s109, 0
    %s112 = smul.u32 %s111, 112
    %v113 = vlaneseq
    %v114 = vshrl.u32 %v113, 7
    %v115 = vadd.s32 %v114, 8
    %v116 = vadd.s32 %v114, 16
    %v117 = vadd.s32 %v114, 24
    %v118 = vadd.s32 %v114, 32
    %v119 = vadd.s32 %v114, 40
    %v120 = vadd.s32 %v114, 48
    %v121 = vadd.s32 %v114, 56
    %v122 = vadd.s32 %v114, 64
    %v123 = vadd.s32 %v114, 72
    %v124 = vadd.s32 %v114, 80
    %v125 = vadd.s32 %v114, 88
    %v126 = vadd.s32 %v114, 96
    %v127 = vadd.s32 %v114, 104
    %v128 = vstv %s112
    %v129 = vadd.s32 %v128, %v114
    %v130 = vadd.s32 %v128, %v115
    %v131 = vadd.s32 %v128, %v116
    %v132 = vadd.s32 %v128, %v117
    %v133 = vadd.s32 %v128, %v118
    %v134 = vadd.s32 %v128, %v119
    %v135 = vadd.s32 %v128, %v120
    %v136 = vadd.s32 %v128, %v121
    %v137 = vadd.s32 %v128, %v122
    %v138 = vadd.s32 %v128, %v123
    %v139 = vadd.s32 %v128, %v124
    %v140 = vadd.s32 %v128, %v125
    %v141 = vadd.s32 %v128, %v126
    %v142 = vadd.s32 %v128, %v127
    %v143 = vld [vmem:[%s95] sm:$0xff]
    %v144 = vld [vmem:[%s95 + $0x8] sm:$0xff]
    %v145 = vld [vmem:[%s95 + $0x10] sm:$0xff]
    %v146 = vld [vmem:[%s95 + $0x18] sm:$0xff]
    %v147 = vld [vmem:[%s95 + $0x20] sm:$0xff]
    %v148 = vld [vmem:[%s95 + $0x28] sm:$0xff]
    %v149 = vld [vmem:[%s95 + $0x30] sm:$0xff]
    %v150 = vld [vmem:[%s95 + $0x38] sm:$0xff]
    %v151 = vld [vmem:[%s95 + $0x40] sm:$0xff]
    %v152 = vld [vmem:[%s95 + $0x48] sm:$0xff]
    %v153 = vld [vmem:[%s95 + $0x50] sm:$0xff]
    %v154 = vld [vmem:[%s95 + $0x58] sm:$0xff]
    %v155 = vld [vmem:[%s95 + $0x60] sm:$0xff]
    %v156 = vld [vmem:[%s95 + $0x68] sm:$0xff]
    %vm157 = vcmp.ne.s32.totalorder %v143, 4294967196
    %vm158 = vcmp.ne.s32.totalorder %v144, 4294967196
    %vm159 = vcmp.ne.s32.totalorder %v145, 4294967196
    %vm160 = vcmp.ne.s32.totalorder %v146, 4294967196
    %vm161 = vcmp.ne.s32.totalorder %v147, 4294967196
    %vm162 = vcmp.ne.s32.totalorder %v148, 4294967196
    %vm163 = vcmp.ne.s32.totalorder %v149, 4294967196
    %vm164 = vcmp.ne.s32.totalorder %v150, 4294967196
    %vm165 = vcmp.ne.s32.totalorder %v151, 4294967196
    %vm166 = vcmp.ne.s32.totalorder %v152, 4294967196
    %vm167 = vcmp.ne.s32.totalorder %v153, 4294967196
    %vm168 = vcmp.ne.s32.totalorder %v154, 4294967196
    %vm169 = vcmp.ne.s32.totalorder %v155, 4294967196
    %vm170 = vcmp.ne.s32.totalorder %v156, 4294967196
    %vm171 = vcmp.lt.s32.totalorder %v129, 106
    %vm172 = vcmp.lt.s32.totalorder %v130, 106
    %vm173 = vcmp.lt.s32.totalorder %v131, 106
    %vm174 = vcmp.lt.s32.totalorder %v132, 106
    %vm175 = vcmp.lt.s32.totalorder %v133, 106
    %vm176 = vcmp.lt.s32.totalorder %v134, 106
    %vm177 = vcmp.lt.s32.totalorder %v135, 106
    %vm178 = vcmp.lt.s32.totalorder %v136, 106
    %vm179 = vcmp.lt.s32.totalorder %v137, 106
    %vm180 = vcmp.lt.s32.totalorder %v138, 106
    %vm181 = vcmp.lt.s32.totalorder %v139, 106
    %vm182 = vcmp.lt.s32.totalorder %v140, 106
    %vm183 = vcmp.lt.s32.totalorder %v141, 106
    %vm184 = vcmp.lt.s32.totalorder %v142, 106
    %vm185 = vmand %vm157, %vm171
    %vm186 = vmand %vm158, %vm172
    %vm187 = vmand %vm159, %vm173
    %vm188 = vmand %vm160, %vm174
    %vm189 = vmand %vm161, %vm175
    %vm190 = vmand %vm162, %vm176
    %vm191 = vmand %vm163, %vm177
    %vm192 = vmand %vm164, %vm178
    %vm193 = vmand %vm165, %vm179
    %vm194 = vmand %vm166, %vm180
    %vm195 = vmand %vm167, %vm181
    %vm196 = vmand %vm168, %vm182
    %vm197 = vmand %vm169, %vm183
    %vm198 = vmand %vm170, %vm184
    %p199 = scmp.lt.s32.totalorder %s109, 1
    %s200 = scalar_select %p199, 1, 0
    %v201 = vstv %s200
    %vm202 = vcmp.eq.s32.totalorder %v201, 1
    %vm203 = vmand %vm185, %vm202
    %vm204 = vmand %vm186, %vm202
    %vm205 = vmand %vm187, %vm202
    %vm206 = vmand %vm188, %vm202
    %vm207 = vmand %vm189, %vm202
    %vm208 = vmand %vm190, %vm202
    %vm209 = vmand %vm191, %vm202
    %vm210 = vmand %vm192, %vm202
    %vm211 = vmand %vm193, %vm202
    %vm212 = vmand %vm194, %vm202
    %vm213 = vmand %vm195, %vm202
    %vm214 = vmand %vm196, %vm202
    %vm215 = vmand %vm197, %vm202
    %vm216 = vmand %vm198, %vm202
    %v217 = vsel %vm203, 1.0, 0.0
    %v218 = vsel %vm204, 1.0, 0.0
    %v219 = vsel %vm205, 1.0, 0.0
    %v220 = vsel %vm206, 1.0, 0.0
    %v221 = vsel %vm207, 1.0, 0.0
    %v222 = vsel %vm208, 1.0, 0.0
    %v223 = vsel %vm209, 1.0, 0.0
    %v224 = vsel %vm210, 1.0, 0.0
    %v225 = vsel %vm211, 1.0, 0.0
    %v226 = vsel %vm212, 1.0, 0.0
    %v227 = vsel %vm213, 1.0, 0.0
    %v228 = vsel %vm214, 1.0, 0.0
    %v229 = vsel %vm215, 1.0, 0.0
    %v230 = vsel %vm216, 1.0, 0.0
    %vm231 = vcmask 7168
    %v232 = vsel %vm231, %v217, -inf
    %v233 = vsel %vm231, %v218, -inf
    %v234 = vsel %vm231, %v219, -inf
    %v235 = vsel %vm231, %v220, -inf
    %v236 = vsel %vm231, %v221, -inf
    %v237 = vmax.f32 %v232, %v236
    %v238 = vsel %vm231, %v222, -inf
    %v239 = vmax.f32 %v233, %v238
    %v240 = vsel %vm231, %v223, -inf
    %v241 = vmax.f32 %v234, %v240
    %v242 = vsel %vm231, %v224, -inf
    %v243 = vmax.f32 %v235, %v242
    %v244 = vsel %vm231, %v225, -inf
    %v245 = vmax.f32 %v237, %v244
    %v246 = vsel %vm231, %v226, -inf
    %v247 = vmax.f32 %v239, %v246
    %v248 = vsel %vm231, %v227, -inf
    %v249 = vmax.f32 %v241, %v248
    %v250 = vsel %vm231, %v228, -inf
    %v251 = vmax.f32 %v243, %v250
    %v252 = vsel %vm231, %v229, -inf
    %v253 = vmax.f32 %v245, %v252
    %v254 = vsel %vm231, %v230, -inf
    %v255 = vmax.f32 %v247, %v254
    %v256 = vmax.f32 %v253, %v255
    %v257 = vmax.f32 %v249, %v251
    %v258 = vmax.f32 %v256, %v257
    %259 = vmax.xlane.f32.xlu0 %v258
    %v260 = vpop.xlane.xlu0 %259
    %v261 = vrot.slane %v260, 4
    %v262 = vmax.f32 %v260, %v261
    %v263 = vrot.slane %v262, 2
    %v264 = vmax.f32 %v262, %v263
    %v265 = vrot.slane %v264, 1
    %v266 = vmax.f32 %v264, %v265
    %s267 = vtos %v266
    %p268 = scmp.gt.f32.partialorder %s267, 0.0
    // Predicated region
    $region26: #{tpu_custom_call.1} parent=1 // pred_check
      %p269 = pneg %p101
    $region27: #{tpu_custom_call.1} parent=1 // pred_check_branch
      %271 = sbr.rel (%p269) target = $region29
    $region28: #{tpu_custom_call.1} parent=1 // pred_region
      %272 = vst.msk [vmem:[#allocation4] sm:$0xff] %vm231, -1e+30
      %273 = vst.msk [vmem:[#allocation4 + $0x8] sm:$0xff] %vm231, -1e+30
      %274 = vst.msk [vmem:[#allocation4 + $0x10] sm:$0xff] %vm231, -1e+30
      %275 = vst.msk [vmem:[#allocation4 + $0x18] sm:$0xff] %vm231, -1e+30
      %276 = vst.msk [vmem:[#allocation4 + $0x20] sm:$0xff] %vm231, -1e+30
      %277 = vst.msk [vmem:[#allocation4 + $0x28] sm:$0xff] %vm231, -1e+30
      %278 = vst.msk [vmem:[#allocation4 + $0x30] sm:$0xff] %vm231, -1e+30
      %279 = vst.msk [vmem:[#allocation4 + $0x38] sm:$0xff] %vm231, -1e+30
      %280 = vst.msk [vmem:[#allocation4 + $0x40] sm:$0xff] %vm231, -1e+30
      %281 = vst.msk [vmem:[#allocation4 + $0x48] sm:$0xff] %vm231, -1e+30
      %282 = vst.msk [vmem:[#allocation4 + $0x50] sm:$0xff] %vm231, -1e+30
      %283 = vst.msk [vmem:[#allocation4 + $0x58] sm:$0xff] %vm231, -1e+30
      %284 = vst.msk [vmem:[#allocation4 + $0x60] sm:$0xff] %vm231, -1e+30
      %285 = vst.msk [vmem:[#allocation4 + $0x68] sm:$0xff] %vm231, -1e+30
      %286 = vst.msk [vmem:[#allocation5] sm:$0xff] %vm231, -1e+30
      %287 = vst.msk [vmem:[#allocation5 + $0x8] sm:$0xff] %vm231, -1e+30
      %288 = vst.msk [vmem:[#allocation5 + $0x10] sm:$0xff] %vm231, -1e+30
      %289 = vst.msk [vmem:[#allocation5 + $0x18] sm:$0xff] %vm231, -1e+30
      %290 = vst.msk [vmem:[#allocation5 + $0x20] sm:$0xff] %vm231, -1e+30
      %291 = vst.msk [vmem:[#allocation5 + $0x28] sm:$0xff] %vm231, -1e+30
      %292 = vst.msk [vmem:[#allocation5 + $0x30] sm:$0xff] %vm231, -1e+30
      %293 = vst.msk [vmem:[#allocation5 + $0x38] sm:$0xff] %vm231, -1e+30
      %294 = vst.msk [vmem:[#allocation5 + $0x40] sm:$0xff] %vm231, -1e+30
      %295 = vst.msk [vmem:[#allocation5 + $0x48] sm:$0xff] %vm231, -1e+30
      %296 = vst.msk [vmem:[#allocation5 + $0x50] sm:$0xff] %vm231, -1e+30
      %297 = vst.msk [vmem:[#allocation5 + $0x58] sm:$0xff] %vm231, -1e+30
      %298 = vst.msk [vmem:[#allocation5 + $0x60] sm:$0xff] %vm231, -1e+30
      %299 = vst.msk [vmem:[#allocation5 + $0x68] sm:$0xff] %vm231, -1e+30
      %300 = vst.msk [vmem:[#allocation6] sm:$0xff] %vm231, 0.0
      %301 = vst.msk [vmem:[#allocation6 + $0x8] sm:$0xff] %vm231, 0.0
      %302 = vst.msk [vmem:[#allocation6 + $0x10] sm:$0xff] %vm231, 0.0
      %303 = vst.msk [vmem:[#allocation6 + $0x18] sm:$0xff] %vm231, 0.0
      %304 = vst.msk [vmem:[#allocation6 + $0x20] sm:$0xff] %vm231, 0.0
      %305 = vst.msk [vmem:[#allocation6 + $0x28] sm:$0xff] %vm231, 0.0
      %306 = vst.msk [vmem:[#allocation6 + $0x30] sm:$0xff] %vm231, 0.0
      %307 = vst.msk [vmem:[#allocation6 + $0x38] sm:$0xff] %vm231, 0.0
      %308 = vst.msk [vmem:[#allocation6 + $0x40] sm:$0xff] %vm231, 0.0
      %309 = vst.msk [vmem:[#allocation6 + $0x48] sm:$0xff] %vm231, 0.0
      %310 = vst.msk [vmem:[#allocation6 + $0x50] sm:$0xff] %vm231, 0.0
      %311 = vst.msk [vmem:[#allocation6 + $0x58] sm:$0xff] %vm231, 0.0
      %312 = vst.msk [vmem:[#allocation6 + $0x60] sm:$0xff] %vm231, 0.0
      %313 = vst.msk [vmem:[#allocation6 + $0x68] sm:$0xff] %vm231, 0.0
      %314 = vst.msk [vmem:[#allocation7] sm:$0xff] %vm231, 0.0
      %315 = vst.msk [vmem:[#allocation7 + $0x8] sm:$0xff] %vm231, 0.0
      %316 = vst.msk [vmem:[#allocation7 + $0x10] sm:$0xff] %vm231, 0.0
      %317 = vst.msk [vmem:[#allocation7 + $0x18] sm:$0xff] %vm231, 0.0
      %318 = vst.msk [vmem:[#allocation7 + $0x20] sm:$0xff] %vm231, 0.0
      %319 = vst.msk [vmem:[#allocation7 + $0x28] sm:$0xff] %vm231, 0.0
      %320 = vst.msk [vmem:[#allocation7 + $0x30] sm:$0xff] %vm231, 0.0
      %321 = vst.msk [vmem:[#allocation7 + $0x38] sm:$0xff] %vm231, 0.0
      %322 = vst.msk [vmem:[#allocation7 + $0x40] sm:$0xff] %vm231, 0.0
      %323 = vst.msk [vmem:[#allocation7 + $0x48] sm:$0xff] %vm231, 0.0
      %324 = vst.msk [vmem:[#allocation7 + $0x50] sm:$0xff] %vm231, 0.0
      %325 = vst.msk [vmem:[#allocation7 + $0x58] sm:$0xff] %vm231, 0.0
      %326 = vst.msk [vmem:[#allocation7 + $0x60] sm:$0xff] %vm231, 0.0
      %327 = vst.msk [vmem:[#allocation7 + $0x68] sm:$0xff] %vm231, 0.0
      %328 = vst.msk [vmem:[#allocation8] sm:$0xff] %vm231, 0.0
      %329 = vst.msk [vmem:[#allocation8 + $0x8] sm:$0xff] %vm231, 0.0
      %330 = vst.msk [vmem:[#allocation8 + $0x10] sm:$0xff] %vm231, 0.0
      %331 = vst.msk [vmem:[#allocation8 + $0x18] sm:$0xff] %vm231, 0.0
      %332 = vst.msk [vmem:[#allocation8 + $0x20] sm:$0xff] %vm231, 0.0
      %333 = vst.msk [vmem:[#allocation8 + $0x28] sm:$0xff] %vm231, 0.0
      %334 = vst.msk [vmem:[#allocation8 + $0x30] sm:$0xff] %vm231, 0.0
      %335 = vst.msk [vmem:[#allocation8 + $0x38] sm:$0xff] %vm231, 0.0
      %336 = vst.msk [vmem:[#allocation8 + $0x40] sm:$0xff] %vm231, 0.0
      %337 = vst.msk [vmem:[#allocation8 + $0x48] sm:$0xff] %vm231, 0.0
      %338 = vst.msk [vmem:[#allocation8 + $0x50] sm:$0xff] %vm231, 0.0
      %339 = vst.msk [vmem:[#allocation8 + $0x58] sm:$0xff] %vm231, 0.0
      %340 = vst.msk [vmem:[#allocation8 + $0x60] sm:$0xff] %vm231, 0.0
      %341 = vst.msk [vmem:[#allocation8 + $0x68] sm:$0xff] %vm231, 0.0
      %342 = vst.msk [vmem:[#allocation9] sm:$0xff] %vm231, 0.0
      %343 = vst.msk [vmem:[#allocation9 + $0x8] sm:$0xff] %vm231, 0.0
      %344 = vst.msk [vmem:[#allocation9 + $0x10] sm:$0xff] %vm231, 0.0
      %345 = vst.msk [vmem:[#allocation9 + $0x18] sm:$0xff] %vm231, 0.0
      %346 = vst.msk [vmem:[#allocation9 + $0x20] sm:$0xff] %vm231, 0.0
      %347 = vst.msk [vmem:[#allocation9 + $0x28] sm:$0xff] %vm231, 0.0
      %348 = vst.msk [vmem:[#allocation9 + $0x30] sm:$0xff] %vm231, 0.0
      %349 = vst.msk [vmem:[#allocation9 + $0x38] sm:$0xff] %vm231, 0.0
      %350 = vst.msk [vmem:[#allocation9 + $0x40] sm:$0xff] %vm231, 0.0
      %351 = vst.msk [vmem:[#allocation9 + $0x48] sm:$0xff] %vm231, 0.0
      %352 = vst.msk [vmem:[#allocation9 + $0x50] sm:$0xff] %vm231, 0.0
      %353 = vst.msk [vmem:[#allocation9 + $0x58] sm:$0xff] %vm231, 0.0
      %354 = vst.msk [vmem:[#allocation9 + $0x60] sm:$0xff] %vm231, 0.0
      %355 = vst.msk [vmem:[#allocation9 + $0x68] sm:$0xff] %vm231, 0.0
    $region29: #{tpu_custom_call.1} parent=1 // pred_fallthru
      _
    // Predicated region
    $region30: #{tpu_custom_call.1} parent=1 // pred_check
      %p356 = pneg %p268
    $region31: #{tpu_custom_call.1} parent=1 // pred_check_branch
      %358 = sbr.rel (%p356) target = $region33
    $region32: #{tpu_custom_call.1} parent=1 // pred_region
      %v359 = vld [vmem:[#allocation10] sm:$0xff]
      %v360 = vld [vmem:[#allocation10 + $0x8] sm:$0xff]
      %v361 = vld [vmem:[#allocation10 + $0x10] sm:$0xff]
      %v362 = vld [vmem:[#allocation10 + $0x18] sm:$0xff]
      %v363 = vld [vmem:[#allocation10 + $0x20] sm:$0xff]
      %v364 = vld [vmem:[#allocation10 + $0x28] sm:$0xff]
      %v365 = vld [vmem:[#allocation10 + $0x30] sm:$0xff]
      %v366 = vld [vmem:[#allocation10 + $0x38] sm:$0xff]
      %v367 = vld [vmem:[#allocation10 + $0x40] sm:$0xff]
      %v368 = vld [vmem:[#allocation10 + $0x48] sm:$0xff]
      %v369 = vld [vmem:[#allocation10 + $0x50] sm:$0xff]
      %v370 = vld [vmem:[#allocation10 + $0x58] sm:$0xff]
      %v371 = vld [vmem:[#allocation10 + $0x60] sm:$0xff]
      %v372 = vld [vmem:[#allocation10 + $0x68] sm:$0xff]
      %v373 = vld [vmem:[#allocation10 + $0x70] sm:$0xff]
      %v374 = vld [vmem:[#allocation10 + $0x78] sm:$0xff]
      %v375 = vld [vmem:[#allocation10 + $0x80] sm:$0xff]
      %v376 = vld [vmem:[#allocation10 + $0x88] sm:$0xff]
      %v377 = vld [vmem:[#allocation10 + $0x90] sm:$0xff]
      %v378 = vld [vmem:[#allocation10 + $0x98] sm:$0xff]
      %v379 = vld [vmem:[#allocation10 + $0xa0] sm:$0xff]
      %v380 = vld [vmem:[#allocation10 + $0xa8] sm:$0xff]
      %v381 = vld [vmem:[#allocation10 + $0xb0] sm:$0xff]
      %v382 = vld [vmem:[#allocation10 + $0xb8] sm:$0xff]
      %v383 = vld [vmem:[#allocation10 + $0xc0] sm:$0xff]
      %v384 = vld [vmem:[#allocation10 + $0xc8] sm:$0xff]
      %v385 = vld [vmem:[#allocation10 + $0xd0] sm:$0xff]
      %v386 = vld [vmem:[#allocation10 + $0xd8] sm:$0xff]
      %v387 = vld [vmem:[#allocation10 + $0xe0] sm:$0xff]
      %v388 = vld [vmem:[#allocation10 + $0xe8] sm:$0xff]
      %v389 = vld [vmem:[#allocation10 + $0xf0] sm:$0xff]
      %v390 = vld [vmem:[#allocation10 + $0xf8] sm:$0xff]
      %v391 = vld [vmem:[#allocation10 + $0x100] sm:$0xff]
      %v392 = vld [vmem:[#allocation10 + $0x108] sm:$0xff]
      %v393 = vld [vmem:[#allocation10 + $0x110] sm:$0xff]
      %v394 = vld [vmem:[#allocation10 + $0x118] sm:$0xff]
      %v395 = vld [vmem:[#allocation10 + $0x120] sm:$0xff]
      %v396 = vld [vmem:[#allocation10 + $0x128] sm:$0xff]
      %v397 = vld [vmem:[#allocation10 + $0x130] sm:$0xff]
      %v398 = vld [vmem:[#allocation10 + $0x138] sm:$0xff]
      %v399 = vld [vmem:[#allocation10 + $0x140] sm:$0xff]
      %v400 = vld [vmem:[#allocation10 + $0x148] sm:$0xff]
      %v401 = vld [vmem:[#allocation10 + $0x150] sm:$0xff]
      %v402 = vld [vmem:[#allocation10 + $0x158] sm:$0xff]
      %v403 = vld [vmem:[#allocation10 + $0x160] sm:$0xff]
      %v404 = vld [vmem:[#allocation10 + $0x168] sm:$0xff]
      %v405 = vld [vmem:[#allocation10 + $0x170] sm:$0xff]
      %v406 = vld [vmem:[#allocation10 + $0x178] sm:$0xff]
      %v407 = vld [vmem:[#allocation10 + $0x180] sm:$0xff]
      %v408 = vld [vmem:[#allocation10 + $0x188] sm:$0xff]
      %v409 = vld [vmem:[#allocation10 + $0x190] sm:$0xff]
      %v410 = vld [vmem:[#allocation10 + $0x198] sm:$0xff]
      %v411 = vld [vmem:[#allocation10 + $0x1a0] sm:$0xff]
      %v412 = vld [vmem:[#allocation10 + $0x1a8] sm:$0xff]
      %v413 = vld [vmem:[#allocation10 + $0x1b0] sm:$0xff]
      %v414 = vld [vmem:[#allocation10 + $0x1b8] sm:$0xff]
      %v415 = vld [vmem:[#allocation13] sm:$0xff]
      %v416 = vld [vmem:[#allocation13 + $0x8] sm:$0xff]
      %v417 = vld [vmem:[#allocation13 + $0x10] sm:$0xff]
      %v418 = vld [vmem:[#allocation13 + $0x18] sm:$0xff]
      %v419 = vld [vmem:[#allocation13 + $0x20] sm:$0xff]
      %v420 = vld [vmem:[#allocation13 + $0x28] sm:$0xff]
      %v421 = vld [vmem:[#allocation13 + $0x30] sm:$0xff]
      %v422 = vld [vmem:[#allocation13 + $0x38] sm:$0xff]
      %v423 = vld [vmem:[#allocation13 + $0x40] sm:$0xff]
      %v424 = vld [vmem:[#allocation13 + $0x48] sm:$0xff]
      %v425 = vld [vmem:[#allocation13 + $0x50] sm:$0xff]
      %v426 = vld [vmem:[#allocation13 + $0x58] sm:$0xff]
      %v427 = vld [vmem:[#allocation13 + $0x60] sm:$0xff]
      %v428 = vld [vmem:[#allocation13 + $0x68] sm:$0xff]
      %v429 = vld [vmem:[#allocation13 + $0x70] sm:$0xff]
      %v430 = vld [vmem:[#allocation13 + $0x78] sm:$0xff]
      %v431 = vld [vmem:[#allocation13 + $0x80] sm:$0xff]
      %v432 = vld [vmem:[#allocation13 + $0x88] sm:$0xff]
      %v433 = vld [vmem:[#allocation13 + $0x90] sm:$0xff]
      %v434 = vld [vmem:[#allocation13 + $0x98] sm:$0xff]
      %v435 = vld [vmem:[#allocation13 + $0xa0] sm:$0xff]
      %v436 = vld [vmem:[#allocation13 + $0xa8] sm:$0xff]
      %v437 = vld [vmem:[#allocation13 + $0xb0] sm:$0xff]
      %v438 = vld [vmem:[#allocation13 + $0xb8] sm:$0xff]
      %v439 = vld [vmem:[#allocation13 + $0xc0] sm:$0xff]
      %v440 = vld [vmem:[#allocation13 + $0xc8] sm:$0xff]
      %v441 = vld [vmem:[#allocation13 + $0xd0] sm:$0xff]
      %v442 = vld [vmem:[#allocation13 + $0xd8] sm:$0xff]
      %v443 = vld [vmem:[#allocation13 + $0xe0] sm:$0xff]
      %v444 = vld [vmem:[#allocation13 + $0xe8] sm:$0xff]
      %v445 = vld [vmem:[#allocation13 + $0xf0] sm:$0xff]
      %v446 = vld [vmem:[#allocation13 + $0xf8] sm:$0xff]
      %v447 = vld [vmem:[#allocation13 + $0x100] sm:$0xff]
      %v448 = vld [vmem:[#allocation13 + $0x108] sm:$0xff]
      %v449 = vld [vmem:[#allocation13 + $0x110] sm:$0xff]
      %v450 = vld [vmem:[#allocation13 + $0x118] sm:$0xff]
      %v451 = vld [vmem:[#allocation13 + $0x120] sm:$0xff]
      %v452 = vld [vmem:[#allocation13 + $0x128] sm:$0xff]
      %v453 = vld [vmem:[#allocation13 + $0x130] sm:$0xff]
      %v454 = vld [vmem:[#allocation13 + $0x138] sm:$0xff]
      %v455 = vld [vmem:[#allocation13 + $0x140] sm:$0xff]
      %v456 = vld [vmem:[#allocation13 + $0x148] sm:$0xff]
      %v457 = vld [vmem:[#allocation13 + $0x150] sm:$0xff]
      %v458 = vld [vmem:[#allocation13 + $0x158] sm:$0xff]
      %v459 = vld [vmem:[#allocation13 + $0x160] sm:$0xff]
      %v460 = vld [vmem:[#allocation13 + $0x168] sm:$0xff]
      %v461 = vld [vmem:[#allocation13 + $0x170] sm:$0xff]
      %v462 = vld [vmem:[#allocation13 + $0x178] sm:$0xff]
      %v463 = vld [vmem:[#allocation13 + $0x180] sm:$0xff]
      %v464 = vld [vmem:[#allocation13 + $0x188] sm:$0xff]
      %v465 = vld [vmem:[#allocation13 + $0x190] sm:$0xff]
      %v466 = vld [vmem:[#allocation13 + $0x198] sm:$0xff]
      %v467 = vld [vmem:[#allocation13 + $0x1a0] sm:$0xff]
      %v468 = vld [vmem:[#allocation13 + $0x1a8] sm:$0xff]
      %v469 = vld [vmem:[#allocation13 + $0x1b0] sm:$0xff]
      %v470 = vld [vmem:[#allocation13 + $0x1b8] sm:$0xff]
      %v471 = vsub.f32 %v415, %v359
      %v472 = vsub.f32 %v416, %v360
      %v473 = vsub.f32 %v417, %v361
      %v474 = vsub.f32 %v418, %v362
      %v475 = vsub.f32 %v419, %v363
      %v476 = vsub.f32 %v420, %v364
      %v477 = vsub.f32 %v421, %v365
      %v478 = vsub.f32 %v422, %v366
      %v479 = vsub.f32 %v423, %v367
      %v480 = vsub.f32 %v424, %v368
      %v481 = vsub.f32 %v425, %v369
      %v482 = vsub.f32 %v426, %v370
      %v483 = vsub.f32 %v427, %v371
      %v484 = vsub.f32 %v428, %v372
      %v485 = vsub.f32 %v429, %v373
      %v486 = vsub.f32 %v430, %v374
      %v487 = vsub.f32 %v431, %v375
      %v488 = vsub.f32 %v432, %v376
      %v489 = vsub.f32 %v433, %v377
      %v490 = vsub.f32 %v434, %v378
      %v491 = vsub.f32 %v435, %v379
      %v492 = vsub.f32 %v436, %v380
      %v493 = vsub.f32 %v437, %v381
      %v494 = vsub.f32 %v438, %v382
      %v495 = vsub.f32 %v439, %v383
      %v496 = vsub.f32 %v440, %v384
      %v497 = vsub.f32 %v441, %v385
      %v498 = vsub.f32 %v442, %v386
      %v499 = vsub.f32 %v443, %v387
      %v500 = vsub.f32 %v444, %v388
      %v501 = vsub.f32 %v445, %v389
      %v502 = vsub.f32 %v446, %v390
      %v503 = vsub.f32 %v447, %v391
      %v504 = vsub.f32 %v448, %v392
      %v505 = vsub.f32 %v449, %v393
      %v506 = vsub.f32 %v450, %v394
      %v507 = vsub.f32 %v451, %v395
      %v508 = vsub.f32 %v452, %v396
      %v509 = vsub.f32 %v453, %v397
      %v510 = vsub.f32 %v454, %v398
      %v511 = vsub.f32 %v455, %v399
      %v512 = vsub.f32 %v456, %v400
      %v513 = vsub.f32 %v457, %v401
      %v514 = vsub.f32 %v458, %v402
      %v515 = vsub.f32 %v459, %v403
      %v516 = vsub.f32 %v460, %v404
      %v517 = vsub.f32 %v461, %v405
      %v518 = vsub.f32 %v462, %v406
      %v519 = vsub.f32 %v463, %v407
      %v520 = vsub.f32 %v464, %v408
      %v521 = vsub.f32 %v465, %v409
      %v522 = vsub.f32 %v466, %v410
      %v523 = vsub.f32 %v467, %v411
      %v524 = vsub.f32 %v468, %v412
      %v525 = vsub.f32 %v469, %v413
      %v526 = vsub.f32 %v470, %v414
      %v527 = vand.u32 2147483647, %v471
      %v528 = vand.u32 2147483647, %v472
      %v529 = vand.u32 2147483647, %v473
      %v530 = vand.u32 2147483647, %v474
      %v531 = vand.u32 2147483647, %v475
      %v532 = vand.u32 2147483647, %v476
      %v533 = vand.u32 2147483647, %v477
      %v534 = vand.u32 2147483647, %v478
      %v535 = vand.u32 2147483647, %v479
      %v536 = vand.u32 2147483647, %v480
      %v537 = vand.u32 2147483647, %v481
      %v538 = vand.u32 2147483647, %v482
      %v539 = vand.u32 2147483647, %v483
      %v540 = vand.u32 2147483647, %v484
      %v541 = vand.u32 2147483647, %v485
      %v542 = vand.u32 2147483647, %v486
      %v543 = vand.u32 2147483647, %v487
      %v544 = vand.u32 2147483647, %v488
      %v545 = vand.u32 2147483647, %v489
      %v546 = vand.u32 2147483647, %v490
      %v547 = vand.u32 2147483647, %v491
      %v548 = vand.u32 2147483647, %v492
      %v549 = vand.u32 2147483647, %v493
      %v550 = vand.u32 2147483647, %v494
      %v551 = vand.u32 2147483647, %v495
      %v552 = vand.u32 2147483647, %v496
      %v553 = vand.u32 2147483647, %v497
      %v554 = vand.u32 2147483647, %v498
      %v555 = vand.u32 2147483647, %v499
      %v556 = vand.u32 2147483647, %v500
      %v557 = vand.u32 2147483647, %v501
      %v558 = vand.u32 2147483647, %v502
      %v559 = vand.u32 2147483647, %v503
      %v560 = vand.u32 2147483647, %v504
      %v561 = vand.u32 2147483647, %v505
      %v562 = vand.u32 2147483647, %v506
      %v563 = vand.u32 2147483647, %v507
      %v564 = vand.u32 2147483647, %v508
      %v565 = vand.u32 2147483647, %v509
      %v566 = vand.u32 2147483647, %v510
      %v567 = vand.u32 2147483647, %v511
      %v568 = vand.u32 2147483647, %v512
      %v569 = vand.u32 2147483647, %v513
      %v570 = vand.u32 2147483647, %v514
      %v571 = vand.u32 2147483647, %v515
      %v572 = vand.u32 2147483647, %v516
      %v573 = vand.u32 2147483647, %v517
      %v574 = vand.u32 2147483647, %v518
      %v575 = vand.u32 2147483647, %v519
      %v576 = vand.u32 2147483647, %v520
      %v577 = vand.u32 2147483647, %v521
      %v578 = vand.u32 2147483647, %v522
      %v579 = vand.u32 2147483647, %v523
      %v580 = vand.u32 2147483647, %v524
      %v581 = vand.u32 2147483647, %v525
      %v582 = vand.u32 2147483647, %v526
      %vm583 = vcmp.lt.f32.partialorder %v527, inf
      %vm584 = vcmp.lt.f32.partialorder %v528, inf
      %vm585 = vcmp.lt.f32.partialorder %v529, inf
      %vm586 = vcmp.lt.f32.partialorder %v530, inf
      %vm587 = vcmp.lt.f32.partialorder %v531, inf
      %vm588 = vcmp.lt.f32.partialorder %v532, inf
      %vm589 = vcmp.lt.f32.partialorder %v533, inf
      %vm590 = vcmp.lt.f32.partialorder %v534, inf
      %vm591 = vcmp.lt.f32.partialorder %v535, inf
      %vm592 = vcmp.lt.f32.partialorder %v536, inf
      %vm593 = vcmp.lt.f32.partialorder %v537, inf
      %vm594 = vcmp.lt.f32.partialorder %v538, inf
      %vm595 = vcmp.lt.f32.partialorder %v539, inf
      %vm596 = vcmp.lt.f32.partialorder %v540, inf
      %vm597 = vcmp.lt.f32.partialorder %v541, inf
      %vm598 = vcmp.lt.f32.partialorder %v542, inf
      %vm599 = vcmp.lt.f32.partialorder %v543, inf
      %vm600 = vcmp.lt.f32.partialorder %v544, inf
      %vm601 = vcmp.lt.f32.partialorder %v545, inf
      %vm602 = vcmp.lt.f32.partialorder %v546, inf
      %vm603 = vcmp.lt.f32.partialorder %v547, inf
      %vm604 = vcmp.lt.f32.partialorder %v548, inf
      %vm605 = vcmp.lt.f32.partialorder %v549, inf
      %vm606 = vcmp.lt.f32.partialorder %v550, inf
      %vm607 = vcmp.lt.f32.partialorder %v551, inf
      %vm608 = vcmp.lt.f32.partialorder %v552, inf
      %vm609 = vcmp.lt.f32.partialorder %v553, inf
      %vm610 = vcmp.lt.f32.partialorder %v554, inf
      %vm611 = vcmp.lt.f32.partialorder %v555, inf
      %vm612 = vcmp.lt.f32.partialorder %v556, inf
      %vm613 = vcmp.lt.f32.partialorder %v557, inf
      %vm614 = vcmp.lt.f32.partialorder %v558, inf
      %vm615 = vcmp.lt.f32.partialorder %v559, inf
      %vm616 = vcmp.lt.f32.partialorder %v560, inf
      %vm617 = vcmp.lt.f32.partialorder %v561, inf
      %vm618 = vcmp.lt.f32.partialorder %v562, inf
      %vm619 = vcmp.lt.f32.partialorder %v563, inf
      %vm620 = vcmp.lt.f32.partialorder %v564, inf
      %vm621 = vcmp.lt.f32.partialorder %v565, inf
      %vm622 = vcmp.lt.f32.partialorder %v566, inf
      %vm623 = vcmp.lt.f32.partialorder %v567, inf
      %vm624 = vcmp.lt.f32.partialorder %v568, inf
      %vm625 = vcmp.lt.f32.partialorder %v569, inf
      %vm626 = vcmp.lt.f32.partialorder %v570, inf
      %vm627 = vcmp.lt.f32.partialorder %v571, inf
      %vm628 = vcmp.lt.f32.partialorder %v572, inf
      %vm629 = vcmp.lt.f32.partialorder %v573, inf
      %vm630 = vcmp.lt.f32.partialorder %v574, inf
      %vm631 = vcmp.lt.f32.partialorder %v575, inf
      %vm632 = vcmp.lt.f32.partialorder %v576, inf
      %vm633 = vcmp.lt.f32.partialorder %v577, inf
      %vm634 = vcmp.lt.f32.partialorder %v578, inf
      %vm635 = vcmp.lt.f32.partialorder %v579, inf
      %vm636 = vcmp.lt.f32.partialorder %v580, inf
      %vm637 = vcmp.lt.f32.partialorder %v581, inf
      %vm638 = vcmp.lt.f32.partialorder %v582, inf
      %v639 = vld [vmem:[#allocation4] sm:$0xff]
      %v640 = vld [vmem:[#allocation4 + $0x8] sm:$0xff]
      %v641 = vld [vmem:[#allocation4 + $0x10] sm:$0xff]
      %v642 = vld [vmem:[#allocation4 + $0x18] sm:$0xff]
      %v643 = vld [vmem:[#allocation4 + $0x20] sm:$0xff]
      %v644 = vld [vmem:[#allocation4 + $0x28] sm:$0xff]
      %v645 = vld [vmem:[#allocation4 + $0x30] sm:$0xff]
      %v646 = vld [vmem:[#allocation4 + $0x38] sm:$0xff]
      %v647 = vld [vmem:[#allocation4 + $0x40] sm:$0xff]
      %v648 = vld [vmem:[#allocation4 + $0x48] sm:$0xff]
      %v649 = vld [vmem:[#allocation4 + $0x50] sm:$0xff]
      %v650 = vld [vmem:[#allocation4 + $0x58] sm:$0xff]
      %v651 = vld [vmem:[#allocation4 + $0x60] sm:$0xff]
      %v652 = vld [vmem:[#allocation4 + $0x68] sm:$0xff]
      %v653 = vmax.f32 %v359, %v360
      %v654 = vmax.f32 %v653, %v361
      %v655 = vmax.f32 %v654, %v362
      %656 = vmax.xlane.f32.xlu0 %v655
      %v657 = vpop.xlane.xlu0 %656
      %v658 = vmax.f32 %v363, %v364
      %v659 = vmax.f32 %v658, %v365
      %v660 = vmax.f32 %v659, %v366
      %661 = vmax.xlane.f32.xlu0 %v660
      %v662 = vpop.xlane.xlu0 %661
      %v663 = vmax.f32 %v367, %v368
      %v664 = vmax.f32 %v663, %v369
      %v665 = vmax.f32 %v664, %v370
      %666 = vmax.xlane.f32.xlu0 %v665
      %v667 = vpop.xlane.xlu0 %666
      %v668 = vmax.f32 %v371, %v372
      %v669 = vmax.f32 %v668, %v373
      %v670 = vmax.f32 %v669, %v374
      %671 = vmax.xlane.f32.xlu0 %v670
      %v672 = vpop.xlane.xlu0 %671
      %v673 = vmax.f32 %v375, %v376
      %v674 = vmax.f32 %v673, %v377
      %v675 = vmax.f32 %v674, %v378
      %676 = vmax.xlane.f32.xlu0 %v675
      %v677 = vpop.xlane.xlu0 %676
      %v678 = vmax.f32 %v379, %v380
      %v679 = vmax.f32 %v678, %v381
      %v680 = vmax.f32 %v679, %v382
      %681 = vmax.xlane.f32.xlu0 %v680
      %v682 = vpop.xlane.xlu0 %681
      %v683 = vmax.f32 %v383, %v384
      %v684 = vmax.f32 %v683, %v385
      %v685 = vmax.f32 %v684, %v386
      %686 = vmax.xlane.f32.xlu0 %v685
      %v687 = vpop.xlane.xlu0 %686
      %v688 = vmax.f32 %v387, %v388
      %v689 = vmax.f32 %v688, %v389
      %v690 = vmax.f32 %v689, %v390
      %691 = vmax.xlane.f32.xlu0 %v690
      %v692 = vpop.xlane.xlu0 %691
      %v693 = vmax.f32 %v391, %v392
      %v694 = vmax.f32 %v693, %v393
      %v695 = vmax.f32 %v694, %v394
      %696 = vmax.xlane.f32.xlu0 %v695
      %v697 = vpop.xlane.xlu0 %696
      %v698 = vmax.f32 %v395, %v396
      %v699 = vmax.f32 %v698, %v397
      %v700 = vmax.f32 %v699, %v398
      %701 = vmax.xlane.f32.xlu0 %v700
      %v702 = vpop.xlane.xlu0 %701
      %v703 = vmax.f32 %v399, %v400
      %v704 = vmax.f32 %v703, %v401
      %v705 = vmax.f32 %v704, %v402
      %706 = vmax.xlane.f32.xlu0 %v705
      %v707 = vpop.xlane.xlu0 %706
      %v708 = vmax.f32 %v403, %v404
      %v709 = vmax.f32 %v708, %v405
      %v710 = vmax.f32 %v709, %v406
      %711 = vmax.xlane.f32.xlu0 %v710
      %v712 = vpop.xlane.xlu0 %711
      %v713 = vmax.f32 %v407, %v408
      %v714 = vmax.f32 %v713, %v409
      %v715 = vmax.f32 %v714, %v410
      %716 = vmax.xlane.f32.xlu0 %v715
      %v717 = vpop.xlane.xlu0 %716
      %v718 = vmax.f32 %v411, %v412
      %v719 = vmax.f32 %v718, %v413
      %v720 = vmax.f32 %v719, %v414
      %721 = vmax.xlane.f32.xlu0 %v720
      %v722 = vpop.xlane.xlu0 %721
      %v723 = vmax.f32 %v639, %v657
      %v724 = vmax.f32 %v640, %v662
      %v725 = vmax.f32 %v641, %v667
      %v726 = vmax.f32 %v642, %v672
      %v727 = vmax.f32 %v643, %v677
      %v728 = vmax.f32 %v644, %v682
      %v729 = vmax.f32 %v645, %v687
      %v730 = vmax.f32 %v646, %v692
      %v731 = vmax.f32 %v647, %v697
      %v732 = vmax.f32 %v648, %v702
      %v733 = vmax.f32 %v649, %v707
      %v734 = vmax.f32 %v650, %v712
      %v735 = vmax.f32 %v651, %v717
      %v736 = vmax.f32 %v652, %v722
      %v737 = vld [vmem:[#allocation5] sm:$0xff]
      %v738 = vld [vmem:[#allocation5 + $0x8] sm:$0xff]
      %v739 = vld [vmem:[#allocation5 + $0x10] sm:$0xff]
      %v740 = vld [vmem:[#allocation5 + $0x18] sm:$0xff]
      %v741 = vld [vmem:[#allocation5 + $0x20] sm:$0xff]
      %v742 = vld [vmem:[#allocation5 + $0x28] sm:$0xff]
      %v743 = vld [vmem:[#allocation5 + $0x30] sm:$0xff]
      %v744 = vld [vmem:[#allocation5 + $0x38] sm:$0xff]
      %v745 = vld [vmem:[#allocation5 + $0x40] sm:$0xff]
      %v746 = vld [vmem:[#allocation5 + $0x48] sm:$0xff]
      %v747 = vld [vmem:[#allocation5 + $0x50] sm:$0xff]
      %v748 = vld [vmem:[#allocation5 + $0x58] sm:$0xff]
      %v749 = vld [vmem:[#allocation5 + $0x60] sm:$0xff]
      %v750 = vld [vmem:[#allocation5 + $0x68] sm:$0xff]
      %v751 = vmax.f32 %v415, %v416
      %v752 = vmax.f32 %v751, %v417
      %v753 = vmax.f32 %v752, %v418
      %754 = vmax.xlane.f32.xlu0 %v753
      %v755 = vpop.xlane.xlu0 %754
      %v756 = vmax.f32 %v419, %v420
      %v757 = vmax.f32 %v756, %v421
      %v758 = vmax.f32 %v757, %v422
      %759 = vmax.xlane.f32.xlu0 %v758
      %v760 = vpop.xlane.xlu0 %759
      %v761 = vmax.f32 %v423, %v424
      %v762 = vmax.f32 %v761, %v425
      %v763 = vmax.f32 %v762, %v426
      %764 = vmax.xlane.f32.xlu0 %v763
      %v765 = vpop.xlane.xlu0 %764
      %v766 = vmax.f32 %v427, %v428
      %v767 = vmax.f32 %v766, %v429
      %v768 = vmax.f32 %v767, %v430
      %769 = vmax.xlane.f32.xlu0 %v768
      %v770 = vpop.xlane.xlu0 %769
      %v771 = vmax.f32 %v431, %v432
      %v772 = vmax.f32 %v771, %v433
      %v773 = vmax.f32 %v772, %v434
      %774 = vmax.xlane.f32.xlu0 %v773
      %v775 = vpop.xlane.xlu0 %774
      %v776 = vmax.f32 %v435, %v436
      %v777 = vmax.f32 %v776, %v437
      %v778 = vmax.f32 %v777, %v438
      %779 = vmax.xlane.f32.xlu0 %v778
      %v780 = vpop.xlane.xlu0 %779
      %v781 = vmax.f32 %v439, %v440
      %v782 = vmax.f32 %v781, %v441
      %v783 = vmax.f32 %v782, %v442
      %784 = vmax.xlane.f32.xlu0 %v783
      %v785 = vpop.xlane.xlu0 %784
      %v786 = vmax.f32 %v443, %v444
      %v787 = vmax.f32 %v786, %v445
      %v788 = vmax.f32 %v787, %v446
      %789 = vmax.xlane.f32.xlu0 %v788
      %v790 = vpop.xlane.xlu0 %789
      %v791 = vmax.f32 %v447, %v448
      %v792 = vmax.f32 %v791, %v449
      %v793 = vmax.f32 %v792, %v450
      %794 = vmax.xlane.f32.xlu0 %v793
      %v795 = vpop.xlane.xlu0 %794
      %v796 = vmax.f32 %v451, %v452
      %v797 = vmax.f32 %v796, %v453
      %v798 = vmax.f32 %v797, %v454
      %799 = vmax.xlane.f32.xlu0 %v798
      %v800 = vpop.xlane.xlu0 %799
      %v801 = vmax.f32 %v455, %v456
      %v802 = vmax.f32 %v801, %v457
      %v803 = vmax.f32 %v802, %v458
      %804 = vmax.xlane.f32.xlu0 %v803
      %v805 = vpop.xlane.xlu0 %804
      %v806 = vmax.f32 %v459, %v460
      %v807 = vmax.f32 %v806, %v461
      %v808 = vmax.f32 %v807, %v462
      %809 = vmax.xlane.f32.xlu0 %v808
      %v810 = vpop.xlane.xlu0 %809
      %v811 = vmax.f32 %v463, %v464
      %v812 = vmax.f32 %v811, %v465
      %v813 = vmax.f32 %v812, %v466
      %814 = vmax.xlane.f32.xlu0 %v813
      %v815 = vpop.xlane.xlu0 %814
      %v816 = vmax.f32 %v467, %v468
      %v817 = vmax.f32 %v816, %v469
      %v818 = vmax.f32 %v817, %v470
      %819 = vmax.xlane.f32.xlu0 %v818
      %v820 = vpop.xlane.xlu0 %819
      %v821 = vmax.f32 %v737, %v755
      %v822 = vmax.f32 %v738, %v760
      %v823 = vmax.f32 %v739, %v765
      %v824 = vmax.f32 %v740, %v770
      %v825 = vmax.f32 %v741, %v775
      %v826 = vmax.f32 %v742, %v780
      %v827 = vmax.f32 %v743, %v785
      %v828 = vmax.f32 %v744, %v790
      %v829 = vmax.f32 %v745, %v795
      %v830 = vmax.f32 %v746, %v800
      %v831 = vmax.f32 %v747, %v805
      %v832 = vmax.f32 %v748, %v810
      %v833 = vmax.f32 %v749, %v815
      %v834 = vmax.f32 %v750, %v820
      %v835 = vsub.f32 %v639, %v723
      %v836 = vsub.f32 %v640, %v724
      %v837 = vsub.f32 %v641, %v725
      %v838 = vsub.f32 %v642, %v726
      %v839 = vsub.f32 %v643, %v727
      %v840 = vsub.f32 %v644, %v728
      %v841 = vsub.f32 %v645, %v729
      %v842 = vsub.f32 %v646, %v730
      %v843 = vsub.f32 %v647, %v731
      %v844 = vsub.f32 %v648, %v732
      %v845 = vsub.f32 %v649, %v733
      %v846 = vsub.f32 %v650, %v734
      %v847 = vsub.f32 %v651, %v735
      %v848 = vsub.f32 %v652, %v736
      %v849 = vmul.f32 %v835, 1.442695
      %v850 = vpow.pop %v849
      %v851 = vmul.f32 %v836, 1.442695
      %v852 = vpow.pop %v851
      %v853 = vmul.f32 %v837, 1.442695
      %v854 = vpow.pop %v853
      %v855 = vmul.f32 %v838, 1.442695
      %v856 = vpow.pop %v855
      %v857 = vmul.f32 %v839, 1.442695
      %v858 = vpow.pop %v857
      %v859 = vmul.f32 %v840, 1.442695
      %v860 = vpow.pop %v859
      %v861 = vmul.f32 %v841, 1.442695
      %v862 = vpow.pop %v861
      %v863 = vmul.f32 %v842, 1.442695
      %v864 = vpow.pop %v863
      %v865 = vmul.f32 %v843, 1.442695
      %v866 = vpow.pop %v865
      %v867 = vmul.f32 %v844, 1.442695
      %v868 = vpow.pop %v867
      %v869 = vmul.f32 %v845, 1.442695
      %v870 = vpow.pop %v869
      %v871 = vmul.f32 %v846, 1.442695
      %v872 = vpow.pop %v871
      %v873 = vmul.f32 %v847, 1.442695
      %v874 = vpow.pop %v873
      %v875 = vmul.f32 %v848, 1.442695
      %v876 = vpow.pop %v875
      %v877 = vsub.f32 %v737, %v821
      %v878 = vsub.f32 %v738, %v822
      %v879 = vsub.f32 %v739, %v823
      %v880 = vsub.f32 %v740, %v824
      %v881 = vsub.f32 %v741, %v825
      %v882 = vsub.f32 %v742, %v826
      %v883 = vsub.f32 %v743, %v827
      %v884 = vsub.f32 %v744, %v828
      %v885 = vsub.f32 %v745, %v829
      %v886 = vsub.f32 %v746, %v830
      %v887 = vsub.f32 %v747, %v831
      %v888 = vsub.f32 %v748, %v832
      %v889 = vsub.f32 %v749, %v833
      %v890 = vsub.f32 %v750, %v834
      %v891 = vmul.f32 %v877, 1.442695
      %v892 = vpow.pop %v891
      %v893 = vmul.f32 %v878, 1.442695
      %v894 = vpow.pop %v893
      %v895 = vmul.f32 %v879, 1.442695
      %v896 = vpow.pop %v895
      %v897 = vmul.f32 %v880, 1.442695
      %v898 = vpow.pop %v897
      %v899 = vmul.f32 %v881, 1.442695
      %v900 = vpow.pop %v899
      %v901 = vmul.f32 %v882, 1.442695
      %v902 = vpow.pop %v901
      %v903 = vmul.f32 %v883, 1.442695
      %v904 = vpow.pop %v903
      %v905 = vmul.f32 %v884, 1.442695
      %v906 = vpow.pop %v905
      %v907 = vmul.f32 %v885, 1.442695
      %v908 = vpow.pop %v907
      %v909 = vmul.f32 %v886, 1.442695
      %v910 = vpow.pop %v909
      %v911 = vmul.f32 %v887, 1.442695
      %v912 = vpow.pop %v911
      %v913 = vmul.f32 %v888, 1.442695
      %v914 = vpow.pop %v913
      %v915 = vmul.f32 %v889, 1.442695
      %v916 = vpow.pop %v915
      %v917 = vmul.f32 %v890, 1.442695
      %v918 = vpow.pop %v917
      %920 = vset.pattern.permute.xlu0 0
      %921 = vperm.xlu0 %920, %v723
      %v922 = vpop.permute.xlu0 %921
      %925 = vset.pattern.permute.xlu0 0
      %926 = vperm.xlu0 %925, %v724
      %v927 = vpop.permute.xlu0 %926
      %930 = vset.pattern.permute.xlu0 0
      %931 = vperm.xlu0 %930, %v725
      %v932 = vpop.permute.xlu0 %931
      %935 = vset.pattern.permute.xlu0 0
      %936 = vperm.xlu0 %935, %v726
      %v937 = vpop.permute.xlu0 %936
      %940 = vset.pattern.permute.xlu0 0
      %941 = vperm.xlu0 %940, %v727
      %v942 = vpop.permute.xlu0 %941
      %945 = vset.pattern.permute.xlu0 0
      %946 = vperm.xlu0 %945, %v728
      %v947 = vpop.permute.xlu0 %946
      %950 = vset.pattern.permute.xlu0 0
      %951 = vperm.xlu0 %950, %v729
      %v952 = vpop.permute.xlu0 %951
      %955 = vset.pattern.permute.xlu0 0
      %956 = vperm.xlu0 %955, %v730
      %v957 = vpop.permute.xlu0 %956
      %960 = vset.pattern.permute.xlu0 0
      %961 = vperm.xlu0 %960, %v731
      %v962 = vpop.permute.xlu0 %961
      %965 = vset.pattern.permute.xlu0 0
      %966 = vperm.xlu0 %965, %v732
      %v967 = vpop.permute.xlu0 %966
      %970 = vset.pattern.permute.xlu0 0
      %971 = vperm.xlu0 %970, %v733
      %v972 = vpop.permute.xlu0 %971
      %975 = vset.pattern.permute.xlu0 0
      %976 = vperm.xlu0 %975, %v734
      %v977 = vpop.permute.xlu0 %976
      %980 = vset.pattern.permute.xlu0 0
      %981 = vperm.xlu0 %980, %v735
      %v982 = vpop.permute.xlu0 %981
      %985 = vset.pattern.permute.xlu0 0
      %986 = vperm.xlu0 %985, %v736
      %v987 = vpop.permute.xlu0 %986
      %v989 = vsub.f32 %v359, %v922
      %v990 = vsub.f32 %v360, %v922
      %v991 = vsub.f32 %v361, %v922
      %v992 = vsub.f32 %v362, %v922
      %v993 = vsub.f32 %v363, %v927
      %v994 = vsub.f32 %v364, %v927
      %v995 = vsub.f32 %v365, %v927
      %v996 = vsub.f32 %v366, %v927
      %v997 = vsub.f32 %v367, %v932
      %v998 = vsub.f32 %v368, %v932
      %v999 = vsub.f32 %v369, %v932
      %v1000 = vsub.f32 %v370, %v932
      %v1001 = vsub.f32 %v371, %v937
      %v1002 = vsub.f32 %v372, %v937
      %v1003 = vsub.f32 %v373, %v937
      %v1004 = vsub.f32 %v374, %v937
      %v1005 = vsub.f32 %v375, %v942
      %v1006 = vsub.f32 %v376, %v942
      %v1007 = vsub.f32 %v377, %v942
      %v1008 = vsub.f32 %v378, %v942
      %v1009 = vsub.f32 %v379, %v947
      %v1010 = vsub.f32 %v380, %v947
      %v1011 = vsub.f32 %v381, %v947
      %v1012 = vsub.f32 %v382, %v947
      %v1013 = vsub.f32 %v383, %v952
      %v1014 = vsub.f32 %v384, %v952
      %v1015 = vsub.f32 %v385, %v952
      %v1016 = vsub.f32 %v386, %v952
      %v1017 = vsub.f32 %v387, %v957
      %v1018 = vsub.f32 %v388, %v957
      %v1019 = vsub.f32 %v389, %v957
      %v1020 = vsub.f32 %v390, %v957
      %v1021 = vsub.f32 %v391, %v962
      %v1022 = vsub.f32 %v392, %v962
      %v1023 = vsub.f32 %v393, %v962
      %v1024 = vsub.f32 %v394, %v962
      %v1025 = vsub.f32 %v395, %v967
      %v1026 = vsub.f32 %v396, %v967
      %v1027 = vsub.f32 %v397, %v967
      %v1028 = vsub.f32 %v398, %v967
      %v1029 = vsub.f32 %v399, %v972
      %v1030 = vsub.f32 %v400, %v972
      %v1031 = vsub.f32 %v401, %v972
      %v1032 = vsub.f32 %v402, %v972
      %v1033 = vsub.f32 %v403, %v977
      %v1034 = vsub.f32 %v404, %v977
      %v1035 = vsub.f32 %v405, %v977
      %v1036 = vsub.f32 %v406, %v977
      %v1037 = vsub.f32 %v407, %v982
      %v1038 = vsub.f32 %v408, %v982
      %v1039 = vsub.f32 %v409, %v982
      %v1040 = vsub.f32 %v410, %v982
      %v1041 = vsub.f32 %v411, %v987
      %v1042 = vsub.f32 %v412, %v987
      %v1043 = vsub.f32 %v413, %v987
      %v1044 = vsub.f32 %v414, %v987
      %v1045 = vmul.f32 %v989, 1.442695
      %v1046 = vpow.pop %v1045
      %v1047 = vmul.f32 %v990, 1.442695
      %v1048 = vpow.pop %v1047
      %v1049 = vmul.f32 %v991, 1.442695
      %v1050 = vpow.pop %v1049
      %v1051 = vmul.f32 %v992, 1.442695
      %v1052 = vpow.pop %v1051
      %v1053 = vmul.f32 %v993, 1.442695
      %v1054 = vpow.pop %v1053
      %v1055 = vmul.f32 %v994, 1.442695
      %v1056 = vpow.pop %v1055
      %v1057 = vmul.f32 %v995, 1.442695
      %v1058 = vpow.pop %v1057
      %v1059 = vmul.f32 %v996, 1.442695
      %v1060 = vpow.pop %v1059
      %v1061 = vmul.f32 %v997, 1.442695
      %v1062 = vpow.pop %v1061
      %v1063 = vmul.f32 %v998, 1.442695
      %v1064 = vpow.pop %v1063
      %v1065 = vmul.f32 %v999, 1.442695
      %v1066 = vpow.pop %v1065
      %v1067 = vmul.f32 %v1000, 1.442695
      %v1068 = vpow.pop %v1067
      %v1069 = vmul.f32 %v1001, 1.442695
      %v1070 = vpow.pop %v1069
      %v1071 = vmul.f32 %v1002, 1.442695
      %v1072 = vpow.pop %v1071
      %v1073 = vmul.f32 %v1003, 1.442695
      %v1074 = vpow.pop %v1073
      %v1075 = vmul.f32 %v1004, 1.442695
      %v1076 = vpow.pop %v1075
      %v1077 = vmul.f32 %v1005, 1.442695
      %v1078 = vpow.pop %v1077
      %v1079 = vmul.f32 %v1006, 1.442695
      %v1080 = vpow.pop %v1079
      %v1081 = vmul.f32 %v1007, 1.442695
      %v1082 = vpow.pop %v1081
      %v1083 = vmul.f32 %v1008, 1.442695
      %v1084 = vpow.pop %v1083
      %v1085 = vmul.f32 %v1009, 1.442695
      %v1086 = vpow.pop %v1085
      %v1087 = vmul.f32 %v1010, 1.442695
      %v1088 = vpow.pop %v1087
      %v1089 = vmul.f32 %v1011, 1.442695
      %v1090 = vpow.pop %v1089
      %v1091 = vmul.f32 %v1012, 1.442695
      %v1092 = vpow.pop %v1091
      %v1093 = vmul.f32 %v1013, 1.442695
      %v1094 = vpow.pop %v1093
      %v1095 = vmul.f32 %v1014, 1.442695
      %v1096 = vpow.pop %v1095
      %v1097 = vmul.f32 %v1015, 1.442695
      %v1098 = vpow.pop %v1097
      %v1099 = vmul.f32 %v1016, 1.442695
      %v1100 = vpow.pop %v1099
      %v1101 = vmul.f32 %v1017, 1.442695
      %v1102 = vpow.pop %v1101
      %v1103 = vmul.f32 %v1018, 1.442695
      %v1104 = vpow.pop %v1103
      %v1105 = vmul.f32 %v1019, 1.442695
      %v1106 = vpow.pop %v1105
      %v1107 = vmul.f32 %v1020, 1.442695
      %v1108 = vpow.pop %v1107
      %v1109 = vmul.f32 %v1021, 1.442695
      %v1110 = vpow.pop %v1109
      %v1111 = vmul.f32 %v1022, 1.442695
      %v1112 = vpow.pop %v1111
      %v1113 = vmul.f32 %v1023, 1.442695
      %v1114 = vpow.pop %v1113
      %v1115 = vmul.f32 %v1024, 1.442695
      %v1116 = vpow.pop %v1115
      %v1117 = vmul.f32 %v1025, 1.442695
      %v1118 = vpow.pop %v1117
      %v1119 = vmul.f32 %v1026, 1.442695
      %v1120 = vpow.pop %v1119
      %v1121 = vmul.f32 %v1027, 1.442695
      %v1122 = vpow.pop %v1121
      %v1123 = vmul.f32 %v1028, 1.442695
      %v1124 = vpow.pop %v1123
      %v1125 = vmul.f32 %v1029, 1.442695
      %v1126 = vpow.pop %v1125
      %v1127 = vmul.f32 %v1030, 1.442695
      %v1128 = vpow.pop %v1127
      %v1129 = vmul.f32 %v1031, 1.442695
      %v1130 = vpow.pop %v1129
      %v1131 = vmul.f32 %v1032, 1.442695
      %v1132 = vpow.pop %v1131
      %v1133 = vmul.f32 %v1033, 1.442695
      %v1134 = vpow.pop %v1133
      %v1135 = vmul.f32 %v1034, 1.442695
      %v1136 = vpow.pop %v1135
      %v1137 = vmul.f32 %v1035, 1.442695
      %v1138 = vpow.pop %v1137
      %v1139 = vmul.f32 %v1036, 1.442695
      %v1140 = vpow.pop %v1139
      %v1141 = vmul.f32 %v1037, 1.442695
      %v1142 = vpow.pop %v1141
      %v1143 = vmul.f32 %v1038, 1.442695
      %v1144 = vpow.pop %v1143
      %v1145 = vmul.f32 %v1039, 1.442695
      %v1146 = vpow.pop %v1145
      %v1147 = vmul.f32 %v1040, 1.442695
      %v1148 = vpow.pop %v1147
      %v1149 = vmul.f32 %v1041, 1.442695
      %v1150 = vpow.pop %v1149
      %v1151 = vmul.f32 %v1042, 1.442695
      %v1152 = vpow.pop %v1151
      %v1153 = vmul.f32 %v1043, 1.442695
      %v1154 = vpow.pop %v1153
      %v1155 = vmul.f32 %v1044, 1.442695
      %v1156 = vpow.pop %v1155
      %v1157 = vld [vmem:[#allocation6] sm:$0xff]
      %v1158 = vld [vmem:[#allocation6 + $0x8] sm:$0xff]
      %v1159 = vld [vmem:[#allocation6 + $0x10] sm:$0xff]
      %v1160 = vld [vmem:[#allocation6 + $0x18] sm:$0xff]
      %v1161 = vld [vmem:[#allocation6 + $0x20] sm:$0xff]
      %v1162 = vld [vmem:[#allocation6 + $0x28] sm:$0xff]
      %v1163 = vld [vmem:[#allocation6 + $0x30] sm:$0xff]
      %v1164 = vld [vmem:[#allocation6 + $0x38] sm:$0xff]
      %v1165 = vld [vmem:[#allocation6 + $0x40] sm:$0xff]
      %v1166 = vld [vmem:[#allocation6 + $0x48] sm:$0xff]
      %v1167 = vld [vmem:[#allocation6 + $0x50] sm:$0xff]
      %v1168 = vld [vmem:[#allocation6 + $0x58] sm:$0xff]
      %v1169 = vld [vmem:[#allocation6 + $0x60] sm:$0xff]
      %v1170 = vld [vmem:[#allocation6 + $0x68] sm:$0xff]
      %v1171 = vmul.f32 %v850, %v1157
      %v1172 = vmul.f32 %v852, %v1158
      %v1173 = vmul.f32 %v854, %v1159
      %v1174 = vmul.f32 %v856, %v1160
      %v1175 = vmul.f32 %v858, %v1161
      %v1176 = vmul.f32 %v860, %v1162
      %v1177 = vmul.f32 %v862, %v1163
      %v1178 = vmul.f32 %v864, %v1164
      %v1179 = vmul.f32 %v866, %v1165
      %v1180 = vmul.f32 %v868, %v1166
      %v1181 = vmul.f32 %v870, %v1167
      %v1182 = vmul.f32 %v872, %v1168
      %v1183 = vmul.f32 %v874, %v1169
      %v1184 = vmul.f32 %v876, %v1170
      %v1185 = vadd.f32 %v1046, %v1048
      %v1186 = vadd.f32 %v1185, %v1050
      %v1187 = vadd.f32 %v1186, %v1052
      %1188 = vadd.xlane.f32.xlu0 %v1187
      %v1189 = vpop.xlane.xlu0 %1188
      %v1190 = vadd.f32 %v1054, %v1056
      %v1191 = vadd.f32 %v1190, %v1058
      %v1192 = vadd.f32 %v1191, %v1060
      %1193 = vadd.xlane.f32.xlu0 %v1192
      %v1194 = vpop.xlane.xlu0 %1193
      %v1195 = vadd.f32 %v1062, %v1064
      %v1196 = vadd.f32 %v1195, %v1066
      %v1197 = vadd.f32 %v1196, %v1068
      %1198 = vadd.xlane.f32.xlu0 %v1197
      %v1199 = vpop.xlane.xlu0 %1198
      %v1200 = vadd.f32 %v1070, %v1072
      %v1201 = vadd.f32 %v1200, %v1074
      %v1202 = vadd.f32 %v1201, %v1076
      %1203 = vadd.xlane.f32.xlu0 %v1202
      %v1204 = vpop.xlane.xlu0 %1203
      %v1205 = vadd.f32 %v1078, %v1080
      %v1206 = vadd.f32 %v1205, %v1082
      %v1207 = vadd.f32 %v1206, %v1084
      %1208 = vadd.xlane.f32.xlu0 %v1207
      %v1209 = vpop.xlane.xlu0 %1208
      %v1210 = vadd.f32 %v1086, %v1088
      %v1211 = vadd.f32 %v1210, %v1090
      %v1212 = vadd.f32 %v1211, %v1092
      %1213 = vadd.xlane.f32.xlu0 %v1212
      %v1214 = vpop.xlane.xlu0 %1213
      %v1215 = vadd.f32 %v1094, %v1096
      %v1216 = vadd.f32 %v1215, %v1098
      %v1217 = vadd.f32 %v1216, %v1100
      %1218 = vadd.xlane.f32.xlu0 %v1217
      %v1219 = vpop.xlane.xlu0 %1218
      %v1220 = vadd.f32 %v1102, %v1104
      %v1221 = vadd.f32 %v1220, %v1106
      %v1222 = vadd.f32 %v1221, %v1108
      %1223 = vadd.xlane.f32.xlu0 %v1222
      %v1224 = vpop.xlane.xlu0 %1223
      %v1225 = vadd.f32 %v1110, %v1112
      %v1226 = vadd.f32 %v1225, %v1114
      %v1227 = vadd.f32 %v1226, %v1116
      %1228 = vadd.xlane.f32.xlu0 %v1227
      %v1229 = vpop.xlane.xlu0 %1228
      %v1230 = vadd.f32 %v1118, %v1120
      %v1231 = vadd.f32 %v1230, %v1122
      %v1232 = vadd.f32 %v1231, %v1124
      %1233 = vadd.xlane.f32.xlu0 %v1232
      %v1234 = vpop.xlane.xlu0 %1233
      %v1235 = vadd.f32 %v1126, %v1128
      %v1236 = vadd.f32 %v1235, %v1130
      %v1237 = vadd.f32 %v1236, %v1132
      %1238 = vadd.xlane.f32.xlu0 %v1237
      %v1239 = vpop.xlane.xlu0 %1238
      %v1240 = vadd.f32 %v1134, %v1136
      %v1241 = vadd.f32 %v1240, %v1138
      %v1242 = vadd.f32 %v1241, %v1140
      %1243 = vadd.xlane.f32.xlu0 %v1242
      %v1244 = vpop.xlane.xlu0 %1243
      %v1245 = vadd.f32 %v1142, %v1144
      %v1246 = vadd.f32 %v1245, %v1146
      %v1247 = vadd.f32 %v1246, %v1148
      %1248 = vadd.xlane.f32.xlu0 %v1247
      %v1249 = vpop.xlane.xlu0 %1248
      %v1250 = vadd.f32 %v1150, %v1152
      %v1251 = vadd.f32 %v1250, %v1154
      %v1252 = vadd.f32 %v1251, %v1156
      %1253 = vadd.xlane.f32.xlu0 %v1252
      %v1254 = vpop.xlane.xlu0 %1253
      %v1255 = vadd.f32 %v1171, %v1189
      %v1256 = vadd.f32 %v1172, %v1194
      %v1257 = vadd.f32 %v1173, %v1199
      %v1258 = vadd.f32 %v1174, %v1204
      %v1259 = vadd.f32 %v1175, %v1209
      %v1260 = vadd.f32 %v1176, %v1214
      %v1261 = vadd.f32 %v1177, %v1219
      %v1262 = vadd.f32 %v1178, %v1224
      %v1263 = vadd.f32 %v1179, %v1229
      %v1264 = vadd.f32 %v1180, %v1234
      %v1265 = vadd.f32 %v1181, %v1239
      %v1266 = vadd.f32 %v1182, %v1244
      %v1267 = vadd.f32 %v1183, %v1249
      %v1268 = vadd.f32 %v1184, %v1254
      %1269 = vst.msk [vmem:[#allocation6] sm:$0xff] %vm231, %v1255
      %1270 = vst.msk [vmem:[#allocation6 + $0x8] sm:$0xff] %vm231, %v1256
      %1271 = vst.msk [vmem:[#allocation6 + $0x10] sm:$0xff] %vm231, %v1257
      %1272 = vst.msk [vmem:[#allocation6 + $0x18] sm:$0xff] %vm231, %v1258
      %1273 = vst.msk [vmem:[#allocation6 + $0x20] sm:$0xff] %vm231, %v1259
      %1274 = vst.msk [vmem:[#allocation6 + $0x28] sm:$0xff] %vm231, %v1260
      %1275 = vst.msk [vmem:[#allocation6 + $0x30] sm:$0xff] %vm231, %v1261
      %1276 = vst.msk [vmem:[#allocation6 + $0x38] sm:$0xff] %vm231, %v1262
      %1277 = vst.msk [vmem:[#allocation6 + $0x40] sm:$0xff] %vm231, %v1263
      %1278 = vst.msk [vmem:[#allocation6 + $0x48] sm:$0xff] %vm231, %v1264
      %1279 = vst.msk [vmem:[#allocation6 + $0x50] sm:$0xff] %vm231, %v1265
      %1280 = vst.msk [vmem:[#allocation6 + $0x58] sm:$0xff] %vm231, %v1266
      %1281 = vst.msk [vmem:[#allocation6 + $0x60] sm:$0xff] %vm231, %v1267
      %1282 = vst.msk [vmem:[#allocation6 + $0x68] sm:$0xff] %vm231, %v1268
      %v1283 = vld [vmem:[#allocation7] sm:$0xff]
      %v1284 = vld [vmem:[#allocation7 + $0x8] sm:$0xff]
      %v1285 = vld [vmem:[#allocation7 + $0x10] sm:$0xff]
      %v1286 = vld [vmem:[#allocation7 + $0x18] sm:$0xff]
      %v1287 = vld [vmem:[#allocation7 + $0x20] sm:$0xff]
      %v1288 = vld [vmem:[#allocation7 + $0x28] sm:$0xff]
      %v1289 = vld [vmem:[#allocation7 + $0x30] sm:$0xff]
      %v1290 = vld [vmem:[#allocation7 + $0x38] sm:$0xff]
      %v1291 = vld [vmem:[#allocation7 + $0x40] sm:$0xff]
      %v1292 = vld [vmem:[#allocation7 + $0x48] sm:$0xff]
      %v1293 = vld [vmem:[#allocation7 + $0x50] sm:$0xff]
      %v1294 = vld [vmem:[#allocation7 + $0x58] sm:$0xff]
      %v1295 = vld [vmem:[#allocation7 + $0x60] sm:$0xff]
      %v1296 = vld [vmem:[#allocation7 + $0x68] sm:$0xff]
      %v1297 = vmul.f32 %v892, %v1283
      %v1298 = vmul.f32 %v894, %v1284
      %v1299 = vmul.f32 %v896, %v1285
      %v1300 = vmul.f32 %v898, %v1286
      %v1301 = vmul.f32 %v900, %v1287
      %v1302 = vmul.f32 %v902, %v1288
      %v1303 = vmul.f32 %v904, %v1289
      %v1304 = vmul.f32 %v906, %v1290
      %v1305 = vmul.f32 %v908, %v1291
      %v1306 = vmul.f32 %v910, %v1292
      %v1307 = vmul.f32 %v912, %v1293
      %v1308 = vmul.f32 %v914, %v1294
      %v1309 = vmul.f32 %v916, %v1295
      %v1310 = vmul.f32 %v918, %v1296
      %1312 = vset.pattern.permute.xlu0 0
      %1313 = vperm.xlu0 %1312, %v821
      %v1314 = vpop.permute.xlu0 %1313
      %1317 = vset.pattern.permute.xlu0 0
      %1318 = vperm.xlu0 %1317, %v822
      %v1319 = vpop.permute.xlu0 %1318
      %1322 = vset.pattern.permute.xlu0 0
      %1323 = vperm.xlu0 %1322, %v823
      %v1324 = vpop.permute.xlu0 %1323
      %1327 = vset.pattern.permute.xlu0 0
      %1328 = vperm.xlu0 %1327, %v824
      %v1329 = vpop.permute.xlu0 %1328
      %1332 = vset.pattern.permute.xlu0 0
      %1333 = vperm.xlu0 %1332, %v825
      %v1334 = vpop.permute.xlu0 %1333
      %1337 = vset.pattern.permute.xlu0 0
      %1338 = vperm.xlu0 %1337, %v826
      %v1339 = vpop.permute.xlu0 %1338
      %1342 = vset.pattern.permute.xlu0 0
      %1343 = vperm.xlu0 %1342, %v827
      %v1344 = vpop.permute.xlu0 %1343
      %1347 = vset.pattern.permute.xlu0 0
      %1348 = vperm.xlu0 %1347, %v828
      %v1349 = vpop.permute.xlu0 %1348
      %1352 = vset.pattern.permute.xlu0 0
      %1353 = vperm.xlu0 %1352, %v829
      %v1354 = vpop.permute.xlu0 %1353
      %1357 = vset.pattern.permute.xlu0 0
      %1358 = vperm.xlu0 %1357, %v830
      %v1359 = vpop.permute.xlu0 %1358
      %1362 = vset.pattern.permute.xlu0 0
      %1363 = vperm.xlu0 %1362, %v831
      %v1364 = vpop.permute.xlu0 %1363
      %1367 = vset.pattern.permute.xlu0 0
      %1368 = vperm.xlu0 %1367, %v832
      %v1369 = vpop.permute.xlu0 %1368
      %1372 = vset.pattern.permute.xlu0 0
      %1373 = vperm.xlu0 %1372, %v833
      %v1374 = vpop.permute.xlu0 %1373
      %1377 = vset.pattern.permute.xlu0 0
      %1378 = vperm.xlu0 %1377, %v834
      %v1379 = vpop.permute.xlu0 %1378
      %v1381 = vsub.f32 %v415, %v1314
      %v1382 = vsub.f32 %v416, %v1314
      %v1383 = vsub.f32 %v417, %v1314
      %v1384 = vsub.f32 %v418, %v1314
      %v1385 = vsub.f32 %v419, %v1319
      %v1386 = vsub.f32 %v420, %v1319
      %v1387 = vsub.f32 %v421, %v1319
      %v1388 = vsub.f32 %v422, %v1319
      %v1389 = vsub.f32 %v423, %v1324
      %v1390 = vsub.f32 %v424, %v1324
      %v1391 = vsub.f32 %v425, %v1324
      %v1392 = vsub.f32 %v426, %v1324
      %v1393 = vsub.f32 %v427, %v1329
      %v1394 = vsub.f32 %v428, %v1329
      %v1395 = vsub.f32 %v429, %v1329
      %v1396 = vsub.f32 %v430, %v1329
      %v1397 = vsub.f32 %v431, %v1334
      %v1398 = vsub.f32 %v432, %v1334
      %v1399 = vsub.f32 %v433, %v1334
      %v1400 = vsub.f32 %v434, %v1334
      %v1401 = vsub.f32 %v435, %v1339
      %v1402 = vsub.f32 %v436, %v1339
      %v1403 = vsub.f32 %v437, %v1339
      %v1404 = vsub.f32 %v438, %v1339
      %v1405 = vsub.f32 %v439, %v1344
      %v1406 = vsub.f32 %v440, %v1344
      %v1407 = vsub.f32 %v441, %v1344
      %v1408 = vsub.f32 %v442, %v1344
      %v1409 = vsub.f32 %v443, %v1349
      %v1410 = vsub.f32 %v444, %v1349
      %v1411 = vsub.f32 %v445, %v1349
      %v1412 = vsub.f32 %v446, %v1349
      %v1413 = vsub.f32 %v447, %v1354
      %v1414 = vsub.f32 %v448, %v1354
      %v1415 = vsub.f32 %v449, %v1354
      %v1416 = vsub.f32 %v450, %v1354
      %v1417 = vsub.f32 %v451, %v1359
      %v1418 = vsub.f32 %v452, %v1359
      %v1419 = vsub.f32 %v453, %v1359
      %v1420 = vsub.f32 %v454, %v1359
      %v1421 = vsub.f32 %v455, %v1364
      %v1422 = vsub.f32 %v456, %v1364
      %v1423 = vsub.f32 %v457, %v1364
      %v1424 = vsub.f32 %v458, %v1364
      %v1425 = vsub.f32 %v459, %v1369
      %v1426 = vsub.f32 %v460, %v1369
      %v1427 = vsub.f32 %v461, %v1369
      %v1428 = vsub.f32 %v462, %v1369
      %v1429 = vsub.f32 %v463, %v1374
      %v1430 = vsub.f32 %v464, %v1374
      %v1431 = vsub.f32 %v465, %v1374
      %v1432 = vsub.f32 %v466, %v1374
      %v1433 = vsub.f32 %v467, %v1379
      %v1434 = vsub.f32 %v468, %v1379
      %v1435 = vsub.f32 %v469, %v1379
      %v1436 = vsub.f32 %v470, %v1379
      %v1437 = vmul.f32 %v1381, 1.442695
      %v1438 = vpow.pop %v1437
      %v1439 = vmul.f32 %v1382, 1.442695
      %v1440 = vpow.pop %v1439
      %v1441 = vmul.f32 %v1383, 1.442695
      %v1442 = vpow.pop %v1441
      %v1443 = vmul.f32 %v1384, 1.442695
      %v1444 = vpow.pop %v1443
      %v1445 = vmul.f32 %v1385, 1.442695
      %v1446 = vpow.pop %v1445
      %v1447 = vmul.f32 %v1386, 1.442695
      %v1448 = vpow.pop %v1447
      %v1449 = vmul.f32 %v1387, 1.442695
      %v1450 = vpow.pop %v1449
      %v1451 = vmul.f32 %v1388, 1.442695
      %v1452 = vpow.pop %v1451
      %v1453 = vmul.f32 %v1389, 1.442695
      %v1454 = vpow.pop %v1453
      %v1455 = vmul.f32 %v1390, 1.442695
      %v1456 = vpow.pop %v1455
      %v1457 = vmul.f32 %v1391, 1.442695
      %v1458 = vpow.pop %v1457
      %v1459 = vmul.f32 %v1392, 1.442695
      %v1460 = vpow.pop %v1459
      %v1461 = vmul.f32 %v1393, 1.442695
      %v1462 = vpow.pop %v1461
      %v1463 = vmul.f32 %v1394, 1.442695
      %v1464 = vpow.pop %v1463
      %v1465 = vmul.f32 %v1395, 1.442695
      %v1466 = vpow.pop %v1465
      %v1467 = vmul.f32 %v1396, 1.442695
      %v1468 = vpow.pop %v1467
      %v1469 = vmul.f32 %v1397, 1.442695
      %v1470 = vpow.pop %v1469
      %v1471 = vmul.f32 %v1398, 1.442695
      %v1472 = vpow.pop %v1471
      %v1473 = vmul.f32 %v1399, 1.442695
      %v1474 = vpow.pop %v1473
      %v1475 = vmul.f32 %v1400, 1.442695
      %v1476 = vpow.pop %v1475
      %v1477 = vmul.f32 %v1401, 1.442695
      %v1478 = vpow.pop %v1477
      %v1479 = vmul.f32 %v1402, 1.442695
      %v1480 = vpow.pop %v1479
      %v1481 = vmul.f32 %v1403, 1.442695
      %v1482 = vpow.pop %v1481
      %v1483 = vmul.f32 %v1404, 1.442695
      %v1484 = vpow.pop %v1483
      %v1485 = vmul.f32 %v1405, 1.442695
      %v1486 = vpow.pop %v1485
      %v1487 = vmul.f32 %v1406, 1.442695
      %v1488 = vpow.pop %v1487
      %v1489 = vmul.f32 %v1407, 1.442695
      %v1490 = vpow.pop %v1489
      %v1491 = vmul.f32 %v1408, 1.442695
      %v1492 = vpow.pop %v1491
      %v1493 = vmul.f32 %v1409, 1.442695
      %v1494 = vpow.pop %v1493
      %v1495 = vmul.f32 %v1410, 1.442695
      %v1496 = vpow.pop %v1495
      %v1497 = vmul.f32 %v1411, 1.442695
      %v1498 = vpow.pop %v1497
      %v1499 = vmul.f32 %v1412, 1.442695
      %v1500 = vpow.pop %v1499
      %v1501 = vmul.f32 %v1413, 1.442695
      %v1502 = vpow.pop %v1501
      %v1503 = vmul.f32 %v1414, 1.442695
      %v1504 = vpow.pop %v1503
      %v1505 = vmul.f32 %v1415, 1.442695
      %v1506 = vpow.pop %v1505
      %v1507 = vmul.f32 %v1416, 1.442695
      %v1508 = vpow.pop %v1507
      %v1509 = vmul.f32 %v1417, 1.442695
      %v1510 = vpow.pop %v1509
      %v1511 = vmul.f32 %v1418, 1.442695
      %v1512 = vpow.pop %v1511
      %v1513 = vmul.f32 %v1419, 1.442695
      %v1514 = vpow.pop %v1513
      %v1515 = vmul.f32 %v1420, 1.442695
      %v1516 = vpow.pop %v1515
      %v1517 = vmul.f32 %v1421, 1.442695
      %v1518 = vpow.pop %v1517
      %v1519 = vmul.f32 %v1422, 1.442695
      %v1520 = vpow.pop %v1519
      %v1521 = vmul.f32 %v1423, 1.442695
      %v1522 = vpow.pop %v1521
      %v1523 = vmul.f32 %v1424, 1.442695
      %v1524 = vpow.pop %v1523
      %v1525 = vmul.f32 %v1425, 1.442695
      %v1526 = vpow.pop %v1525
      %v1527 = vmul.f32 %v1426, 1.442695
      %v1528 = vpow.pop %v1527
      %v1529 = vmul.f32 %v1427, 1.442695
      %v1530 = vpow.pop %v1529
      %v1531 = vmul.f32 %v1428, 1.442695
      %v1532 = vpow.pop %v1531
      %v1533 = vmul.f32 %v1429, 1.442695
      %v1534 = vpow.pop %v1533
      %v1535 = vmul.f32 %v1430, 1.442695
      %v1536 = vpow.pop %v1535
      %v1537 = vmul.f32 %v1431, 1.442695
      %v1538 = vpow.pop %v1537
      %v1539 = vmul.f32 %v1432, 1.442695
      %v1540 = vpow.pop %v1539
      %v1541 = vmul.f32 %v1433, 1.442695
      %v1542 = vpow.pop %v1541
      %v1543 = vmul.f32 %v1434, 1.442695
      %v1544 = vpow.pop %v1543
      %v1545 = vmul.f32 %v1435, 1.442695
      %v1546 = vpow.pop %v1545
      %v1547 = vmul.f32 %v1436, 1.442695
      %v1548 = vpow.pop %v1547
      %v1549 = vadd.f32 %v1438, %v1440
      %v1550 = vadd.f32 %v1549, %v1442
      %v1551 = vadd.f32 %v1550, %v1444
      %1552 = vadd.xlane.f32.xlu0 %v1551
      %v1553 = vpop.xlane.xlu0 %1552
      %v1554 = vadd.f32 %v1446, %v1448
      %v1555 = vadd.f32 %v1554, %v1450
      %v1556 = vadd.f32 %v1555, %v1452
      %1557 = vadd.xlane.f32.xlu0 %v1556
      %v1558 = vpop.xlane.xlu0 %1557
      %v1559 = vadd.f32 %v1454, %v1456
      %v1560 = vadd.f32 %v1559, %v1458
      %v1561 = vadd.f32 %v1560, %v1460
      %1562 = vadd.xlane.f32.xlu0 %v1561
      %v1563 = vpop.xlane.xlu0 %1562
      %v1564 = vadd.f32 %v1462, %v1464
      %v1565 = vadd.f32 %v1564, %v1466
      %v1566 = vadd.f32 %v1565, %v1468
      %1567 = vadd.xlane.f32.xlu0 %v1566
      %v1568 = vpop.xlane.xlu0 %1567
      %v1569 = vadd.f32 %v1470, %v1472
      %v1570 = vadd.f32 %v1569, %v1474
      %v1571 = vadd.f32 %v1570, %v1476
      %1572 = vadd.xlane.f32.xlu0 %v1571
      %v1573 = vpop.xlane.xlu0 %1572
      %v1574 = vadd.f32 %v1478, %v1480
      %v1575 = vadd.f32 %v1574, %v1482
      %v1576 = vadd.f32 %v1575, %v1484
      %1577 = vadd.xlane.f32.xlu0 %v1576
      %v1578 = vpop.xlane.xlu0 %1577
      %v1579 = vadd.f32 %v1486, %v1488
      %v1580 = vadd.f32 %v1579, %v1490
      %v1581 = vadd.f32 %v1580, %v1492
      %1582 = vadd.xlane.f32.xlu0 %v1581
      %v1583 = vpop.xlane.xlu0 %1582
      %v1584 = vadd.f32 %v1494, %v1496
      %v1585 = vadd.f32 %v1584, %v1498
      %v1586 = vadd.f32 %v1585, %v1500
      %1587 = vadd.xlane.f32.xlu0 %v1586
      %v1588 = vpop.xlane.xlu0 %1587
      %v1589 = vadd.f32 %v1502, %v1504
      %v1590 = vadd.f32 %v1589, %v1506
      %v1591 = vadd.f32 %v1590, %v1508
      %1592 = vadd.xlane.f32.xlu0 %v1591
      %v1593 = vpop.xlane.xlu0 %1592
      %v1594 = vadd.f32 %v1510, %v1512
      %v1595 = vadd.f32 %v1594, %v1514
      %v1596 = vadd.f32 %v1595, %v1516
      %1597 = vadd.xlane.f32.xlu0 %v1596
      %v1598 = vpop.xlane.xlu0 %1597
      %v1599 = vadd.f32 %v1518, %v1520
      %v1600 = vadd.f32 %v1599, %v1522
      %v1601 = vadd.f32 %v1600, %v1524
      %1602 = vadd.xlane.f32.xlu0 %v1601
      %v1603 = vpop.xlane.xlu0 %1602
      %v1604 = vadd.f32 %v1526, %v1528
      %v1605 = vadd.f32 %v1604, %v1530
      %v1606 = vadd.f32 %v1605, %v1532
      %1607 = vadd.xlane.f32.xlu0 %v1606
      %v1608 = vpop.xlane.xlu0 %1607
      %v1609 = vadd.f32 %v1534, %v1536
      %v1610 = vadd.f32 %v1609, %v1538
      %v1611 = vadd.f32 %v1610, %v1540
      %1612 = vadd.xlane.f32.xlu0 %v1611
      %v1613 = vpop.xlane.xlu0 %1612
      %v1614 = vadd.f32 %v1542, %v1544
      %v1615 = vadd.f32 %v1614, %v1546
      %v1616 = vadd.f32 %v1615, %v1548
      %1617 = vadd.xlane.f32.xlu0 %v1616
      %v1618 = vpop.xlane.xlu0 %1617
      %v1619 = vadd.f32 %v1297, %v1553
      %v1620 = vadd.f32 %v1298, %v1558
      %v1621 = vadd.f32 %v1299, %v1563
      %v1622 = vadd.f32 %v1300, %v1568
      %v1623 = vadd.f32 %v1301, %v1573
      %v1624 = vadd.f32 %v1302, %v1578
      %v1625 = vadd.f32 %v1303, %v1583
      %v1626 = vadd.f32 %v1304, %v1588
      %v1627 = vadd.f32 %v1305, %v1593
      %v1628 = vadd.f32 %v1306, %v1598
      %v1629 = vadd.f32 %v1307, %v1603
      %v1630 = vadd.f32 %v1308, %v1608
      %v1631 = vadd.f32 %v1309, %v1613
      %v1632 = vadd.f32 %v1310, %v1618
      %1633 = vst.msk [vmem:[#allocation7] sm:$0xff] %vm231, %v1619
      %1634 = vst.msk [vmem:[#allocation7 + $0x8] sm:$0xff] %vm231, %v1620
      %1635 = vst.msk [vmem:[#allocation7 + $0x10] sm:$0xff] %vm231, %v1621
      %1636 = vst.msk [vmem:[#allocation7 + $0x18] sm:$0xff] %vm231, %v1622
      %1637 = vst.msk [vmem:[#allocation7 + $0x20] sm:$0xff] %vm231, %v1623
      %1638 = vst.msk [vmem:[#allocation7 + $0x28] sm:$0xff] %vm231, %v1624
      %1639 = vst.msk [vmem:[#allocation7 + $0x30] sm:$0xff] %vm231, %v1625
      %1640 = vst.msk [vmem:[#allocation7 + $0x38] sm:$0xff] %vm231, %v1626
      %1641 = vst.msk [vmem:[#allocation7 + $0x40] sm:$0xff] %vm231, %v1627
      %1642 = vst.msk [vmem:[#allocation7 + $0x48] sm:$0xff] %vm231, %v1628
      %1643 = vst.msk [vmem:[#allocation7 + $0x50] sm:$0xff] %vm231, %v1629
      %1644 = vst.msk [vmem:[#allocation7 + $0x58] sm:$0xff] %vm231, %v1630
      %1645 = vst.msk [vmem:[#allocation7 + $0x60] sm:$0xff] %vm231, %v1631
      %1646 = vst.msk [vmem:[#allocation7 + $0x68] sm:$0xff] %vm231, %v1632
      %v1647 = vld [vmem:[#allocation8] sm:$0xff]
      %v1648 = vld [vmem:[#allocation8 + $0x8] sm:$0xff]
      %v1649 = vld [vmem:[#allocation8 + $0x10] sm:$0xff]
      %v1650 = vld [vmem:[#allocation8 + $0x18] sm:$0xff]
      %v1651 = vld [vmem:[#allocation8 + $0x20] sm:$0xff]
      %v1652 = vld [vmem:[#allocation8 + $0x28] sm:$0xff]
      %v1653 = vld [vmem:[#allocation8 + $0x30] sm:$0xff]
      %v1654 = vld [vmem:[#allocation8 + $0x38] sm:$0xff]
      %v1655 = vld [vmem:[#allocation8 + $0x40] sm:$0xff]
      %v1656 = vld [vmem:[#allocation8 + $0x48] sm:$0xff]
      %v1657 = vld [vmem:[#allocation8 + $0x50] sm:$0xff]
      %v1658 = vld [vmem:[#allocation8 + $0x58] sm:$0xff]
      %v1659 = vld [vmem:[#allocation8 + $0x60] sm:$0xff]
      %v1660 = vld [vmem:[#allocation8 + $0x68] sm:$0xff]
      %v1661 = vmul.f32 %v850, %v1647
      %v1662 = vmul.f32 %v852, %v1648
      %v1663 = vmul.f32 %v854, %v1649
      %v1664 = vmul.f32 %v856, %v1650
      %v1665 = vmul.f32 %v858, %v1651
      %v1666 = vmul.f32 %v860, %v1652
      %v1667 = vmul.f32 %v862, %v1653
      %v1668 = vmul.f32 %v864, %v1654
      %v1669 = vmul.f32 %v866, %v1655
      %v1670 = vmul.f32 %v868, %v1656
      %v1671 = vmul.f32 %v870, %v1657
      %v1672 = vmul.f32 %v872, %v1658
      %v1673 = vmul.f32 %v874, %v1659
      %v1674 = vmul.f32 %v876, %v1660
      %v1675 = vmul.f32 %v1046, %v471
      %v1676 = vmul.f32 %v1048, %v472
      %v1677 = vmul.f32 %v1050, %v473
      %v1678 = vmul.f32 %v1052, %v474
      %v1679 = vmul.f32 %v1054, %v475
      %v1680 = vmul.f32 %v1056, %v476
      %v1681 = vmul.f32 %v1058, %v477
      %v1682 = vmul.f32 %v1060, %v478
      %v1683 = vmul.f32 %v1062, %v479
      %v1684 = vmul.f32 %v1064, %v480
      %v1685 = vmul.f32 %v1066, %v481
      %v1686 = vmul.f32 %v1068, %v482
      %v1687 = vmul.f32 %v1070, %v483
      %v1688 = vmul.f32 %v1072, %v484
      %v1689 = vmul.f32 %v1074, %v485
      %v1690 = vmul.f32 %v1076, %v486
      %v1691 = vmul.f32 %v1078, %v487
      %v1692 = vmul.f32 %v1080, %v488
      %v1693 = vmul.f32 %v1082, %v489
      %v1694 = vmul.f32 %v1084, %v490
      %v1695 = vmul.f32 %v1086, %v491
      %v1696 = vmul.f32 %v1088, %v492
      %v1697 = vmul.f32 %v1090, %v493
      %v1698 = vmul.f32 %v1092, %v494
      %v1699 = vmul.f32 %v1094, %v495
      %v1700 = vmul.f32 %v1096, %v496
      %v1701 = vmul.f32 %v1098, %v497
      %v1702 = vmul.f32 %v1100, %v498
      %v1703 = vmul.f32 %v1102, %v499
      %v1704 = vmul.f32 %v1104, %v500
      %v1705 = vmul.f32 %v1106, %v501
      %v1706 = vmul.f32 %v1108, %v502
      %v1707 = vmul.f32 %v1110, %v503
      %v1708 = vmul.f32 %v1112, %v504
      %v1709 = vmul.f32 %v1114, %v505
      %v1710 = vmul.f32 %v1116, %v506
      %v1711 = vmul.f32 %v1118, %v507
      %v1712 = vmul.f32 %v1120, %v508
      %v1713 = vmul.f32 %v1122, %v509
      %v1714 = vmul.f32 %v1124, %v510
      %v1715 = vmul.f32 %v1126, %v511
      %v1716 = vmul.f32 %v1128, %v512
      %v1717 = vmul.f32 %v1130, %v513
      %v1718 = vmul.f32 %v1132, %v514
      %v1719 = vmul.f32 %v1134, %v515
      %v1720 = vmul.f32 %v1136, %v516
      %v1721 = vmul.f32 %v1138, %v517
      %v1722 = vmul.f32 %v1140, %v518
      %v1723 = vmul.f32 %v1142, %v519
      %v1724 = vmul.f32 %v1144, %v520
      %v1725 = vmul.f32 %v1146, %v521
      %v1726 = vmul.f32 %v1148, %v522
      %v1727 = vmul.f32 %v1150, %v523
      %v1728 = vmul.f32 %v1152, %v524
      %v1729 = vmul.f32 %v1154, %v525
      %v1730 = vmul.f32 %v1156, %v526
      %v1731 = vsel %vm583, %v1675, 0.0
      %v1732 = vsel %vm584, %v1676, 0.0
      %v1733 = vsel %vm585, %v1677, 0.0
      %v1734 = vsel %vm586, %v1678, 0.0
      %v1735 = vsel %vm587, %v1679, 0.0
      %v1736 = vsel %vm588, %v1680, 0.0
      %v1737 = vsel %vm589, %v1681, 0.0
      %v1738 = vsel %vm590, %v1682, 0.0
      %v1739 = vsel %vm591, %v1683, 0.0
      %v1740 = vsel %vm592, %v1684, 0.0
      %v1741 = vsel %vm593, %v1685, 0.0
      %v1742 = vsel %vm594, %v1686, 0.0
      %v1743 = vsel %vm595, %v1687, 0.0
      %v1744 = vsel %vm596, %v1688, 0.0
      %v1745 = vsel %vm597, %v1689, 0.0
      %v1746 = vsel %vm598, %v1690, 0.0
      %v1747 = vsel %vm599, %v1691, 0.0
      %v1748 = vsel %vm600, %v1692, 0.0
      %v1749 = vsel %vm601, %v1693, 0.0
      %v1750 = vsel %vm602, %v1694, 0.0
      %v1751 = vsel %vm603, %v1695, 0.0
      %v1752 = vsel %vm604, %v1696, 0.0
      %v1753 = vsel %vm605, %v1697, 0.0
      %v1754 = vsel %vm606, %v1698, 0.0
      %v1755 = vsel %vm607, %v1699, 0.0
      %v1756 = vsel %vm608, %v1700, 0.0
      %v1757 = vsel %vm609, %v1701, 0.0
      %v1758 = vsel %vm610, %v1702, 0.0
      %v1759 = vsel %vm611, %v1703, 0.0
      %v1760 = vsel %vm612, %v1704, 0.0
      %v1761 = vsel %vm613, %v1705, 0.0
      %v1762 = vsel %vm614, %v1706, 0.0
      %v1763 = vsel %vm615, %v1707, 0.0
      %v1764 = vsel %vm616, %v1708, 0.0
      %v1765 = vsel %vm617, %v1709, 0.0
      %v1766 = vsel %vm618, %v1710, 0.0
      %v1767 = vsel %vm619, %v1711, 0.0
      %v1768 = vsel %vm620, %v1712, 0.0
      %v1769 = vsel %vm621, %v1713, 0.0
      %v1770 = vsel %vm622, %v1714, 0.0
      %v1771 = vsel %vm623, %v1715, 0.0
      %v1772 = vsel %vm624, %v1716, 0.0
      %v1773 = vsel %vm625, %v1717, 0.0
      %v1774 = vsel %vm626, %v1718, 0.0
      %v1775 = vsel %vm627, %v1719, 0.0
      %v1776 = vsel %vm628, %v1720, 0.0
      %v1777 = vsel %vm629, %v1721, 0.0
      %v1778 = vsel %vm630, %v1722, 0.0
      %v1779 = vsel %vm631, %v1723, 0.0
      %v1780 = vsel %vm632, %v1724, 0.0
      %v1781 = vsel %vm633, %v1725, 0.0
      %v1782 = vsel %vm634, %v1726, 0.0
      %v1783 = vsel %vm635, %v1727, 0.0
      %v1784 = vsel %vm636, %v1728, 0.0
      %v1785 = vsel %vm637, %v1729, 0.0
      %v1786 = vsel %vm638, %v1730, 0.0
      %v1787 = vadd.f32 %v1731, %v1732
      %v1788 = vadd.f32 %v1787, %v1733
      %v1789 = vadd.f32 %v1788, %v1734
      %1790 = vadd.xlane.f32.xlu0 %v1789
      %v1791 = vpop.xlane.xlu0 %1790
      %v1792 = vadd.f32 %v1735, %v1736
      %v1793 = vadd.f32 %v1792, %v1737
      %v1794 = vadd.f32 %v1793, %v1738
      %1795 = vadd.xlane.f32.xlu0 %v1794
      %v1796 = vpop.xlane.xlu0 %1795
      %v1797 = vadd.f32 %v1739, %v1740
      %v1798 = vadd.f32 %v1797, %v1741
      %v1799 = vadd.f32 %v1798, %v1742
      %1800 = vadd.xlane.f32.xlu0 %v1799
      %v1801 = vpop.xlane.xlu0 %1800
      %v1802 = vadd.f32 %v1743, %v1744
      %v1803 = vadd.f32 %v1802, %v1745
      %v1804 = vadd.f32 %v1803, %v1746
      %1805 = vadd.xlane.f32.xlu0 %v1804
      %v1806 = vpop.xlane.xlu0 %1805
      %v1807 = vadd.f32 %v1747, %v1748
      %v1808 = vadd.f32 %v1807, %v1749
      %v1809 = vadd.f32 %v1808, %v1750
      %1810 = vadd.xlane.f32.xlu0 %v1809
      %v1811 = vpop.xlane.xlu0 %1810
      %v1812 = vadd.f32 %v1751, %v1752
      %v1813 = vadd.f32 %v1812, %v1753
      %v1814 = vadd.f32 %v1813, %v1754
      %1815 = vadd.xlane.f32.xlu0 %v1814
      %v1816 = vpop.xlane.xlu0 %1815
      %v1817 = vadd.f32 %v1755, %v1756
      %v1818 = vadd.f32 %v1817, %v1757
      %v1819 = vadd.f32 %v1818, %v1758
      %1820 = vadd.xlane.f32.xlu0 %v1819
      %v1821 = vpop.xlane.xlu0 %1820
      %v1822 = vadd.f32 %v1759, %v1760
      %v1823 = vadd.f32 %v1822, %v1761
      %v1824 = vadd.f32 %v1823, %v1762
      %1825 = vadd.xlane.f32.xlu0 %v1824
      %v1826 = vpop.xlane.xlu0 %1825
      %v1827 = vadd.f32 %v1763, %v1764
      %v1828 = vadd.f32 %v1827, %v1765
      %v1829 = vadd.f32 %v1828, %v1766
      %1830 = vadd.xlane.f32.xlu0 %v1829
      %v1831 = vpop.xlane.xlu0 %1830
      %v1832 = vadd.f32 %v1767, %v1768
      %v1833 = vadd.f32 %v1832, %v1769
      %v1834 = vadd.f32 %v1833, %v1770
      %1835 = vadd.xlane.f32.xlu0 %v1834
      %v1836 = vpop.xlane.xlu0 %1835
      %v1837 = vadd.f32 %v1771, %v1772
      %v1838 = vadd.f32 %v1837, %v1773
      %v1839 = vadd.f32 %v1838, %v1774
      %1840 = vadd.xlane.f32.xlu0 %v1839
      %v1841 = vpop.xlane.xlu0 %1840
      %v1842 = vadd.f32 %v1775, %v1776
      %v1843 = vadd.f32 %v1842, %v1777
      %v1844 = vadd.f32 %v1843, %v1778
      %1845 = vadd.xlane.f32.xlu0 %v1844
      %v1846 = vpop.xlane.xlu0 %1845
      %v1847 = vadd.f32 %v1779, %v1780
      %v1848 = vadd.f32 %v1847, %v1781
      %v1849 = vadd.f32 %v1848, %v1782
      %1850 = vadd.xlane.f32.xlu0 %v1849
      %v1851 = vpop.xlane.xlu0 %1850
      %v1852 = vadd.f32 %v1783, %v1784
      %v1853 = vadd.f32 %v1852, %v1785
      %v1854 = vadd.f32 %v1853, %v1786
      %1855 = vadd.xlane.f32.xlu0 %v1854
      %v1856 = vpop.xlane.xlu0 %1855
      %v1857 = vadd.f32 %v1661, %v1791
      %v1858 = vadd.f32 %v1662, %v1796
      %v1859 = vadd.f32 %v1663, %v1801
      %v1860 = vadd.f32 %v1664, %v1806
      %v1861 = vadd.f32 %v1665, %v1811
      %v1862 = vadd.f32 %v1666, %v1816
      %v1863 = vadd.f32 %v1667, %v1821
      %v1864 = vadd.f32 %v1668, %v1826
      %v1865 = vadd.f32 %v1669, %v1831
      %v1866 = vadd.f32 %v1670, %v1836
      %v1867 = vadd.f32 %v1671, %v1841
      %v1868 = vadd.f32 %v1672, %v1846
      %v1869 = vadd.f32 %v1673, %v1851
      %v1870 = vadd.f32 %v1674, %v1856
      %1871 = vst.msk [vmem:[#allocation8] sm:$0xff] %vm231, %v1857
      %1872 = vst.msk [vmem:[#allocation8 + $0x8] sm:$0xff] %vm231, %v1858
      %1873 = vst.msk [vmem:[#allocation8 + $0x10] sm:$0xff] %vm231, %v1859
      %1874 = vst.msk [vmem:[#allocation8 + $0x18] sm:$0xff] %vm231, %v1860
      %1875 = vst.msk [vmem:[#allocation8 + $0x20] sm:$0xff] %vm231, %v1861
      %1876 = vst.msk [vmem:[#allocation8 + $0x28] sm:$0xff] %vm231, %v1862
      %1877 = vst.msk [vmem:[#allocation8 + $0x30] sm:$0xff] %vm231, %v1863
      %1878 = vst.msk [vmem:[#allocation8 + $0x38] sm:$0xff] %vm231, %v1864
      %1879 = vst.msk [vmem:[#allocation8 + $0x40] sm:$0xff] %vm231, %v1865
      %1880 = vst.msk [vmem:[#allocation8 + $0x48] sm:$0xff] %vm231, %v1866
      %1881 = vst.msk [vmem:[#allocation8 + $0x50] sm:$0xff] %vm231, %v1867
      %1882 = vst.msk [vmem:[#allocation8 + $0x58] sm:$0xff] %vm231, %v1868
      %1883 = vst.msk [vmem:[#allocation8 + $0x60] sm:$0xff] %vm231, %v1869
      %1884 = vst.msk [vmem:[#allocation8 + $0x68] sm:$0xff] %vm231, %v1870
      %v1885 = vld [vmem:[#allocation9] sm:$0xff]
      %v1886 = vld [vmem:[#allocation9 + $0x8] sm:$0xff]
      %v1887 = vld [vmem:[#allocation9 + $0x10] sm:$0xff]
      %v1888 = vld [vmem:[#allocation9 + $0x18] sm:$0xff]
      %v1889 = vld [vmem:[#allocation9 + $0x20] sm:$0xff]
      %v1890 = vld [vmem:[#allocation9 + $0x28] sm:$0xff]
      %v1891 = vld [vmem:[#allocation9 + $0x30] sm:$0xff]
      %v1892 = vld [vmem:[#allocation9 + $0x38] sm:$0xff]
      %v1893 = vld [vmem:[#allocation9 + $0x40] sm:$0xff]
      %v1894 = vld [vmem:[#allocation9 + $0x48] sm:$0xff]
      %v1895 = vld [vmem:[#allocation9 + $0x50] sm:$0xff]
      %v1896 = vld [vmem:[#allocation9 + $0x58] sm:$0xff]
      %v1897 = vld [vmem:[#allocation9 + $0x60] sm:$0xff]
      %v1898 = vld [vmem:[#allocation9 + $0x68] sm:$0xff]
      %v1899 = vmul.f32 %v850, %v1885
      %v1900 = vmul.f32 %v852, %v1886
      %v1901 = vmul.f32 %v854, %v1887
      %v1902 = vmul.f32 %v856, %v1888
      %v1903 = vmul.f32 %v858, %v1889
      %v1904 = vmul.f32 %v860, %v1890
      %v1905 = vmul.f32 %v862, %v1891
      %v1906 = vmul.f32 %v864, %v1892
      %v1907 = vmul.f32 %v866, %v1893
      %v1908 = vmul.f32 %v868, %v1894
      %v1909 = vmul.f32 %v870, %v1895
      %v1910 = vmul.f32 %v872, %v1896
      %v1911 = vmul.f32 %v874, %v1897
      %v1912 = vmul.f32 %v876, %v1898
      %v1913 = vsel %vm583, %v1046, 0.0
      %v1914 = vsel %vm584, %v1048, 0.0
      %v1915 = vsel %vm585, %v1050, 0.0
      %v1916 = vsel %vm586, %v1052, 0.0
      %v1917 = vsel %vm587, %v1054, 0.0
      %v1918 = vsel %vm588, %v1056, 0.0
      %v1919 = vsel %vm589, %v1058, 0.0
      %v1920 = vsel %vm590, %v1060, 0.0
      %v1921 = vsel %vm591, %v1062, 0.0
      %v1922 = vsel %vm592, %v1064, 0.0
      %v1923 = vsel %vm593, %v1066, 0.0
      %v1924 = vsel %vm594, %v1068, 0.0
      %v1925 = vsel %vm595, %v1070, 0.0
      %v1926 = vsel %vm596, %v1072, 0.0
      %v1927 = vsel %vm597, %v1074, 0.0
      %v1928 = vsel %vm598, %v1076, 0.0
      %v1929 = vsel %vm599, %v1078, 0.0
      %v1930 = vsel %vm600, %v1080, 0.0
      %v1931 = vsel %vm601, %v1082, 0.0
      %v1932 = vsel %vm602, %v1084, 0.0
      %v1933 = vsel %vm603, %v1086, 0.0
      %v1934 = vsel %vm604, %v1088, 0.0
      %v1935 = vsel %vm605, %v1090, 0.0
      %v1936 = vsel %vm606, %v1092, 0.0
      %v1937 = vsel %vm607, %v1094, 0.0
      %v1938 = vsel %vm608, %v1096, 0.0
      %v1939 = vsel %vm609, %v1098, 0.0
      %v1940 = vsel %vm610, %v1100, 0.0
      %v1941 = vsel %vm611, %v1102, 0.0
      %v1942 = vsel %vm612, %v1104, 0.0
      %v1943 = vsel %vm613, %v1106, 0.0
      %v1944 = vsel %vm614, %v1108, 0.0
      %v1945 = vsel %vm615, %v1110, 0.0
      %v1946 = vsel %vm616, %v1112, 0.0
      %v1947 = vsel %vm617, %v1114, 0.0
      %v1948 = vsel %vm618, %v1116, 0.0
      %v1949 = vsel %vm619, %v1118, 0.0
      %v1950 = vsel %vm620, %v1120, 0.0
      %v1951 = vsel %vm621, %v1122, 0.0
      %v1952 = vsel %vm622, %v1124, 0.0
      %v1953 = vsel %vm623, %v1126, 0.0
      %v1954 = vsel %vm624, %v1128, 0.0
      %v1955 = vsel %vm625, %v1130, 0.0
      %v1956 = vsel %vm626, %v1132, 0.0
      %v1957 = vsel %vm627, %v1134, 0.0
      %v1958 = vsel %vm628, %v1136, 0.0
      %v1959 = vsel %vm629, %v1138, 0.0
      %v1960 = vsel %vm630, %v1140, 0.0
      %v1961 = vsel %vm631, %v1142, 0.0
      %v1962 = vsel %vm632, %v1144, 0.0
      %v1963 = vsel %vm633, %v1146, 0.0
      %v1964 = vsel %vm634, %v1148, 0.0
      %v1965 = vsel %vm635, %v1150, 0.0
      %v1966 = vsel %vm636, %v1152, 0.0
      %v1967 = vsel %vm637, %v1154, 0.0
      %v1968 = vsel %vm638, %v1156, 0.0
      %v1969 = vadd.f32 %v1913, %v1914
      %v1970 = vadd.f32 %v1969, %v1915
      %v1971 = vadd.f32 %v1970, %v1916
      %1972 = vadd.xlane.f32.xlu0 %v1971
      %v1973 = vpop.xlane.xlu0 %1972
      %v1974 = vadd.f32 %v1917, %v1918
      %v1975 = vadd.f32 %v1974, %v1919
      %v1976 = vadd.f32 %v1975, %v1920
      %1977 = vadd.xlane.f32.xlu0 %v1976
      %v1978 = vpop.xlane.xlu0 %1977
      %v1979 = vadd.f32 %v1921, %v1922
      %v1980 = vadd.f32 %v1979, %v1923
      %v1981 = vadd.f32 %v1980, %v1924
      %1982 = vadd.xlane.f32.xlu0 %v1981
      %v1983 = vpop.xlane.xlu0 %1982
      %v1984 = vadd.f32 %v1925, %v1926
      %v1985 = vadd.f32 %v1984, %v1927
      %v1986 = vadd.f32 %v1985, %v1928
      %1987 = vadd.xlane.f32.xlu0 %v1986
      %v1988 = vpop.xlane.xlu0 %1987
      %v1989 = vadd.f32 %v1929, %v1930
      %v1990 = vadd.f32 %v1989, %v1931
      %v1991 = vadd.f32 %v1990, %v1932
      %1992 = vadd.xlane.f32.xlu0 %v1991
      %v1993 = vpop.xlane.xlu0 %1992
      %v1994 = vadd.f32 %v1933, %v1934
      %v1995 = vadd.f32 %v1994, %v1935
      %v1996 = vadd.f32 %v1995, %v1936
      %1997 = vadd.xlane.f32.xlu0 %v1996
      %v1998 = vpop.xlane.xlu0 %1997
      %v1999 = vadd.f32 %v1937, %v1938
      %v2000 = vadd.f32 %v1999, %v1939
      %v2001 = vadd.f32 %v2000, %v1940
      %2002 = vadd.xlane.f32.xlu0 %v2001
      %v2003 = vpop.xlane.xlu0 %2002
      %v2004 = vadd.f32 %v1941, %v1942
      %v2005 = vadd.f32 %v2004, %v1943
      %v2006 = vadd.f32 %v2005, %v1944
      %2007 = vadd.xlane.f32.xlu0 %v2006
      %v2008 = vpop.xlane.xlu0 %2007
      %v2009 = vadd.f32 %v1945, %v1946
      %v2010 = vadd.f32 %v2009, %v1947
      %v2011 = vadd.f32 %v2010, %v1948
      %2012 = vadd.xlane.f32.xlu0 %v2011
      %v2013 = vpop.xlane.xlu0 %2012
      %v2014 = vadd.f32 %v1949, %v1950
      %v2015 = vadd.f32 %v2014, %v1951
      %v2016 = vadd.f32 %v2015, %v1952
      %2017 = vadd.xlane.f32.xlu0 %v2016
      %v2018 = vpop.xlane.xlu0 %2017
      %v2019 = vadd.f32 %v1953, %v1954
      %v2020 = vadd.f32 %v2019, %v1955
      %v2021 = vadd.f32 %v2020, %v1956
      %2022 = vadd.xlane.f32.xlu0 %v2021
      %v2023 = vpop.xlane.xlu0 %2022
      %v2024 = vadd.f32 %v1957, %v1958
      %v2025 = vadd.f32 %v2024, %v1959
      %v2026 = vadd.f32 %v2025, %v1960
      %2027 = vadd.xlane.f32.xlu0 %v2026
      %v2028 = vpop.xlane.xlu0 %2027
      %v2029 = vadd.f32 %v1961, %v1962
      %v2030 = vadd.f32 %v2029, %v1963
      %v2031 = vadd.f32 %v2030, %v1964
      %2032 = vadd.xlane.f32.xlu0 %v2031
      %v2033 = vpop.xlane.xlu0 %2032
      %v2034 = vadd.f32 %v1965, %v1966
      %v2035 = vadd.f32 %v2034, %v1967
      %v2036 = vadd.f32 %v2035, %v1968
      %2037 = vadd.xlane.f32.xlu0 %v2036
      %v2038 = vpop.xlane.xlu0 %2037
      %v2039 = vadd.f32 %v1899, %v1973
      %v2040 = vadd.f32 %v1900, %v1978
      %v2041 = vadd.f32 %v1901, %v1983
      %v2042 = vadd.f32 %v1902, %v1988
      %v2043 = vadd.f32 %v1903, %v1993
      %v2044 = vadd.f32 %v1904, %v1998
      %v2045 = vadd.f32 %v1905, %v2003
      %v2046 = vadd.f32 %v1906, %v2008
      %v2047 = vadd.f32 %v1907, %v2013
      %v2048 = vadd.f32 %v1908, %v2018
      %v2049 = vadd.f32 %v1909, %v2023
      %v2050 = vadd.f32 %v1910, %v2028
      %v2051 = vadd.f32 %v1911, %v2033
      %v2052 = vadd.f32 %v1912, %v2038
      %2053 = vst.msk [vmem:[#allocation9] sm:$0xff] %vm231, %v2039
      %2054 = vst.msk [vmem:[#allocation9 + $0x8] sm:$0xff] %vm231, %v2040
      %2055 = vst.msk [vmem:[#allocation9 + $0x10] sm:$0xff] %vm231, %v2041
      %2056 = vst.msk [vmem:[#allocation9 + $0x18] sm:$0xff] %vm231, %v2042
      %2057 = vst.msk [vmem:[#allocation9 + $0x20] sm:$0xff] %vm231, %v2043
      %2058 = vst.msk [vmem:[#allocation9 + $0x28] sm:$0xff] %vm231, %v2044
      %2059 = vst.msk [vmem:[#allocation9 + $0x30] sm:$0xff] %vm231, %v2045
      %2060 = vst.msk [vmem:[#allocation9 + $0x38] sm:$0xff] %vm231, %v2046
      %2061 = vst.msk [vmem:[#allocation9 + $0x40] sm:$0xff] %vm231, %v2047
      %2062 = vst.msk [vmem:[#allocation9 + $0x48] sm:$0xff] %vm231, %v2048
      %2063 = vst.msk [vmem:[#allocation9 + $0x50] sm:$0xff] %vm231, %v2049
      %2064 = vst.msk [vmem:[#allocation9 + $0x58] sm:$0xff] %vm231, %v2050
      %2065 = vst.msk [vmem:[#allocation9 + $0x60] sm:$0xff] %vm231, %v2051
      %2066 = vst.msk [vmem:[#allocation9 + $0x68] sm:$0xff] %vm231, %v2052
      %2067 = vst.msk [vmem:[#allocation4] sm:$0xff] %vm231, %v723
      %2068 = vst.msk [vmem:[#allocation4 + $0x8] sm:$0xff] %vm231, %v724
      %2069 = vst.msk [vmem:[#allocation4 + $0x10] sm:$0xff] %vm231, %v725
      %2070 = vst.msk [vmem:[#allocation4 + $0x18] sm:$0xff] %vm231, %v726
      %2071 = vst.msk [vmem:[#allocation4 + $0x20] sm:$0xff] %vm231, %v727
      %2072 = vst.msk [vmem:[#allocation4 + $0x28] sm:$0xff] %vm231, %v728
      %2073 = vst.msk [vmem:[#allocation4 + $0x30] sm:$0xff] %vm231, %v729
      %2074 = vst.msk [vmem:[#allocation4 + $0x38] sm:$0xff] %vm231, %v730
      %2075 = vst.msk [vmem:[#allocation4 + $0x40] sm:$0xff] %vm231, %v731
      %2076 = vst.msk [vmem:[#allocation4 + $0x48] sm:$0xff] %vm231, %v732
      %2077 = vst.msk [vmem:[#allocation4 + $0x50] sm:$0xff] %vm231, %v733
      %2078 = vst.msk [vmem:[#allocation4 + $0x58] sm:$0xff] %vm231, %v734
      %2079 = vst.msk [vmem:[#allocation4 + $0x60] sm:$0xff] %vm231, %v735
      %2080 = vst.msk [vmem:[#allocation4 + $0x68] sm:$0xff] %vm231, %v736
      %2081 = vst.msk [vmem:[#allocation5] sm:$0xff] %vm231, %v821
      %2082 = vst.msk [vmem:[#allocation5 + $0x8] sm:$0xff] %vm231, %v822
      %2083 = vst.msk [vmem:[#allocation5 + $0x10] sm:$0xff] %vm231, %v823
      %2084 = vst.msk [vmem:[#allocation5 + $0x18] sm:$0xff] %vm231, %v824
      %2085 = vst.msk [vmem:[#allocation5 + $0x20] sm:$0xff] %vm231, %v825
      %2086 = vst.msk [vmem:[#allocation5 + $0x28] sm:$0xff] %vm231, %v826
      %2087 = vst.msk [vmem:[#allocation5 + $0x30] sm:$0xff] %vm231, %v827
      %2088 = vst.msk [vmem:[#allocation5 + $0x38] sm:$0xff] %vm231, %v828
      %2089 = vst.msk [vmem:[#allocation5 + $0x40] sm:$0xff] %vm231, %v829
      %2090 = vst.msk [vmem:[#allocation5 + $0x48] sm:$0xff] %vm231, %v830
      %2091 = vst.msk [vmem:[#allocation5 + $0x50] sm:$0xff] %vm231, %v831
      %2092 = vst.msk [vmem:[#allocation5 + $0x58] sm:$0xff] %vm231, %v832
      %2093 = vst.msk [vmem:[#allocation5 + $0x60] sm:$0xff] %vm231, %v833
      %2094 = vst.msk [vmem:[#allocation5 + $0x68] sm:$0xff] %vm231, %v834
    $region33: #{tpu_custom_call.1} parent=1 // pred_fallthru
      _
    %p2095 = pnand %p268, %p101
    %p2096 = pneg %p2095
    // Predicated region
    $region34: #{tpu_custom_call.1} parent=1 // pred_check
      _
    $region35: #{tpu_custom_call.1} parent=1 // pred_check_branch
      %2098 = sbr.rel (%p2095) target = $region37
    $region36: #{tpu_custom_call.1} parent=1 // pred_region
      %v2099 = vld [vmem:[#allocation4] sm:$0xff]
      %v2100 = vld [vmem:[#allocation4 + $0x8] sm:$0xff]
      %v2101 = vld [vmem:[#allocation4 + $0x10] sm:$0xff]
      %v2102 = vld [vmem:[#allocation4 + $0x18] sm:$0xff]
      %v2103 = vld [vmem:[#allocation4 + $0x20] sm:$0xff]
      %v2104 = vld [vmem:[#allocation4 + $0x28] sm:$0xff]
      %v2105 = vld [vmem:[#allocation4 + $0x30] sm:$0xff]
      %v2106 = vld [vmem:[#allocation4 + $0x38] sm:$0xff]
      %v2107 = vld [vmem:[#allocation4 + $0x40] sm:$0xff]
      %v2108 = vld [vmem:[#allocation4 + $0x48] sm:$0xff]
      %v2109 = vld [vmem:[#allocation4 + $0x50] sm:$0xff]
      %v2110 = vld [vmem:[#allocation4 + $0x58] sm:$0xff]
      %v2111 = vld [vmem:[#allocation4 + $0x60] sm:$0xff]
      %v2112 = vld [vmem:[#allocation4 + $0x68] sm:$0xff]
      %v2113 = vld [vmem:[#allocation5] sm:$0xff]
      %v2114 = vld [vmem:[#allocation5 + $0x8] sm:$0xff]
      %v2115 = vld [vmem:[#allocation5 + $0x10] sm:$0xff]
      %v2116 = vld [vmem:[#allocation5 + $0x18] sm:$0xff]
      %v2117 = vld [vmem:[#allocation5 + $0x20] sm:$0xff]
      %v2118 = vld [vmem:[#allocation5 + $0x28] sm:$0xff]
      %v2119 = vld [vmem:[#allocation5 + $0x30] sm:$0xff]
      %v2120 = vld [vmem:[#allocation5 + $0x38] sm:$0xff]
      %v2121 = vld [vmem:[#allocation5 + $0x40] sm:$0xff]
      %v2122 = vld [vmem:[#allocation5 + $0x48] sm:$0xff]
      %v2123 = vld [vmem:[#allocation5 + $0x50] sm:$0xff]
      %v2124 = vld [vmem:[#allocation5 + $0x58] sm:$0xff]
      %v2125 = vld [vmem:[#allocation5 + $0x60] sm:$0xff]
      %v2126 = vld [vmem:[#allocation5 + $0x68] sm:$0xff]
      %v2127 = vsub.f32 %v2099, %v2113
      %v2128 = vsub.f32 %v2100, %v2114
      %v2129 = vsub.f32 %v2101, %v2115
      %v2130 = vsub.f32 %v2102, %v2116
      %v2131 = vsub.f32 %v2103, %v2117
      %v2132 = vsub.f32 %v2104, %v2118
      %v2133 = vsub.f32 %v2105, %v2119
      %v2134 = vsub.f32 %v2106, %v2120
      %v2135 = vsub.f32 %v2107, %v2121
      %v2136 = vsub.f32 %v2108, %v2122
      %v2137 = vsub.f32 %v2109, %v2123
      %v2138 = vsub.f32 %v2110, %v2124
      %v2139 = vsub.f32 %v2111, %v2125
      %v2140 = vsub.f32 %v2112, %v2126
      %v2141 = vld [vmem:[#allocation6] sm:$0xff]
      %v2142 = vld [vmem:[#allocation6 + $0x8] sm:$0xff]
      %v2143 = vld [vmem:[#allocation6 + $0x10] sm:$0xff]
      %v2144 = vld [vmem:[#allocation6 + $0x18] sm:$0xff]
      %v2145 = vld [vmem:[#allocation6 + $0x20] sm:$0xff]
      %v2146 = vld [vmem:[#allocation6 + $0x28] sm:$0xff]
      %v2147 = vld [vmem:[#allocation6 + $0x30] sm:$0xff]
      %v2148 = vld [vmem:[#allocation6 + $0x38] sm:$0xff]
      %v2149 = vld [vmem:[#allocation6 + $0x40] sm:$0xff]
      %v2150 = vld [vmem:[#allocation6 + $0x48] sm:$0xff]
      %v2151 = vld [vmem:[#allocation6 + $0x50] sm:$0xff]
      %v2152 = vld [vmem:[#allocation6 + $0x58] sm:$0xff]
      %v2153 = vld [vmem:[#allocation6 + $0x60] sm:$0xff]
      %v2154 = vld [vmem:[#allocation6 + $0x68] sm:$0xff]
      %v2155 = vlog2.pop %v2141
      %v2156 = vmul.f32 %v2155, 0.6931472
      %v2157 = vlog2.pop %v2142
      %v2158 = vmul.f32 %v2157, 0.6931472
      %v2159 = vlog2.pop %v2143
      %v2160 = vmul.f32 %v2159, 0.6931472
      %v2161 = vlog2.pop %v2144
      %v2162 = vmul.f32 %v2161, 0.6931472
      %v2163 = vlog2.pop %v2145
      %v2164 = vmul.f32 %v2163, 0.6931472
      %v2165 = vlog2.pop %v2146
      %v2166 = vmul.f32 %v2165, 0.6931472
      %v2167 = vlog2.pop %v2147
      %v2168 = vmul.f32 %v2167, 0.6931472
      %v2169 = vlog2.pop %v2148
      %v2170 = vmul.f32 %v2169, 0.6931472
      %v2171 = vlog2.pop %v2149
      %v2172 = vmul.f32 %v2171, 0.6931472
      %v2173 = vlog2.pop %v2150
      %v2174 = vmul.f32 %v2173, 0.6931472
      %v2175 = vlog2.pop %v2151
      %v2176 = vmul.f32 %v2175, 0.6931472
      %v2177 = vlog2.pop %v2152
      %v2178 = vmul.f32 %v2177, 0.6931472
      %v2179 = vlog2.pop %v2153
      %v2180 = vmul.f32 %v2179, 0.6931472
      %v2181 = vlog2.pop %v2154
      %v2182 = vmul.f32 %v2181, 0.6931472
      %v2183 = vld [vmem:[#allocation7] sm:$0xff]
      %v2184 = vld [vmem:[#allocation7 + $0x8] sm:$0xff]
      %v2185 = vld [vmem:[#allocation7 + $0x10] sm:$0xff]
      %v2186 = vld [vmem:[#allocation7 + $0x18] sm:$0xff]
      %v2187 = vld [vmem:[#allocation7 + $0x20] sm:$0xff]
      %v2188 = vld [vmem:[#allocation7 + $0x28] sm:$0xff]
      %v2189 = vld [vmem:[#allocation7 + $0x30] sm:$0xff]
      %v2190 = vld [vmem:[#allocation7 + $0x38] sm:$0xff]
      %v2191 = vld [vmem:[#allocation7 + $0x40] sm:$0xff]
      %v2192 = vld [vmem:[#allocation7 + $0x48] sm:$0xff]
      %v2193 = vld [vmem:[#allocation7 + $0x50] sm:$0xff]
      %v2194 = vld [vmem:[#allocation7 + $0x58] sm:$0xff]
      %v2195 = vld [vmem:[#allocation7 + $0x60] sm:$0xff]
      %v2196 = vld [vmem:[#allocation7 + $0x68] sm:$0xff]
      %v2197 = vlog2.pop %v2183
      %v2198 = vmul.f32 %v2197, 0.6931472
      %v2199 = vlog2.pop %v2184
      %v2200 = vmul.f32 %v2199, 0.6931472
      %v2201 = vlog2.pop %v2185
      %v2202 = vmul.f32 %v2201, 0.6931472
      %v2203 = vlog2.pop %v2186
      %v2204 = vmul.f32 %v2203, 0.6931472
      %v2205 = vlog2.pop %v2187
      %v2206 = vmul.f32 %v2205, 0.6931472
      %v2207 = vlog2.pop %v2188
      %v2208 = vmul.f32 %v2207, 0.6931472
      %v2209 = vlog2.pop %v2189
      %v2210 = vmul.f32 %v2209, 0.6931472
      %v2211 = vlog2.pop %v2190
      %v2212 = vmul.f32 %v2211, 0.6931472
      %v2213 = vlog2.pop %v2191
      %v2214 = vmul.f32 %v2213, 0.6931472
      %v2215 = vlog2.pop %v2192
      %v2216 = vmul.f32 %v2215, 0.6931472
      %v2217 = vlog2.pop %v2193
      %v2218 = vmul.f32 %v2217, 0.6931472
      %v2219 = vlog2.pop %v2194
      %v2220 = vmul.f32 %v2219, 0.6931472
      %v2221 = vlog2.pop %v2195
      %v2222 = vmul.f32 %v2221, 0.6931472
      %v2223 = vlog2.pop %v2196
      %v2224 = vmul.f32 %v2223, 0.6931472
      %v2225 = vsub.f32 %v2156, %v2198
      %v2226 = vsub.f32 %v2158, %v2200
      %v2227 = vsub.f32 %v2160, %v2202
      %v2228 = vsub.f32 %v2162, %v2204
      %v2229 = vsub.f32 %v2164, %v2206
      %v2230 = vsub.f32 %v2166, %v2208
      %v2231 = vsub.f32 %v2168, %v2210
      %v2232 = vsub.f32 %v2170, %v2212
      %v2233 = vsub.f32 %v2172, %v2214
      %v2234 = vsub.f32 %v2174, %v2216
      %v2235 = vsub.f32 %v2176, %v2218
      %v2236 = vsub.f32 %v2178, %v2220
      %v2237 = vsub.f32 %v2180, %v2222
      %v2238 = vsub.f32 %v2182, %v2224
      %v2239 = vadd.f32 %v2127, %v2225
      %v2240 = vadd.f32 %v2128, %v2226
      %v2241 = vadd.f32 %v2129, %v2227
      %v2242 = vadd.f32 %v2130, %v2228
      %v2243 = vadd.f32 %v2131, %v2229
      %v2244 = vadd.f32 %v2132, %v2230
      %v2245 = vadd.f32 %v2133, %v2231
      %v2246 = vadd.f32 %v2134, %v2232
      %v2247 = vadd.f32 %v2135, %v2233
      %v2248 = vadd.f32 %v2136, %v2234
      %v2249 = vadd.f32 %v2137, %v2235
      %v2250 = vadd.f32 %v2138, %v2236
      %v2251 = vadd.f32 %v2139, %v2237
      %v2252 = vadd.f32 %v2140, %v2238
      %v2253 = vld [vmem:[#allocation8] sm:$0xff]
      %v2254 = vld [vmem:[#allocation8 + $0x8] sm:$0xff]
      %v2255 = vld [vmem:[#allocation8 + $0x10] sm:$0xff]
      %v2256 = vld [vmem:[#allocation8 + $0x18] sm:$0xff]
      %v2257 = vld [vmem:[#allocation8 + $0x20] sm:$0xff]
      %v2258 = vld [vmem:[#allocation8 + $0x28] sm:$0xff]
      %v2259 = vld [vmem:[#allocation8 + $0x30] sm:$0xff]
      %v2260 = vld [vmem:[#allocation8 + $0x38] sm:$0xff]
      %v2261 = vld [vmem:[#allocation8 + $0x40] sm:$0xff]
      %v2262 = vld [vmem:[#allocation8 + $0x48] sm:$0xff]
      %v2263 = vld [vmem:[#allocation8 + $0x50] sm:$0xff]
      %v2264 = vld [vmem:[#allocation8 + $0x58] sm:$0xff]
      %v2265 = vld [vmem:[#allocation8 + $0x60] sm:$0xff]
      %v2266 = vld [vmem:[#allocation8 + $0x68] sm:$0xff]
      %v2267 = vld [vmem:[#allocation9] sm:$0xff]
      %v2268 = vld [vmem:[#allocation9 + $0x8] sm:$0xff]
      %v2269 = vld [vmem:[#allocation9 + $0x10] sm:$0xff]
      %v2270 = vld [vmem:[#allocation9 + $0x18] sm:$0xff]
      %v2271 = vld [vmem:[#allocation9 + $0x20] sm:$0xff]
      %v2272 = vld [vmem:[#allocation9 + $0x28] sm:$0xff]
      %v2273 = vld [vmem:[#allocation9 + $0x30] sm:$0xff]
      %v2274 = vld [vmem:[#allocation9 + $0x38] sm:$0xff]
      %v2275 = vld [vmem:[#allocation9 + $0x40] sm:$0xff]
      %v2276 = vld [vmem:[#allocation9 + $0x48] sm:$0xff]
      %v2277 = vld [vmem:[#allocation9 + $0x50] sm:$0xff]
      %v2278 = vld [vmem:[#allocation9 + $0x58] sm:$0xff]
      %v2279 = vld [vmem:[#allocation9 + $0x60] sm:$0xff]
      %v2280 = vld [vmem:[#allocation9 + $0x68] sm:$0xff]
      %v2281 = vmul.f32 %v2239, %v2267
      %v2282 = vmul.f32 %v2240, %v2268
      %v2283 = vmul.f32 %v2241, %v2269
      %v2284 = vmul.f32 %v2242, %v2270
      %v2285 = vmul.f32 %v2243, %v2271
      %v2286 = vmul.f32 %v2244, %v2272
      %v2287 = vmul.f32 %v2245, %v2273
      %v2288 = vmul.f32 %v2246, %v2274
      %v2289 = vmul.f32 %v2247, %v2275
      %v2290 = vmul.f32 %v2248, %v2276
      %v2291 = vmul.f32 %v2249, %v2277
      %v2292 = vmul.f32 %v2250, %v2278
      %v2293 = vmul.f32 %v2251, %v2279
      %v2294 = vmul.f32 %v2252, %v2280
      %v2295 = vadd.f32 %v2253, %v2281
      %v2296 = vadd.f32 %v2254, %v2282
      %v2297 = vadd.f32 %v2255, %v2283
      %v2298 = vadd.f32 %v2256, %v2284
      %v2299 = vadd.f32 %v2257, %v2285
      %v2300 = vadd.f32 %v2258, %v2286
      %v2301 = vadd.f32 %v2259, %v2287
      %v2302 = vadd.f32 %v2260, %v2288
      %v2303 = vadd.f32 %v2261, %v2289
      %v2304 = vadd.f32 %v2262, %v2290
      %v2305 = vadd.f32 %v2263, %v2291
      %v2306 = vadd.f32 %v2264, %v2292
      %v2307 = vadd.f32 %v2265, %v2293
      %v2308 = vadd.f32 %v2266, %v2294
      %v2309 = vrcp.pop %v2141
      %v2310 = vmul.f32 %v2295, %v2309
      %v2311 = vrcp.pop %v2142
      %v2312 = vmul.f32 %v2296, %v2311
      %v2313 = vrcp.pop %v2143
      %v2314 = vmul.f32 %v2297, %v2313
      %v2315 = vrcp.pop %v2144
      %v2316 = vmul.f32 %v2298, %v2315
      %v2317 = vrcp.pop %v2145
      %v2318 = vmul.f32 %v2299, %v2317
      %v2319 = vrcp.pop %v2146
      %v2320 = vmul.f32 %v2300, %v2319
      %v2321 = vrcp.pop %v2147
      %v2322 = vmul.f32 %v2301, %v2321
      %v2323 = vrcp.pop %v2148
      %v2324 = vmul.f32 %v2302, %v2323
      %v2325 = vrcp.pop %v2149
      %v2326 = vmul.f32 %v2303, %v2325
      %v2327 = vrcp.pop %v2150
      %v2328 = vmul.f32 %v2304, %v2327
      %v2329 = vrcp.pop %v2151
      %v2330 = vmul.f32 %v2305, %v2329
      %v2331 = vrcp.pop %v2152
      %v2332 = vmul.f32 %v2306, %v2331
      %v2333 = vrcp.pop %v2153
      %v2334 = vmul.f32 %v2307, %v2333
      %v2335 = vrcp.pop %v2154
      %v2336 = vmul.f32 %v2308, %v2335
      %v2337 = vsel %vm203, %v2310, 0.0
      %v2338 = vsel %vm204, %v2312, 0.0
      %v2339 = vsel %vm205, %v2314, 0.0
      %v2340 = vsel %vm206, %v2316, 0.0
      %v2341 = vsel %vm207, %v2318, 0.0
      %v2342 = vsel %vm208, %v2320, 0.0
      %v2343 = vsel %vm209, %v2322, 0.0
      %v2344 = vsel %vm210, %v2324, 0.0
      %v2345 = vsel %vm211, %v2326, 0.0
      %v2346 = vsel %vm212, %v2328, 0.0
      %v2347 = vsel %vm213, %v2330, 0.0
      %v2348 = vsel %vm214, %v2332, 0.0
      %v2349 = vsel %vm215, %v2334, 0.0
      %v2350 = vsel %vm216, %v2336, 0.0
      %v2351 = vld [vmem:[#allocation2] sm:$0x1]
      %v2352 = vsel %vm231, %v2337, 0.0
      %v2353 = vsel %vm231, %v2338, 0.0
      %v2354 = vadd.f32 %v2352, %v2353
      %v2355 = vsel %vm231, %v2339, 0.0
      %v2356 = vadd.f32 %v2354, %v2355
      %v2357 = vsel %vm231, %v2340, 0.0
      %v2358 = vadd.f32 %v2356, %v2357
      %v2359 = vsel %vm231, %v2341, 0.0
      %v2360 = vadd.f32 %v2358, %v2359
      %v2361 = vsel %vm231, %v2342, 0.0
      %v2362 = vadd.f32 %v2360, %v2361
      %v2363 = vsel %vm231, %v2343, 0.0
      %v2364 = vadd.f32 %v2362, %v2363
      %v2365 = vsel %vm231, %v2344, 0.0
      %v2366 = vadd.f32 %v2364, %v2365
      %v2367 = vsel %vm231, %v2345, 0.0
      %v2368 = vadd.f32 %v2366, %v2367
      %v2369 = vsel %vm231, %v2346, 0.0
      %v2370 = vadd.f32 %v2368, %v2369
      %v2371 = vsel %vm231, %v2347, 0.0
      %v2372 = vadd.f32 %v2370, %v2371
      %v2373 = vsel %vm231, %v2348, 0.0
      %v2374 = vadd.f32 %v2372, %v2373
      %v2375 = vsel %vm231, %v2349, 0.0
      %v2376 = vadd.f32 %v2374, %v2375
      %v2377 = vsel %vm231, %v2350, 0.0
      %v2378 = vadd.f32 %v2376, %v2377
      %2379 = vadd.xlane.f32.xlu0 %v2378
      %v2380 = vpop.xlane.xlu0 %2379
      %v2381 = vrot.slane %v2380, 4
      %v2382 = vadd.f32 %v2380, %v2381
      %v2383 = vrot.slane %v2382, 2
      %v2384 = vadd.f32 %v2382, %v2383
      %v2385 = vrot.slane %v2384, 1
      %v2386 = vadd.f32 %v2384, %v2385
      %s2387 = vtos %v2386
      %s2388 = ssub.f32 0.0, %s2387
      %v2389 = vstv %s2388
      %v2390 = vadd.f32 %v2351, %v2389
      %vm2391 = vcmask 0
      %2392 = vst.msk [vmem:[#allocation2] sm:$0x1] %vm2391, %v2390
      %v2393 = vld [vmem:[#allocation3] sm:$0x1]
      %v2394 = vsel %vm203, 1, 0
      %v2395 = vsel %vm204, 1, 0
      %v2396 = vsel %vm205, 1, 0
      %v2397 = vsel %vm206, 1, 0
      %v2398 = vsel %vm207, 1, 0
      %v2399 = vsel %vm208, 1, 0
      %v2400 = vsel %vm209, 1, 0
      %v2401 = vsel %vm210, 1, 0
      %v2402 = vsel %vm211, 1, 0
      %v2403 = vsel %vm212, 1, 0
      %v2404 = vsel %vm213, 1, 0
      %v2405 = vsel %vm214, 1, 0
      %v2406 = vsel %vm215, 1, 0
      %v2407 = vsel %vm216, 1, 0
      %v2408 = vcvt.s32.f32 %v2394
      %v2409 = vcvt.s32.f32 %v2395
      %v2410 = vcvt.s32.f32 %v2396
      %v2411 = vcvt.s32.f32 %v2397
      %v2412 = vcvt.s32.f32 %v2398
      %v2413 = vcvt.s32.f32 %v2399
      %v2414 = vcvt.s32.f32 %v2400
      %v2415 = vcvt.s32.f32 %v2401
      %v2416 = vcvt.s32.f32 %v2402
      %v2417 = vcvt.s32.f32 %v2403
      %v2418 = vcvt.s32.f32 %v2404
      %v2419 = vcvt.s32.f32 %v2405
      %v2420 = vcvt.s32.f32 %v2406
      %v2421 = vcvt.s32.f32 %v2407
      %v2422 = vsel %vm231, %v2408, 0.0
      %v2423 = vsel %vm231, %v2409, 0.0
      %v2424 = vadd.f32 %v2422, %v2423
      %v2425 = vsel %vm231, %v2410, 0.0
      %v2426 = vadd.f32 %v2424, %v2425
      %v2427 = vsel %vm231, %v2411, 0.0
      %v2428 = vadd.f32 %v2426, %v2427
      %v2429 = vsel %vm231, %v2412, 0.0
      %v2430 = vadd.f32 %v2428, %v2429
      %v2431 = vsel %vm231, %v2413, 0.0
      %v2432 = vadd.f32 %v2430, %v2431
      %v2433 = vsel %vm231, %v2414, 0.0
      %v2434 = vadd.f32 %v2432, %v2433
      %v2435 = vsel %vm231, %v2415, 0.0
      %v2436 = vadd.f32 %v2434, %v2435
      %v2437 = vsel %vm231, %v2416, 0.0
      %v2438 = vadd.f32 %v2436, %v2437
      %v2439 = vsel %vm231, %v2417, 0.0
      %v2440 = vadd.f32 %v2438, %v2439
      %v2441 = vsel %vm231, %v2418, 0.0
      %v2442 = vadd.f32 %v2440, %v2441
      %v2443 = vsel %vm231, %v2419, 0.0
      %v2444 = vadd.f32 %v2442, %v2443
      %v2445 = vsel %vm231, %v2420, 0.0
      %v2446 = vadd.f32 %v2444, %v2445
      %v2447 = vsel %vm231, %v2421, 0.0
      %v2448 = vadd.f32 %v2446, %v2447
      %2449 = vadd.xlane.f32.xlu0 %v2448
      %v2450 = vpop.xlane.xlu0 %2449
      %v2451 = vrot.slane %v2450, 4
      %v2452 = vadd.f32 %v2450, %v2451
      %v2453 = vrot.slane %v2452, 2
      %v2454 = vadd.f32 %v2452, %v2453
      %v2455 = vrot.slane %v2454, 1
      %v2456 = vadd.f32 %v2454, %v2455
      %s2457 = vtos %v2456
      %v2458 = vstv %s2457
      %v2459 = vadd.f32 %v2393, %v2458
      %2460 = vst.msk [vmem:[#allocation3] sm:$0x1] %vm2391, %v2459
    $region37: #{tpu_custom_call.1} parent=1 // pred_fallthru
      _
    // Predicated region
    $region38: #{tpu_custom_call.1} parent=1 // pred_check
      _
    $region39: #{tpu_custom_call.1} parent=1 // pred_check_branch
      %2462 = sbr.rel (%p102) target = $region41
    $region40: #{tpu_custom_call.1} parent=1 // pred_region
      %v2463 = vld [vmem:[#allocation2] sm:$0x1]
      %vm2464 = vcmask 0
      %2465 = vst.msk [vmem:[#allocation15] sm:$0x1] %vm2464, %v2463
      %v2466 = vld [vmem:[#allocation3] sm:$0x1]
      %2467 = vst.msk [vmem:[#allocation16] sm:$0x1] %vm2464, %v2466
    $region41: #{tpu_custom_call.1} parent=1 // pred_fallthru
      _
    // Predicated region
    $region42: #{tpu_custom_call.1} parent=1 // pred_check
      _
    $region43: #{tpu_custom_call.1} parent=1 // pred_check_branch
      %2469 = sbr.rel (0) target = $region45
    $region44: #{tpu_custom_call.1} parent=1 // pred_region
      %s2471 = ssub.s32 16, 16
      %2472 = vsyncadd [#allocation12], %s2471
      %s2474 = sshll.u32 [#allocation15], 4
      %s2475 = int_to_ptr.vmem [resolvable:$true] %s2474
      %2477 = dma.vmem_to_hbm [thread:$0]  %s2475, 16, %s3, [#allocation12]
    $region45: #{tpu_custom_call.1} parent=1 // pred_fallthru
      _
    // Predicated region
    $region46: #{tpu_custom_call.1} parent=1 // pred_check
      _
    $region47: #{tpu_custom_call.1} parent=1 // pred_check_branch
      %2479 = sbr.rel (0) target = $region49
    $region48: #{tpu_custom_call.1} parent=1 // pred_region
      %s2481 = ssub.s32 16, 16
      %2482 = vsyncadd [#allocation17], %s2481
      %s2484 = sshll.u32 [#allocation16], 4
      %s2485 = int_to_ptr.vmem [resolvable:$true] %s2484
      %2487 = dma.vmem_to_hbm [thread:$0]  %s2485, 16, %s4, [#allocation17]
    $region49: #{tpu_custom_call.1} parent=1 // pred_fallthru
      _
    // Predicated region
    $region50: #{tpu_custom_call.1} parent=1 // pred_check
      _
    $region51: #{tpu_custom_call.1} parent=1 // pred_check_branch
      %2489 = sbr.rel (0) target = $region53
    $region52: #{tpu_custom_call.1} parent=1 // pred_region
      %2490 = dma.done [#allocation12], 16
    $region53: #{tpu_custom_call.1} parent=1 // pred_fallthru
      _
    // Predicated region
    $region54: #{tpu_custom_call.1} parent=1 // pred_check
      _
    $region55: #{tpu_custom_call.1} parent=1 // pred_check_branch
      %2492 = sbr.rel (0) target = $region57
    $region56: #{tpu_custom_call.1} parent=1 // pred_region
      %2493 = dma.done [#allocation17], 16
    $region57: #{tpu_custom_call.1} parent=1 // pred_fallthru
      _
    %2494 = vsyncpa [#allocation11], 1
    %2495 = vsyncpa [#allocation14], 1
    %2496 = vsyncpa [#allocation12], 1
    %2497 = vsyncpa [#allocation17], 1

</llo_original>
